<compile_context>
chip_gen: v7x
topology: tpu7x:2x2x1
jax: 0.10.0
libtpu: 0.0.40
codegen_flags: <defaults>
</compile_context>

<pallas_src>
import functools
import math

import jax
import jax.numpy as jnp
from jax.experimental import pallas as pl
from jax.experimental.pallas import tpu as pltpu


def _round_up(n, m):
    return ((n + m - 1) // m) * m


# --------------------- fused LSTM-stack + FC head kernel ---------------------
def _lstm_stack_kernel(num_layers, batch, x_ref, *refs):
    """refs = [w_ih_t_0, w_hh_t_0, b_0, ..., w_ih_t_{L-1}, w_hh_t_{L-1}, b_{L-1},
               w_fc_t, b_fc, out_ref, proj_scr, act_buf_0?, act_buf_1?]"""
    layer_refs = refs[: 3 * num_layers]
    w_fc_ref = refs[3 * num_layers]
    b_fc_ref = refs[3 * num_layers + 1]
    out_ref = refs[3 * num_layers + 2]
    proj_scr = refs[3 * num_layers + 3]        # (T*B, 4*Hmax) f32, shared
    act_bufs = refs[3 * num_layers + 4:]       # ping-pong (T*B, Hmax) bf16

    B = batch
    T = x_ref.shape[0] // B

    last_h = None
    for l in range(num_layers):
        w_ih_ref = layer_refs[3 * l]           # (feat_p, 4Hp) bf16, cols (i,f,o,g)
        w_hh_ref = layer_refs[3 * l + 1]       # (Hp,     4Hp) bf16
        b_ref = layer_refs[3 * l + 2]          # (1,      4Hp) f32 = b_ih + b_hh
        feat = w_ih_ref.shape[0]
        H = w_hh_ref.shape[0]
        G = 4 * H

        # (1) Input projection for ALL timesteps in one MXU-efficient matmul;
        #     bias folded in once (no per-step broadcast).
        if l == 0:
            x_in = x_ref[...]                              # (T*B, E_p) bf16
        else:
            x_in = act_bufs[(l - 1) % 2][:, :feat]         # (T*B, feat) bf16
        proj_scr[:, :G] = (
            jnp.dot(x_in, w_ih_ref[...], preferred_element_type=jnp.float32)
            + b_ref[...]
        )

        # (2) Serial recurrence: only h @ W_hh^T sits on the per-step chain.
        w_hh = w_hh_ref[...]
        out_buf = act_bufs[l % 2] if l < num_layers - 1 else None

        def step(t, carry):
            h_bf, c = carry
            row = pl.multiple_of(t * B, B)
            gates = proj_scr[pl.ds(row, B), :G] + jnp.dot(
                h_bf, w_hh, preferred_element_type=jnp.float32)
            # Gate order (i, f, o, g): one sigmoid over a contiguous 3H slab.
            sig = jax.nn.sigmoid(gates[:, : 3 * H])
            i_g = sig[:, 0 * H:1 * H]
            f_g = sig[:, 1 * H:2 * H]
            o_g = sig[:, 2 * H:3 * H]
            g_g = jnp.tanh(gates[:, 3 * H:G])
            c = f_g * c + i_g * g_g                        # cell math stays f32
            h_bf = (o_g * jnp.tanh(c)).astype(jnp.bfloat16)  # bf16 shadow for MXU
            if out_buf is not None:                        # last layer: no stores
                out_buf[pl.ds(row, B), :H] = h_bf
            return h_bf, c

        h0 = jnp.zeros((B, H), jnp.bfloat16)
        c0 = jnp.zeros((B, H), jnp.float32)
        last_h, _ = jax.lax.fori_loop(0, T, step, (h0, c0), unroll=True)

    # FC head on the last hidden state of the last layer (Identity activation).
    out_ref[...] = (
        jnp.dot(last_h, w_fc_ref[...], preferred_element_type=jnp.float32)
        + b_fc_ref[...]
    )


# ---------------------------------- wrapper -----------------------------------
def lstm_stack_apply(x, params, output_dim):
    """x: (B, T, E) batch_first f32 -> logits (B, output_dim) f32."""
    B, T, E = x.shape
    layers = params["lstm"]
    L = len(layers)
    Ep = layers[0]["w_ih_t"].shape[0]
    Hmax = max(lyr["w_hh_t"].shape[0] for lyr in layers)
    Hlast, Op = params["fc"]["w_t"].shape
    Bp = _round_up(max(B, 16), 16)     # >=16: bf16 activation sublane packing

    # Time-major, zero-padded, bf16, flattened to a lane/sublane-clean slab.
    xt = jnp.transpose(x, (1, 0, 2)).astype(jnp.bfloat16)           # (T, B, E)
    xp = jnp.zeros((T, Bp, Ep), jnp.bfloat16).at[:, :B, :E].set(xt)
    xp = xp.reshape(T * Bp, Ep)                                      # (T*Bp, Ep)

    inputs = [xp]
    for lyr in layers:
        inputs += [lyr["w_ih_t"], lyr["w_hh_t"], lyr["bias"]]
    inputs += [params["fc"]["w_t"], params["fc"]["b"]]

    vmem_spec = pl.BlockSpec(memory_space=pltpu.MemorySpace.VMEM)
    n_act_bufs = min(2, L - 1)
    scratch_shapes = [pltpu.VMEM((T * Bp, 4 * Hmax), jnp.float32)]
    scratch_shapes += [pltpu.VMEM((T * Bp, Hmax), jnp.bfloat16)] * n_act_bufs

    # Advisory cost estimate for the XLA scheduler.
    flops, trans = 0, 0
    for lyr in layers:
        fp, G = lyr["w_ih_t"].shape
        Hp = lyr["w_hh_t"].shape[0]
        flops += 2 * T * Bp * fp * G + 2 * T * Bp * Hp * G
        trans += 5 * T * Bp * Hp
    flops += 2 * Bp * Hlast * Op
    bytes_accessed = sum(int(a.size) * a.dtype.itemsize for a in inputs) + Bp * Op * 4

    out_p = pl.pallas_call(
        functools.partial(_lstm_stack_kernel, L, Bp),
        out_shape=jax.ShapeDtypeStruct((Bp, Op), jnp.float32),
        in_specs=[vmem_spec] * len(inputs),
        out_specs=vmem_spec,
        scratch_shapes=scratch_shapes,
        compiler_params=pltpu.CompilerParams(vmem_limit_bytes=64 * 1024 * 1024),
        cost_estimate=pl.CostEstimate(
            flops=flops, transcendentals=trans, bytes_accessed=bytes_accessed),
        # No grid at these shapes: one invocation, weights DMA'd exactly once.
    )(*inputs)
    return out_p[:B, :output_dim]


# ------------------------------- Parameters ----------------------------------
def _xavier_uniform(key, shape):
    fan_out, fan_in = shape                      # PyTorch (out, in) weight layout
    limit = math.sqrt(6.0 / (fan_in + fan_out))
    return jax.random.uniform(key, shape, jnp.float32, -limit, limit)


def _pack_gate_matrix(w, h_pad, in_pad):
    """PyTorch (4H, in) rows (i,f,g,o) -> (in_pad, 4*h_pad) bf16 with gate
    columns reordered to (i,f,o,g); each gate block zero-padded to h_pad."""
    H = w.shape[0] // 4
    in_size = w.shape[1]
    blocks = [w[0:H], w[H:2 * H], w[3 * H:4 * H], w[2 * H:3 * H]]    # i, f, o, g
    blocks = [jnp.pad(b, ((0, h_pad - H), (0, in_pad - in_size))) for b in blocks]
    return jnp.transpose(jnp.concatenate(blocks, axis=0)).astype(jnp.bfloat16)


def _pack_gate_bias(b, h_pad):
    H = b.shape[0] // 4
    blocks = [b[0:H], b[H:2 * H], b[3 * H:4 * H], b[2 * H:3 * H]]    # i, f, o, g
    blocks = [jnp.pad(v, (0, h_pad - H)) for v in blocks]
    return jnp.concatenate(blocks).reshape(1, 4 * h_pad).astype(jnp.float32)


def init_params(key, embedding_dim, hidden_dims, output_dim):
    """xavier_uniform weights, zero biases (matches _initialize_weights).
    Returns (packed/padded kernel params, raw PyTorch-layout f32 weights)."""
    params = {"lstm": [], "fc": None}
    raw = {"lstm": [], "fc": None}
    in_size, in_pad = embedding_dim, _round_up(embedding_dim, 128)
    for h in hidden_dims:
        hp = _round_up(h, 128)
        key, k1, k2 = jax.random.split(key, 3)
        w_ih = _xavier_uniform(k1, (4 * h, in_size))      # PyTorch (4H,in), (i,f,g,o)
        w_hh = _xavier_uniform(k2, (4 * h, h))
        bias = jnp.zeros((4 * h,), jnp.float32)           # b_ih + b_hh (zeros init)
        raw["lstm"].append(dict(w_ih=w_ih, w_hh=w_hh, bias=bias))
        params["lstm"].append(dict(
            w_ih_t=_pack_gate_matrix(w_ih, hp, in_pad),
            w_hh_t=_pack_gate_matrix(w_hh, hp, hp),
            bias=_pack_gate_bias(bias, hp),
        ))
        in_size, in_pad = h, hp                           # unidirectional
    key, kf = jax.random.split(key)
    w_fc = _xavier_uniform(kf, (output_dim, in_size))     # (O, H_last)
    b_fc = jnp.zeros((output_dim,), jnp.float32)
    raw["fc"] = dict(w=w_fc, b=b_fc)
    op = _round_up(output_dim, 128)
    params["fc"] = dict(
        w_t=jnp.pad(w_fc, ((0, op - output_dim), (0, in_pad - in_size))).T
            .astype(jnp.bfloat16),                        # (H_last_p, O_p)
        b=jnp.pad(b_fc, (0, op - output_dim)).reshape(1, op),
    )
    return params, raw


# -------------------------------- Forward ------------------------------------
@functools.partial(jax.jit, static_argnames=("output_dim",))
def base_lstm_forward(x, params, *, output_dim):
    """x: (B, T, E) batch_first f32 (already embedded) -> (B, output_dim)."""
    # TODO(synk): the embedding lookup lives in an external frozen pretrained
    # model; inputs here are the embedded sequences directly. Dropout is
    # identity (eval mode); final activation is Identity.
    return lstm_stack_apply(x, params, output_dim)


# ------------------------- pure-JAX f32 reference ----------------------------
def _lstm_reference(x, raw):
    feats = x
    for lyr in raw["lstm"]:
        w_ih, w_hh, b = lyr["w_ih"], lyr["w_hh"], lyr["bias"]
        H = w_hh.shape[1]
        B, T, _ = feats.shape
        h = jnp.zeros((B, H), jnp.float32)
        c = jnp.zeros((B, H), jnp.float32)
        outs = []
        for t in range(T):
            g = feats[:, t, :] @ w_ih.T + h @ w_hh.T + b
            i = jax.nn.sigmoid(g[:, 0 * H:1 * H])
            f = jax.nn.sigmoid(g[:, 1 * H:2 * H])
            gg = jnp.tanh(g[:, 2 * H:3 * H])
            o = jax.nn.sigmoid(g[:, 3 * H:4 * H])
            c = f * c + i * gg
            h = o * jnp.tanh(c)
            outs.append(h)
        feats = jnp.stack(outs, axis=1)
    return feats[:, -1, :] @ raw["fc"]["w"].T + raw["fc"]["b"]


# --------------------------------- Main ---------------------------------------
if __name__ == "__main__":
    B, T, E = 2, 8, 32
    hidden_dims = [32, 32]
    output_dim = 4

    key = jax.random.PRNGKey(0)
    key, kx, kp = jax.random.split(key, 3)
    x = jax.random.normal(kx, (B, T, E), jnp.float32)
    params, raw = init_params(kp, E, hidden_dims, output_dim)

    out = base_lstm_forward(x, params, output_dim=output_dim)
    out = jax.block_until_ready(out)

    assert out.shape == (B, output_dim), out.shape
    assert bool(jnp.all(jnp.isfinite(out)))
    ref = _lstm_reference(x, raw)
    max_err = float(jnp.max(jnp.abs(out - ref)))
    assert max_err < 5e-2, f"max |err| vs f32 reference = {max_err}"
    print("KERNEL_OK")
</pallas_src>

<mosaic_0001>
module attributes {stable_mosaic.version = 11 : i64} {
  func.func @_lstm_stack_kernel(%arg0: memref<128x128xbf16, #tpu.memory_space<vmem>>, %arg1: memref<128x512xbf16, #tpu.memory_space<vmem>>, %arg2: memref<128x512xbf16, #tpu.memory_space<vmem>>, %arg3: memref<1x512xf32, #tpu.memory_space<vmem>>, %arg4: memref<128x512xbf16, #tpu.memory_space<vmem>>, %arg5: memref<128x512xbf16, #tpu.memory_space<vmem>>, %arg6: memref<1x512xf32, #tpu.memory_space<vmem>>, %arg7: memref<128x128xbf16, #tpu.memory_space<vmem>>, %arg8: memref<1x128xf32, #tpu.memory_space<vmem>>, %arg9: memref<16x128xf32, #tpu.memory_space<vmem>>, %arg10: memref<128x512xf32, #tpu.memory_space<vmem>>, %arg11: memref<128x128xbf16, #tpu.memory_space<vmem>>) attributes {dimension_semantics = [], scalar_prefetch = 0 : i64, scratch_operands = 2 : i64, tpu.core_type = #tpu.core_type<tc>} {
    %c0 = arith.constant 0 : index
    %c0_0 = arith.constant 0 : index
    %0 = vector.load %arg0[%c0, %c0_0] : memref<128x128xbf16, #tpu.memory_space<vmem>>, vector<128x128xbf16>
    %c0_1 = arith.constant 0 : index
    %c0_2 = arith.constant 0 : index
    %1 = vector.load %arg1[%c0_1, %c0_2] : memref<128x512xbf16, #tpu.memory_space<vmem>>, vector<128x512xbf16>
    %cst = arith.constant dense<0.000000e+00> : vector<128x512xf32>
    %2 = tpu.matmul %0, %1, %cst {dimension_numbers = #tpu.dot_dimension_numbers<[1], [0], [0], [1], [0, 0, 1, 1], [], []>} : vector<128x128xbf16>, vector<128x512xbf16>, vector<128x512xf32> -> vector<128x512xf32>
    %c0_3 = arith.constant 0 : index
    %c0_4 = arith.constant 0 : index
    %3 = vector.load %arg3[%c0_3, %c0_4] : memref<1x512xf32, #tpu.memory_space<vmem>>, vector<1x512xf32>
    %4 = vector.broadcast %3 : vector<1x512xf32> to vector<128x512xf32>
    %5 = arith.addf %2, %4 : vector<128x512xf32>
    %c0_5 = arith.constant 0 : index
    %c0_6 = arith.constant 0 : index
    %6 = vector.load %arg10[%c0_5, %c0_6] : memref<128x512xf32, #tpu.memory_space<vmem>>, vector<128x512xf32>
    tpu.vector_store %arg10[%c0_5, %c0_6], %5 {strides = array<i32>} : memref<128x512xf32, #tpu.memory_space<vmem>>, vector<128x512xf32>,
    %c0_7 = arith.constant 0 : index
    %c0_8 = arith.constant 0 : index
    %7 = vector.load %arg2[%c0_7, %c0_8] : memref<128x512xbf16, #tpu.memory_space<vmem>>, vector<128x512xbf16>
    %cst_9 = arith.constant 0.000000e+00 : bf16
    %8 = vector.broadcast %cst_9 : bf16 to vector<16x128xbf16>
    %cst_10 = arith.constant 0.000000e+00 : f32
    %9 = vector.broadcast %cst_10 : f32 to vector<16x128xf32>
    %c0_i32 = arith.constant 0 : i32
    %c16_i32 = arith.constant 16 : i32
    %10 = arith.muli %c0_i32, %c16_i32 : i32
    %11 = tpu.assume_multiple %10, 16 : i32
    %12 = arith.index_cast %11 : i32 to index
    %c0_11 = arith.constant 0 : index
    %13 = vector.load %arg10[%12, %c0_11] : memref<128x512xf32, #tpu.memory_space<vmem>>, vector<16x512xf32>
    %cst_12 = arith.constant dense<0.000000e+00> : vector<16x512xf32>
    %14 = tpu.matmul %8, %7, %cst_12 {dimension_numbers = #tpu.dot_dimension_numbers<[1], [0], [0], [1], [0, 0, 1, 1], [], []>} : vector<16x128xbf16>, vector<128x512xbf16>, vector<16x512xf32> -> vector<16x512xf32>
    %15 = arith.addf %13, %14 : vector<16x512xf32>
    %16 = vector.extract_strided_slice %15 {offsets = [0, 0], sizes = [16, 384], strides = [1, 1]} : vector<16x512xf32> to vector<16x384xf32>
    %17 = arith.negf %16 : vector<16x384xf32>
    %18 = math.exp %17 : vector<16x384xf32>
    %cst_13 = arith.constant 1.000000e+00 : f32
    %19 = vector.broadcast %cst_13 : f32 to vector<16x384xf32>
    %20 = arith.addf %19, %18 : vector<16x384xf32>
    %21 = arith.divf %19, %20 : vector<16x384xf32>
    %22 = vector.extract_strided_slice %21 {offsets = [0, 0], sizes = [16, 128], strides = [1, 1]} : vector<16x384xf32> to vector<16x128xf32>
    %23 = vector.extract_strided_slice %21 {offsets = [0, 128], sizes = [16, 128], strides = [1, 1]} : vector<16x384xf32> to vector<16x128xf32>
    %24 = vector.extract_strided_slice %21 {offsets = [0, 256], sizes = [16, 128], strides = [1, 1]} : vector<16x384xf32> to vector<16x128xf32>
    %25 = vector.extract_strided_slice %15 {offsets = [0, 384], sizes = [16, 128], strides = [1, 1]} : vector<16x512xf32> to vector<16x128xf32>
    %26 = math.tanh %25 : vector<16x128xf32>
    %27 = arith.mulf %23, %9 : vector<16x128xf32>
    %28 = arith.mulf %22, %26 : vector<16x128xf32>
    %29 = arith.addf %27, %28 : vector<16x128xf32>
    %30 = math.tanh %29 : vector<16x128xf32>
    %31 = arith.mulf %24, %30 : vector<16x128xf32>
    %32 = arith.truncf %31 : vector<16x128xf32> to vector<16x128xbf16>
    %33 = arith.index_cast %11 : i32 to index
    %c0_14 = arith.constant 0 : index
    %34 = vector.load %arg11[%33, %c0_14] : memref<128x128xbf16, #tpu.memory_space<vmem>>, vector<16x128xbf16>
    tpu.vector_store %arg11[%33, %c0_14], %32 {strides = array<i32>} : memref<128x128xbf16, #tpu.memory_space<vmem>>, vector<16x128xbf16>,
    %c1_i32 = arith.constant 1 : i32
    %c16_i32_15 = arith.constant 16 : i32
    %35 = arith.muli %c1_i32, %c16_i32_15 : i32
    %36 = tpu.assume_multiple %35, 16 : i32
    %37 = arith.index_cast %36 : i32 to index
    %c0_16 = arith.constant 0 : index
    %38 = vector.load %arg10[%37, %c0_16] : memref<128x512xf32, #tpu.memory_space<vmem>>, vector<16x512xf32>
    %cst_17 = arith.constant dense<0.000000e+00> : vector<16x512xf32>
    %39 = tpu.matmul %32, %7, %cst_17 {dimension_numbers = #tpu.dot_dimension_numbers<[1], [0], [0], [1], [0, 0, 1, 1], [], []>} : vector<16x128xbf16>, vector<128x512xbf16>, vector<16x512xf32> -> vector<16x512xf32>
    %40 = arith.addf %38, %39 : vector<16x512xf32>
    %41 = vector.extract_strided_slice %40 {offsets = [0, 0], sizes = [16, 384], strides = [1, 1]} : vector<16x512xf32> to vector<16x384xf32>
    %42 = arith.negf %41 : vector<16x384xf32>
    %43 = math.exp %42 : vector<16x384xf32>
    %cst_18 = arith.constant 1.000000e+00 : f32
    %44 = vector.broadcast %cst_18 : f32 to vector<16x384xf32>
    %45 = arith.addf %44, %43 : vector<16x384xf32>
    %46 = arith.divf %44, %45 : vector<16x384xf32>
    %47 = vector.extract_strided_slice %46 {offsets = [0, 0], sizes = [16, 128], strides = [1, 1]} : vector<16x384xf32> to vector<16x128xf32>
    %48 = vector.extract_strided_slice %46 {offsets = [0, 128], sizes = [16, 128], strides = [1, 1]} : vector<16x384xf32> to vector<16x128xf32>
    %49 = vector.extract_strided_slice %46 {offsets = [0, 256], sizes = [16, 128], strides = [1, 1]} : vector<16x384xf32> to vector<16x128xf32>
    %50 = vector.extract_strided_slice %40 {offsets = [0, 384], sizes = [16, 128], strides = [1, 1]} : vector<16x512xf32> to vector<16x128xf32>
    %51 = math.tanh %50 : vector<16x128xf32>
    %52 = arith.mulf %48, %29 : vector<16x128xf32>
    %53 = arith.mulf %47, %51 : vector<16x128xf32>
    %54 = arith.addf %52, %53 : vector<16x128xf32>
    %55 = math.tanh %54 : vector<16x128xf32>
    %56 = arith.mulf %49, %55 : vector<16x128xf32>
    %57 = arith.truncf %56 : vector<16x128xf32> to vector<16x128xbf16>
    %58 = arith.index_cast %36 : i32 to index
    %c0_19 = arith.constant 0 : index
    %59 = vector.load %arg11[%58, %c0_19] : memref<128x128xbf16, #tpu.memory_space<vmem>>, vector<16x128xbf16>
    tpu.vector_store %arg11[%58, %c0_19], %57 {strides = array<i32>} : memref<128x128xbf16, #tpu.memory_space<vmem>>, vector<16x128xbf16>,
    %c2_i32 = arith.constant 2 : i32
    %c16_i32_20 = arith.constant 16 : i32
    %60 = arith.muli %c2_i32, %c16_i32_20 : i32
    %61 = tpu.assume_multiple %60, 16 : i32
    %62 = arith.index_cast %61 : i32 to index
    %c0_21 = arith.constant 0 : index
    %63 = vector.load %arg10[%62, %c0_21] : memref<128x512xf32, #tpu.memory_space<vmem>>, vector<16x512xf32>
    %cst_22 = arith.constant dense<0.000000e+00> : vector<16x512xf32>
    %64 = tpu.matmul %57, %7, %cst_22 {dimension_numbers = #tpu.dot_dimension_numbers<[1], [0], [0], [1], [0, 0, 1, 1], [], []>} : vector<16x128xbf16>, vector<128x512xbf16>, vector<16x512xf32> -> vector<16x512xf32>
    %65 = arith.addf %63, %64 : vector<16x512xf32>
    %66 = vector.extract_strided_slice %65 {offsets = [0, 0], sizes = [16, 384], strides = [1, 1]} : vector<16x512xf32> to vector<16x384xf32>
    %67 = arith.negf %66 : vector<16x384xf32>
    %68 = math.exp %67 : vector<16x384xf32>
    %cst_23 = arith.constant 1.000000e+00 : f32
    %69 = vector.broadcast %cst_23 : f32 to vector<16x384xf32>
    %70 = arith.addf %69, %68 : vector<16x384xf32>
    %71 = arith.divf %69, %70 : vector<16x384xf32>
    %72 = vector.extract_strided_slice %71 {offsets = [0, 0], sizes = [16, 128], strides = [1, 1]} : vector<16x384xf32> to vector<16x128xf32>
    %73 = vector.extract_strided_slice %71 {offsets = [0, 128], sizes = [16, 128], strides = [1, 1]} : vector<16x384xf32> to vector<16x128xf32>
    %74 = vector.extract_strided_slice %71 {offsets = [0, 256], sizes = [16, 128], strides = [1, 1]} : vector<16x384xf32> to vector<16x128xf32>
    %75 = vector.extract_strided_slice %65 {offsets = [0, 384], sizes = [16, 128], strides = [1, 1]} : vector<16x512xf32> to vector<16x128xf32>
    %76 = math.tanh %75 : vector<16x128xf32>
    %77 = arith.mulf %73, %54 : vector<16x128xf32>
    %78 = arith.mulf %72, %76 : vector<16x128xf32>
    %79 = arith.addf %77, %78 : vector<16x128xf32>
    %80 = math.tanh %79 : vector<16x128xf32>
    %81 = arith.mulf %74, %80 : vector<16x128xf32>
    %82 = arith.truncf %81 : vector<16x128xf32> to vector<16x128xbf16>
    %83 = arith.index_cast %61 : i32 to index
    %c0_24 = arith.constant 0 : index
    %84 = vector.load %arg11[%83, %c0_24] : memref<128x128xbf16, #tpu.memory_space<vmem>>, vector<16x128xbf16>
    tpu.vector_store %arg11[%83, %c0_24], %82 {strides = array<i32>} : memref<128x128xbf16, #tpu.memory_space<vmem>>, vector<16x128xbf16>,
    %c3_i32 = arith.constant 3 : i32
    %c16_i32_25 = arith.constant 16 : i32
    %85 = arith.muli %c3_i32, %c16_i32_25 : i32
    %86 = tpu.assume_multiple %85, 16 : i32
    %87 = arith.index_cast %86 : i32 to index
    %c0_26 = arith.constant 0 : index
    %88 = vector.load %arg10[%87, %c0_26] : memref<128x512xf32, #tpu.memory_space<vmem>>, vector<16x512xf32>
    %cst_27 = arith.constant dense<0.000000e+00> : vector<16x512xf32>
    %89 = tpu.matmul %82, %7, %cst_27 {dimension_numbers = #tpu.dot_dimension_numbers<[1], [0], [0], [1], [0, 0, 1, 1], [], []>} : vector<16x128xbf16>, vector<128x512xbf16>, vector<16x512xf32> -> vector<16x512xf32>
    %90 = arith.addf %88, %89 : vector<16x512xf32>
    %91 = vector.extract_strided_slice %90 {offsets = [0, 0], sizes = [16, 384], strides = [1, 1]} : vector<16x512xf32> to vector<16x384xf32>
    %92 = arith.negf %91 : vector<16x384xf32>
    %93 = math.exp %92 : vector<16x384xf32>
    %cst_28 = arith.constant 1.000000e+00 : f32
    %94 = vector.broadcast %cst_28 : f32 to vector<16x384xf32>
    %95 = arith.addf %94, %93 : vector<16x384xf32>
    %96 = arith.divf %94, %95 : vector<16x384xf32>
    %97 = vector.extract_strided_slice %96 {offsets = [0, 0], sizes = [16, 128], strides = [1, 1]} : vector<16x384xf32> to vector<16x128xf32>
    %98 = vector.extract_strided_slice %96 {offsets = [0, 128], sizes = [16, 128], strides = [1, 1]} : vector<16x384xf32> to vector<16x128xf32>
    %99 = vector.extract_strided_slice %96 {offsets = [0, 256], sizes = [16, 128], strides = [1, 1]} : vector<16x384xf32> to vector<16x128xf32>
    %100 = vector.extract_strided_slice %90 {offsets = [0, 384], sizes = [16, 128], strides = [1, 1]} : vector<16x512xf32> to vector<16x128xf32>
    %101 = math.tanh %100 : vector<16x128xf32>
    %102 = arith.mulf %98, %79 : vector<16x128xf32>
    %103 = arith.mulf %97, %101 : vector<16x128xf32>
    %104 = arith.addf %102, %103 : vector<16x128xf32>
    %105 = math.tanh %104 : vector<16x128xf32>
    %106 = arith.mulf %99, %105 : vector<16x128xf32>
    %107 = arith.truncf %106 : vector<16x128xf32> to vector<16x128xbf16>
    %108 = arith.index_cast %86 : i32 to index
    %c0_29 = arith.constant 0 : index
    %109 = vector.load %arg11[%108, %c0_29] : memref<128x128xbf16, #tpu.memory_space<vmem>>, vector<16x128xbf16>
    tpu.vector_store %arg11[%108, %c0_29], %107 {strides = array<i32>} : memref<128x128xbf16, #tpu.memory_space<vmem>>, vector<16x128xbf16>,
    %c4_i32 = arith.constant 4 : i32
    %c16_i32_30 = arith.constant 16 : i32
    %110 = arith.muli %c4_i32, %c16_i32_30 : i32
    %111 = tpu.assume_multiple %110, 16 : i32
    %112 = arith.index_cast %111 : i32 to index
    %c0_31 = arith.constant 0 : index
    %113 = vector.load %arg10[%112, %c0_31] : memref<128x512xf32, #tpu.memory_space<vmem>>, vector<16x512xf32>
    %cst_32 = arith.constant dense<0.000000e+00> : vector<16x512xf32>
    %114 = tpu.matmul %107, %7, %cst_32 {dimension_numbers = #tpu.dot_dimension_numbers<[1], [0], [0], [1], [0, 0, 1, 1], [], []>} : vector<16x128xbf16>, vector<128x512xbf16>, vector<16x512xf32> -> vector<16x512xf32>
    %115 = arith.addf %113, %114 : vector<16x512xf32>
    %116 = vector.extract_strided_slice %115 {offsets = [0, 0], sizes = [16, 384], strides = [1, 1]} : vector<16x512xf32> to vector<16x384xf32>
    %117 = arith.negf %116 : vector<16x384xf32>
    %118 = math.exp %117 : vector<16x384xf32>
    %cst_33 = arith.constant 1.000000e+00 : f32
    %119 = vector.broadcast %cst_33 : f32 to vector<16x384xf32>
    %120 = arith.addf %119, %118 : vector<16x384xf32>
    %121 = arith.divf %119, %120 : vector<16x384xf32>
    %122 = vector.extract_strided_slice %121 {offsets = [0, 0], sizes = [16, 128], strides = [1, 1]} : vector<16x384xf32> to vector<16x128xf32>
    %123 = vector.extract_strided_slice %121 {offsets = [0, 128], sizes = [16, 128], strides = [1, 1]} : vector<16x384xf32> to vector<16x128xf32>
    %124 = vector.extract_strided_slice %121 {offsets = [0, 256], sizes = [16, 128], strides = [1, 1]} : vector<16x384xf32> to vector<16x128xf32>
    %125 = vector.extract_strided_slice %115 {offsets = [0, 384], sizes = [16, 128], strides = [1, 1]} : vector<16x512xf32> to vector<16x128xf32>
    %126 = math.tanh %125 : vector<16x128xf32>
    %127 = arith.mulf %123, %104 : vector<16x128xf32>
    %128 = arith.mulf %122, %126 : vector<16x128xf32>
    %129 = arith.addf %127, %128 : vector<16x128xf32>
    %130 = math.tanh %129 : vector<16x128xf32>
    %131 = arith.mulf %124, %130 : vector<16x128xf32>
    %132 = arith.truncf %131 : vector<16x128xf32> to vector<16x128xbf16>
    %133 = arith.index_cast %111 : i32 to index
    %c0_34 = arith.constant 0 : index
    %134 = vector.load %arg11[%133, %c0_34] : memref<128x128xbf16, #tpu.memory_space<vmem>>, vector<16x128xbf16>
    tpu.vector_store %arg11[%133, %c0_34], %132 {strides = array<i32>} : memref<128x128xbf16, #tpu.memory_space<vmem>>, vector<16x128xbf16>,
    %c5_i32 = arith.constant 5 : i32
    %c16_i32_35 = arith.constant 16 : i32
    %135 = arith.muli %c5_i32, %c16_i32_35 : i32
    %136 = tpu.assume_multiple %135, 16 : i32
    %137 = arith.index_cast %136 : i32 to index
    %c0_36 = arith.constant 0 : index
    %138 = vector.load %arg10[%137, %c0_36] : memref<128x512xf32, #tpu.memory_space<vmem>>, vector<16x512xf32>
    %cst_37 = arith.constant dense<0.000000e+00> : vector<16x512xf32>
    %139 = tpu.matmul %132, %7, %cst_37 {dimension_numbers = #tpu.dot_dimension_numbers<[1], [0], [0], [1], [0, 0, 1, 1], [], []>} : vector<16x128xbf16>, vector<128x512xbf16>, vector<16x512xf32> -> vector<16x512xf32>
    %140 = arith.addf %138, %139 : vector<16x512xf32>
    %141 = vector.extract_strided_slice %140 {offsets = [0, 0], sizes = [16, 384], strides = [1, 1]} : vector<16x512xf32> to vector<16x384xf32>
    %142 = arith.negf %141 : vector<16x384xf32>
    %143 = math.exp %142 : vector<16x384xf32>
    %cst_38 = arith.constant 1.000000e+00 : f32
    %144 = vector.broadcast %cst_38 : f32 to vector<16x384xf32>
    %145 = arith.addf %144, %143 : vector<16x384xf32>
    %146 = arith.divf %144, %145 : vector<16x384xf32>
    %147 = vector.extract_strided_slice %146 {offsets = [0, 0], sizes = [16, 128], strides = [1, 1]} : vector<16x384xf32> to vector<16x128xf32>
    %148 = vector.extract_strided_slice %146 {offsets = [0, 128], sizes = [16, 128], strides = [1, 1]} : vector<16x384xf32> to vector<16x128xf32>
    %149 = vector.extract_strided_slice %146 {offsets = [0, 256], sizes = [16, 128], strides = [1, 1]} : vector<16x384xf32> to vector<16x128xf32>
    %150 = vector.extract_strided_slice %140 {offsets = [0, 384], sizes = [16, 128], strides = [1, 1]} : vector<16x512xf32> to vector<16x128xf32>
    %151 = math.tanh %150 : vector<16x128xf32>
    %152 = arith.mulf %148, %129 : vector<16x128xf32>
    %153 = arith.mulf %147, %151 : vector<16x128xf32>
    %154 = arith.addf %152, %153 : vector<16x128xf32>
    %155 = math.tanh %154 : vector<16x128xf32>
    %156 = arith.mulf %149, %155 : vector<16x128xf32>
    %157 = arith.truncf %156 : vector<16x128xf32> to vector<16x128xbf16>
    %158 = arith.index_cast %136 : i32 to index
    %c0_39 = arith.constant 0 : index
    %159 = vector.load %arg11[%158, %c0_39] : memref<128x128xbf16, #tpu.memory_space<vmem>>, vector<16x128xbf16>
    tpu.vector_store %arg11[%158, %c0_39], %157 {strides = array<i32>} : memref<128x128xbf16, #tpu.memory_space<vmem>>, vector<16x128xbf16>,
    %c6_i32 = arith.constant 6 : i32
    %c16_i32_40 = arith.constant 16 : i32
    %160 = arith.muli %c6_i32, %c16_i32_40 : i32
    %161 = tpu.assume_multiple %160, 16 : i32
    %162 = arith.index_cast %161 : i32 to index
    %c0_41 = arith.constant 0 : index
    %163 = vector.load %arg10[%162, %c0_41] : memref<128x512xf32, #tpu.memory_space<vmem>>, vector<16x512xf32>
    %cst_42 = arith.constant dense<0.000000e+00> : vector<16x512xf32>
    %164 = tpu.matmul %157, %7, %cst_42 {dimension_numbers = #tpu.dot_dimension_numbers<[1], [0], [0], [1], [0, 0, 1, 1], [], []>} : vector<16x128xbf16>, vector<128x512xbf16>, vector<16x512xf32> -> vector<16x512xf32>
    %165 = arith.addf %163, %164 : vector<16x512xf32>
    %166 = vector.extract_strided_slice %165 {offsets = [0, 0], sizes = [16, 384], strides = [1, 1]} : vector<16x512xf32> to vector<16x384xf32>
    %167 = arith.negf %166 : vector<16x384xf32>
    %168 = math.exp %167 : vector<16x384xf32>
    %cst_43 = arith.constant 1.000000e+00 : f32
    %169 = vector.broadcast %cst_43 : f32 to vector<16x384xf32>
    %170 = arith.addf %169, %168 : vector<16x384xf32>
    %171 = arith.divf %169, %170 : vector<16x384xf32>
    %172 = vector.extract_strided_slice %171 {offsets = [0, 0], sizes = [16, 128], strides = [1, 1]} : vector<16x384xf32> to vector<16x128xf32>
    %173 = vector.extract_strided_slice %171 {offsets = [0, 128], sizes = [16, 128], strides = [1, 1]} : vector<16x384xf32> to vector<16x128xf32>
    %174 = vector.extract_strided_slice %171 {offsets = [0, 256], sizes = [16, 128], strides = [1, 1]} : vector<16x384xf32> to vector<16x128xf32>
    %175 = vector.extract_strided_slice %165 {offsets = [0, 384], sizes = [16, 128], strides = [1, 1]} : vector<16x512xf32> to vector<16x128xf32>
    %176 = math.tanh %175 : vector<16x128xf32>
    %177 = arith.mulf %173, %154 : vector<16x128xf32>
    %178 = arith.mulf %172, %176 : vector<16x128xf32>
    %179 = arith.addf %177, %178 : vector<16x128xf32>
    %180 = math.tanh %179 : vector<16x128xf32>
    %181 = arith.mulf %174, %180 : vector<16x128xf32>
    %182 = arith.truncf %181 : vector<16x128xf32> to vector<16x128xbf16>
    %183 = arith.index_cast %161 : i32 to index
    %c0_44 = arith.constant 0 : index
    %184 = vector.load %arg11[%183, %c0_44] : memref<128x128xbf16, #tpu.memory_space<vmem>>, vector<16x128xbf16>
    tpu.vector_store %arg11[%183, %c0_44], %182 {strides = array<i32>} : memref<128x128xbf16, #tpu.memory_space<vmem>>, vector<16x128xbf16>,
    %c7_i32 = arith.constant 7 : i32
    %c16_i32_45 = arith.constant 16 : i32
    %185 = arith.muli %c7_i32, %c16_i32_45 : i32
    %186 = tpu.assume_multiple %185, 16 : i32
    %187 = arith.index_cast %186 : i32 to index
    %c0_46 = arith.constant 0 : index
    %188 = vector.load %arg10[%187, %c0_46] : memref<128x512xf32, #tpu.memory_space<vmem>>, vector<16x512xf32>
    %cst_47 = arith.constant dense<0.000000e+00> : vector<16x512xf32>
    %189 = tpu.matmul %182, %7, %cst_47 {dimension_numbers = #tpu.dot_dimension_numbers<[1], [0], [0], [1], [0, 0, 1, 1], [], []>} : vector<16x128xbf16>, vector<128x512xbf16>, vector<16x512xf32> -> vector<16x512xf32>
    %190 = arith.addf %188, %189 : vector<16x512xf32>
    %191 = vector.extract_strided_slice %190 {offsets = [0, 0], sizes = [16, 384], strides = [1, 1]} : vector<16x512xf32> to vector<16x384xf32>
    %192 = arith.negf %191 : vector<16x384xf32>
    %193 = math.exp %192 : vector<16x384xf32>
    %cst_48 = arith.constant 1.000000e+00 : f32
    %194 = vector.broadcast %cst_48 : f32 to vector<16x384xf32>
    %195 = arith.addf %194, %193 : vector<16x384xf32>
    %196 = arith.divf %194, %195 : vector<16x384xf32>
    %197 = vector.extract_strided_slice %196 {offsets = [0, 0], sizes = [16, 128], strides = [1, 1]} : vector<16x384xf32> to vector<16x128xf32>
    %198 = vector.extract_strided_slice %196 {offsets = [0, 128], sizes = [16, 128], strides = [1, 1]} : vector<16x384xf32> to vector<16x128xf32>
    %199 = vector.extract_strided_slice %196 {offsets = [0, 256], sizes = [16, 128], strides = [1, 1]} : vector<16x384xf32> to vector<16x128xf32>
    %200 = vector.extract_strided_slice %190 {offsets = [0, 384], sizes = [16, 128], strides = [1, 1]} : vector<16x512xf32> to vector<16x128xf32>
    %201 = math.tanh %200 : vector<16x128xf32>
    %202 = arith.mulf %198, %179 : vector<16x128xf32>
    %203 = arith.mulf %197, %201 : vector<16x128xf32>
    %204 = arith.addf %202, %203 : vector<16x128xf32>
    %205 = math.tanh %204 : vector<16x128xf32>
    %206 = arith.mulf %199, %205 : vector<16x128xf32>
    %207 = arith.truncf %206 : vector<16x128xf32> to vector<16x128xbf16>
    %208 = arith.index_cast %186 : i32 to index
    %c0_49 = arith.constant 0 : index
    %209 = vector.load %arg11[%208, %c0_49] : memref<128x128xbf16, #tpu.memory_space<vmem>>, vector<16x128xbf16>
    tpu.vector_store %arg11[%208, %c0_49], %207 {strides = array<i32>} : memref<128x128xbf16, #tpu.memory_space<vmem>>, vector<16x128xbf16>,
    %c8_i32 = arith.constant 8 : i32
    %c0_50 = arith.constant 0 : index
    %c0_51 = arith.constant 0 : index
    %210 = vector.load %arg11[%c0_50, %c0_51] : memref<128x128xbf16, #tpu.memory_space<vmem>>, vector<128x128xbf16>
    %c0_52 = arith.constant 0 : index
    %c0_53 = arith.constant 0 : index
    %211 = vector.load %arg4[%c0_52, %c0_53] : memref<128x512xbf16, #tpu.memory_space<vmem>>, vector<128x512xbf16>
    %cst_54 = arith.constant dense<0.000000e+00> : vector<128x512xf32>
    %212 = tpu.matmul %210, %211, %cst_54 {dimension_numbers = #tpu.dot_dimension_numbers<[1], [0], [0], [1], [0, 0, 1, 1], [], []>} : vector<128x128xbf16>, vector<128x512xbf16>, vector<128x512xf32> -> vector<128x512xf32>
    %c0_55 = arith.constant 0 : index
    %c0_56 = arith.constant 0 : index
    %213 = vector.load %arg6[%c0_55, %c0_56] : memref<1x512xf32, #tpu.memory_space<vmem>>, vector<1x512xf32>
    %214 = vector.broadcast %213 : vector<1x512xf32> to vector<128x512xf32>
    %215 = arith.addf %212, %214 : vector<128x512xf32>
    %c0_57 = arith.constant 0 : index
    %c0_58 = arith.constant 0 : index
    %216 = vector.load %arg10[%c0_57, %c0_58] : memref<128x512xf32, #tpu.memory_space<vmem>>, vector<128x512xf32>
    tpu.vector_store %arg10[%c0_57, %c0_58], %215 {strides = array<i32>} : memref<128x512xf32, #tpu.memory_space<vmem>>, vector<128x512xf32>,
    %c0_59 = arith.constant 0 : index
    %c0_60 = arith.constant 0 : index
    %217 = vector.load %arg5[%c0_59, %c0_60] : memref<128x512xbf16, #tpu.memory_space<vmem>>, vector<128x512xbf16>
    %cst_61 = arith.constant 0.000000e+00 : bf16
    %218 = vector.broadcast %cst_61 : bf16 to vector<16x128xbf16>
    %cst_62 = arith.constant 0.000000e+00 : f32
    %219 = vector.broadcast %cst_62 : f32 to vector<16x128xf32>
    %c0_i32_63 = arith.constant 0 : i32
    %c16_i32_64 = arith.constant 16 : i32
    %220 = arith.muli %c0_i32_63, %c16_i32_64 : i32
    %221 = tpu.assume_multiple %220, 16 : i32
    %222 = arith.index_cast %221 : i32 to index
    %c0_65 = arith.constant 0 : index
    %223 = vector.load %arg10[%222, %c0_65] : memref<128x512xf32, #tpu.memory_space<vmem>>, vector<16x512xf32>
    %cst_66 = arith.constant dense<0.000000e+00> : vector<16x512xf32>
    %224 = tpu.matmul %218, %217, %cst_66 {dimension_numbers = #tpu.dot_dimension_numbers<[1], [0], [0], [1], [0, 0, 1, 1], [], []>} : vector<16x128xbf16>, vector<128x512xbf16>, vector<16x512xf32> -> vector<16x512xf32>
    %225 = arith.addf %223, %224 : vector<16x512xf32>
    %226 = vector.extract_strided_slice %225 {offsets = [0, 0], sizes = [16, 384], strides = [1, 1]} : vector<16x512xf32> to vector<16x384xf32>
    %227 = arith.negf %226 : vector<16x384xf32>
    %228 = math.exp %227 : vector<16x384xf32>
    %cst_67 = arith.constant 1.000000e+00 : f32
    %229 = vector.broadcast %cst_67 : f32 to vector<16x384xf32>
    %230 = arith.addf %229, %228 : vector<16x384xf32>
    %231 = arith.divf %229, %230 : vector<16x384xf32>
    %232 = vector.extract_strided_slice %231 {offsets = [0, 0], sizes = [16, 128], strides = [1, 1]} : vector<16x384xf32> to vector<16x128xf32>
    %233 = vector.extract_strided_slice %231 {offsets = [0, 128], sizes = [16, 128], strides = [1, 1]} : vector<16x384xf32> to vector<16x128xf32>
    %234 = vector.extract_strided_slice %231 {offsets = [0, 256], sizes = [16, 128], strides = [1, 1]} : vector<16x384xf32> to vector<16x128xf32>
    %235 = vector.extract_strided_slice %225 {offsets = [0, 384], sizes = [16, 128], strides = [1, 1]} : vector<16x512xf32> to vector<16x128xf32>
    %236 = math.tanh %235 : vector<16x128xf32>
    %237 = arith.mulf %233, %219 : vector<16x128xf32>
    %238 = arith.mulf %232, %236 : vector<16x128xf32>
    %239 = arith.addf %237, %238 : vector<16x128xf32>
    %240 = math.tanh %239 : vector<16x128xf32>
    %241 = arith.mulf %234, %240 : vector<16x128xf32>
    %242 = arith.truncf %241 : vector<16x128xf32> to vector<16x128xbf16>
    %c1_i32_68 = arith.constant 1 : i32
    %c16_i32_69 = arith.constant 16 : i32
    %243 = arith.muli %c1_i32_68, %c16_i32_69 : i32
    %244 = tpu.assume_multiple %243, 16 : i32
    %245 = arith.index_cast %244 : i32 to index
    %c0_70 = arith.constant 0 : index
    %246 = vector.load %arg10[%245, %c0_70] : memref<128x512xf32, #tpu.memory_space<vmem>>, vector<16x512xf32>
    %cst_71 = arith.constant dense<0.000000e+00> : vector<16x512xf32>
    %247 = tpu.matmul %242, %217, %cst_71 {dimension_numbers = #tpu.dot_dimension_numbers<[1], [0], [0], [1], [0, 0, 1, 1], [], []>} : vector<16x128xbf16>, vector<128x512xbf16>, vector<16x512xf32> -> vector<16x512xf32>
    %248 = arith.addf %246, %247 : vector<16x512xf32>
    %249 = vector.extract_strided_slice %248 {offsets = [0, 0], sizes = [16, 384], strides = [1, 1]} : vector<16x512xf32> to vector<16x384xf32>
    %250 = arith.negf %249 : vector<16x384xf32>
    %251 = math.exp %250 : vector<16x384xf32>
    %cst_72 = arith.constant 1.000000e+00 : f32
    %252 = vector.broadcast %cst_72 : f32 to vector<16x384xf32>
    %253 = arith.addf %252, %251 : vector<16x384xf32>
    %254 = arith.divf %252, %253 : vector<16x384xf32>
    %255 = vector.extract_strided_slice %254 {offsets = [0, 0], sizes = [16, 128], strides = [1, 1]} : vector<16x384xf32> to vector<16x128xf32>
    %256 = vector.extract_strided_slice %254 {offsets = [0, 128], sizes = [16, 128], strides = [1, 1]} : vector<16x384xf32> to vector<16x128xf32>
    %257 = vector.extract_strided_slice %254 {offsets = [0, 256], sizes = [16, 128], strides = [1, 1]} : vector<16x384xf32> to vector<16x128xf32>
    %258 = vector.extract_strided_slice %248 {offsets = [0, 384], sizes = [16, 128], strides = [1, 1]} : vector<16x512xf32> to vector<16x128xf32>
    %259 = math.tanh %258 : vector<16x128xf32>
    %260 = arith.mulf %256, %239 : vector<16x128xf32>
    %261 = arith.mulf %255, %259 : vector<16x128xf32>
    %262 = arith.addf %260, %261 : vector<16x128xf32>
    %263 = math.tanh %262 : vector<16x128xf32>
    %264 = arith.mulf %257, %263 : vector<16x128xf32>
    %265 = arith.truncf %264 : vector<16x128xf32> to vector<16x128xbf16>
    %c2_i32_73 = arith.constant 2 : i32
    %c16_i32_74 = arith.constant 16 : i32
    %266 = arith.muli %c2_i32_73, %c16_i32_74 : i32
    %267 = tpu.assume_multiple %266, 16 : i32
    %268 = arith.index_cast %267 : i32 to index
    %c0_75 = arith.constant 0 : index
    %269 = vector.load %arg10[%268, %c0_75] : memref<128x512xf32, #tpu.memory_space<vmem>>, vector<16x512xf32>
    %cst_76 = arith.constant dense<0.000000e+00> : vector<16x512xf32>
    %270 = tpu.matmul %265, %217, %cst_76 {dimension_numbers = #tpu.dot_dimension_numbers<[1], [0], [0], [1], [0, 0, 1, 1], [], []>} : vector<16x128xbf16>, vector<128x512xbf16>, vector<16x512xf32> -> vector<16x512xf32>
    %271 = arith.addf %269, %270 : vector<16x512xf32>
    %272 = vector.extract_strided_slice %271 {offsets = [0, 0], sizes = [16, 384], strides = [1, 1]} : vector<16x512xf32> to vector<16x384xf32>
    %273 = arith.negf %272 : vector<16x384xf32>
    %274 = math.exp %273 : vector<16x384xf32>
    %cst_77 = arith.constant 1.000000e+00 : f32
    %275 = vector.broadcast %cst_77 : f32 to vector<16x384xf32>
    %276 = arith.addf %275, %274 : vector<16x384xf32>
    %277 = arith.divf %275, %276 : vector<16x384xf32>
    %278 = vector.extract_strided_slice %277 {offsets = [0, 0], sizes = [16, 128], strides = [1, 1]} : vector<16x384xf32> to vector<16x128xf32>
    %279 = vector.extract_strided_slice %277 {offsets = [0, 128], sizes = [16, 128], strides = [1, 1]} : vector<16x384xf32> to vector<16x128xf32>
    %280 = vector.extract_strided_slice %277 {offsets = [0, 256], sizes = [16, 128], strides = [1, 1]} : vector<16x384xf32> to vector<16x128xf32>
    %281 = vector.extract_strided_slice %271 {offsets = [0, 384], sizes = [16, 128], strides = [1, 1]} : vector<16x512xf32> to vector<16x128xf32>
    %282 = math.tanh %281 : vector<16x128xf32>
    %283 = arith.mulf %279, %262 : vector<16x128xf32>
    %284 = arith.mulf %278, %282 : vector<16x128xf32>
    %285 = arith.addf %283, %284 : vector<16x128xf32>
    %286 = math.tanh %285 : vector<16x128xf32>
    %287 = arith.mulf %280, %286 : vector<16x128xf32>
    %288 = arith.truncf %287 : vector<16x128xf32> to vector<16x128xbf16>
    %c3_i32_78 = arith.constant 3 : i32
    %c16_i32_79 = arith.constant 16 : i32
    %289 = arith.muli %c3_i32_78, %c16_i32_79 : i32
    %290 = tpu.assume_multiple %289, 16 : i32
    %291 = arith.index_cast %290 : i32 to index
    %c0_80 = arith.constant 0 : index
    %292 = vector.load %arg10[%291, %c0_80] : memref<128x512xf32, #tpu.memory_space<vmem>>, vector<16x512xf32>
    %cst_81 = arith.constant dense<0.000000e+00> : vector<16x512xf32>
    %293 = tpu.matmul %288, %217, %cst_81 {dimension_numbers = #tpu.dot_dimension_numbers<[1], [0], [0], [1], [0, 0, 1, 1], [], []>} : vector<16x128xbf16>, vector<128x512xbf16>, vector<16x512xf32> -> vector<16x512xf32>
    %294 = arith.addf %292, %293 : vector<16x512xf32>
    %295 = vector.extract_strided_slice %294 {offsets = [0, 0], sizes = [16, 384], strides = [1, 1]} : vector<16x512xf32> to vector<16x384xf32>
    %296 = arith.negf %295 : vector<16x384xf32>
    %297 = math.exp %296 : vector<16x384xf32>
    %cst_82 = arith.constant 1.000000e+00 : f32
    %298 = vector.broadcast %cst_82 : f32 to vector<16x384xf32>
    %299 = arith.addf %298, %297 : vector<16x384xf32>
    %300 = arith.divf %298, %299 : vector<16x384xf32>
    %301 = vector.extract_strided_slice %300 {offsets = [0, 0], sizes = [16, 128], strides = [1, 1]} : vector<16x384xf32> to vector<16x128xf32>
    %302 = vector.extract_strided_slice %300 {offsets = [0, 128], sizes = [16, 128], strides = [1, 1]} : vector<16x384xf32> to vector<16x128xf32>
    %303 = vector.extract_strided_slice %300 {offsets = [0, 256], sizes = [16, 128], strides = [1, 1]} : vector<16x384xf32> to vector<16x128xf32>
    %304 = vector.extract_strided_slice %294 {offsets = [0, 384], sizes = [16, 128], strides = [1, 1]} : vector<16x512xf32> to vector<16x128xf32>
    %305 = math.tanh %304 : vector<16x128xf32>
    %306 = arith.mulf %302, %285 : vector<16x128xf32>
    %307 = arith.mulf %301, %305 : vector<16x128xf32>
    %308 = arith.addf %306, %307 : vector<16x128xf32>
    %309 = math.tanh %308 : vector<16x128xf32>
    %310 = arith.mulf %303, %309 : vector<16x128xf32>
    %311 = arith.truncf %310 : vector<16x128xf32> to vector<16x128xbf16>
    %c4_i32_83 = arith.constant 4 : i32
    %c16_i32_84 = arith.constant 16 : i32
    %312 = arith.muli %c4_i32_83, %c16_i32_84 : i32
    %313 = tpu.assume_multiple %312, 16 : i32
    %314 = arith.index_cast %313 : i32 to index
    %c0_85 = arith.constant 0 : index
    %315 = vector.load %arg10[%314, %c0_85] : memref<128x512xf32, #tpu.memory_space<vmem>>, vector<16x512xf32>
    %cst_86 = arith.constant dense<0.000000e+00> : vector<16x512xf32>
    %316 = tpu.matmul %311, %217, %cst_86 {dimension_numbers = #tpu.dot_dimension_numbers<[1], [0], [0], [1], [0, 0, 1, 1], [], []>} : vector<16x128xbf16>, vector<128x512xbf16>, vector<16x512xf32> -> vector<16x512xf32>
    %317 = arith.addf %315, %316 : vector<16x512xf32>
    %318 = vector.extract_strided_slice %317 {offsets = [0, 0], sizes = [16, 384], strides = [1, 1]} : vector<16x512xf32> to vector<16x384xf32>
    %319 = arith.negf %318 : vector<16x384xf32>
    %320 = math.exp %319 : vector<16x384xf32>
    %cst_87 = arith.constant 1.000000e+00 : f32
    %321 = vector.broadcast %cst_87 : f32 to vector<16x384xf32>
    %322 = arith.addf %321, %320 : vector<16x384xf32>
    %323 = arith.divf %321, %322 : vector<16x384xf32>
    %324 = vector.extract_strided_slice %323 {offsets = [0, 0], sizes = [16, 128], strides = [1, 1]} : vector<16x384xf32> to vector<16x128xf32>
    %325 = vector.extract_strided_slice %323 {offsets = [0, 128], sizes = [16, 128], strides = [1, 1]} : vector<16x384xf32> to vector<16x128xf32>
    %326 = vector.extract_strided_slice %323 {offsets = [0, 256], sizes = [16, 128], strides = [1, 1]} : vector<16x384xf32> to vector<16x128xf32>
    %327 = vector.extract_strided_slice %317 {offsets = [0, 384], sizes = [16, 128], strides = [1, 1]} : vector<16x512xf32> to vector<16x128xf32>
    %328 = math.tanh %327 : vector<16x128xf32>
    %329 = arith.mulf %325, %308 : vector<16x128xf32>
    %330 = arith.mulf %324, %328 : vector<16x128xf32>
    %331 = arith.addf %329, %330 : vector<16x128xf32>
    %332 = math.tanh %331 : vector<16x128xf32>
    %333 = arith.mulf %326, %332 : vector<16x128xf32>
    %334 = arith.truncf %333 : vector<16x128xf32> to vector<16x128xbf16>
    %c5_i32_88 = arith.constant 5 : i32
    %c16_i32_89 = arith.constant 16 : i32
    %335 = arith.muli %c5_i32_88, %c16_i32_89 : i32
    %336 = tpu.assume_multiple %335, 16 : i32
    %337 = arith.index_cast %336 : i32 to index
    %c0_90 = arith.constant 0 : index
    %338 = vector.load %arg10[%337, %c0_90] : memref<128x512xf32, #tpu.memory_space<vmem>>, vector<16x512xf32>
    %cst_91 = arith.constant dense<0.000000e+00> : vector<16x512xf32>
    %339 = tpu.matmul %334, %217, %cst_91 {dimension_numbers = #tpu.dot_dimension_numbers<[1], [0], [0], [1], [0, 0, 1, 1], [], []>} : vector<16x128xbf16>, vector<128x512xbf16>, vector<16x512xf32> -> vector<16x512xf32>
    %340 = arith.addf %338, %339 : vector<16x512xf32>
    %341 = vector.extract_strided_slice %340 {offsets = [0, 0], sizes = [16, 384], strides = [1, 1]} : vector<16x512xf32> to vector<16x384xf32>
    %342 = arith.negf %341 : vector<16x384xf32>
    %343 = math.exp %342 : vector<16x384xf32>
    %cst_92 = arith.constant 1.000000e+00 : f32
    %344 = vector.broadcast %cst_92 : f32 to vector<16x384xf32>
    %345 = arith.addf %344, %343 : vector<16x384xf32>
    %346 = arith.divf %344, %345 : vector<16x384xf32>
    %347 = vector.extract_strided_slice %346 {offsets = [0, 0], sizes = [16, 128], strides = [1, 1]} : vector<16x384xf32> to vector<16x128xf32>
    %348 = vector.extract_strided_slice %346 {offsets = [0, 128], sizes = [16, 128], strides = [1, 1]} : vector<16x384xf32> to vector<16x128xf32>
    %349 = vector.extract_strided_slice %346 {offsets = [0, 256], sizes = [16, 128], strides = [1, 1]} : vector<16x384xf32> to vector<16x128xf32>
    %350 = vector.extract_strided_slice %340 {offsets = [0, 384], sizes = [16, 128], strides = [1, 1]} : vector<16x512xf32> to vector<16x128xf32>
    %351 = math.tanh %350 : vector<16x128xf32>
    %352 = arith.mulf %348, %331 : vector<16x128xf32>
    %353 = arith.mulf %347, %351 : vector<16x128xf32>
    %354 = arith.addf %352, %353 : vector<16x128xf32>
    %355 = math.tanh %354 : vector<16x128xf32>
    %356 = arith.mulf %349, %355 : vector<16x128xf32>
    %357 = arith.truncf %356 : vector<16x128xf32> to vector<16x128xbf16>
    %c6_i32_93 = arith.constant 6 : i32
    %c16_i32_94 = arith.constant 16 : i32
    %358 = arith.muli %c6_i32_93, %c16_i32_94 : i32
    %359 = tpu.assume_multiple %358, 16 : i32
    %360 = arith.index_cast %359 : i32 to index
    %c0_95 = arith.constant 0 : index
    %361 = vector.load %arg10[%360, %c0_95] : memref<128x512xf32, #tpu.memory_space<vmem>>, vector<16x512xf32>
    %cst_96 = arith.constant dense<0.000000e+00> : vector<16x512xf32>
    %362 = tpu.matmul %357, %217, %cst_96 {dimension_numbers = #tpu.dot_dimension_numbers<[1], [0], [0], [1], [0, 0, 1, 1], [], []>} : vector<16x128xbf16>, vector<128x512xbf16>, vector<16x512xf32> -> vector<16x512xf32>
    %363 = arith.addf %361, %362 : vector<16x512xf32>
    %364 = vector.extract_strided_slice %363 {offsets = [0, 0], sizes = [16, 384], strides = [1, 1]} : vector<16x512xf32> to vector<16x384xf32>
    %365 = arith.negf %364 : vector<16x384xf32>
    %366 = math.exp %365 : vector<16x384xf32>
    %cst_97 = arith.constant 1.000000e+00 : f32
    %367 = vector.broadcast %cst_97 : f32 to vector<16x384xf32>
    %368 = arith.addf %367, %366 : vector<16x384xf32>
    %369 = arith.divf %367, %368 : vector<16x384xf32>
    %370 = vector.extract_strided_slice %369 {offsets = [0, 0], sizes = [16, 128], strides = [1, 1]} : vector<16x384xf32> to vector<16x128xf32>
    %371 = vector.extract_strided_slice %369 {offsets = [0, 128], sizes = [16, 128], strides = [1, 1]} : vector<16x384xf32> to vector<16x128xf32>
    %372 = vector.extract_strided_slice %369 {offsets = [0, 256], sizes = [16, 128], strides = [1, 1]} : vector<16x384xf32> to vector<16x128xf32>
    %373 = vector.extract_strided_slice %363 {offsets = [0, 384], sizes = [16, 128], strides = [1, 1]} : vector<16x512xf32> to vector<16x128xf32>
    %374 = math.tanh %373 : vector<16x128xf32>
    %375 = arith.mulf %371, %354 : vector<16x128xf32>
    %376 = arith.mulf %370, %374 : vector<16x128xf32>
    %377 = arith.addf %375, %376 : vector<16x128xf32>
    %378 = math.tanh %377 : vector<16x128xf32>
    %379 = arith.mulf %372, %378 : vector<16x128xf32>
    %380 = arith.truncf %379 : vector<16x128xf32> to vector<16x128xbf16>
    %c7_i32_98 = arith.constant 7 : i32
    %c16_i32_99 = arith.constant 16 : i32
    %381 = arith.muli %c7_i32_98, %c16_i32_99 : i32
    %382 = tpu.assume_multiple %381, 16 : i32
    %383 = arith.index_cast %382 : i32 to index
    %c0_100 = arith.constant 0 : index
    %384 = vector.load %arg10[%383, %c0_100] : memref<128x512xf32, #tpu.memory_space<vmem>>, vector<16x512xf32>
    %cst_101 = arith.constant dense<0.000000e+00> : vector<16x512xf32>
    %385 = tpu.matmul %380, %217, %cst_101 {dimension_numbers = #tpu.dot_dimension_numbers<[1], [0], [0], [1], [0, 0, 1, 1], [], []>} : vector<16x128xbf16>, vector<128x512xbf16>, vector<16x512xf32> -> vector<16x512xf32>
    %386 = arith.addf %384, %385 : vector<16x512xf32>
    %387 = vector.extract_strided_slice %386 {offsets = [0, 0], sizes = [16, 384], strides = [1, 1]} : vector<16x512xf32> to vector<16x384xf32>
    %388 = arith.negf %387 : vector<16x384xf32>
    %389 = math.exp %388 : vector<16x384xf32>
    %cst_102 = arith.constant 1.000000e+00 : f32
    %390 = vector.broadcast %cst_102 : f32 to vector<16x384xf32>
    %391 = arith.addf %390, %389 : vector<16x384xf32>
    %392 = arith.divf %390, %391 : vector<16x384xf32>
    %393 = vector.extract_strided_slice %392 {offsets = [0, 0], sizes = [16, 128], strides = [1, 1]} : vector<16x384xf32> to vector<16x128xf32>
    %394 = vector.extract_strided_slice %392 {offsets = [0, 128], sizes = [16, 128], strides = [1, 1]} : vector<16x384xf32> to vector<16x128xf32>
    %395 = vector.extract_strided_slice %392 {offsets = [0, 256], sizes = [16, 128], strides = [1, 1]} : vector<16x384xf32> to vector<16x128xf32>
    %396 = vector.extract_strided_slice %386 {offsets = [0, 384], sizes = [16, 128], strides = [1, 1]} : vector<16x512xf32> to vector<16x128xf32>
    %397 = math.tanh %396 : vector<16x128xf32>
    %398 = arith.mulf %394, %377 : vector<16x128xf32>
    %399 = arith.mulf %393, %397 : vector<16x128xf32>
    %400 = arith.addf %398, %399 : vector<16x128xf32>
    %401 = math.tanh %400 : vector<16x128xf32>
    %402 = arith.mulf %395, %401 : vector<16x128xf32>
    %403 = arith.truncf %402 : vector<16x128xf32> to vector<16x128xbf16>
    %c8_i32_103 = arith.constant 8 : i32
    %c0_104 = arith.constant 0 : index
    %c0_105 = arith.constant 0 : index
    %404 = vector.load %arg7[%c0_104, %c0_105] : memref<128x128xbf16, #tpu.memory_space<vmem>>, vector<128x128xbf16>
    %cst_106 = arith.constant dense<0.000000e+00> : vector<16x128xf32>
    %405 = tpu.matmul %403, %404, %cst_106 {dimension_numbers = #tpu.dot_dimension_numbers<[1], [0], [0], [1], [0, 0, 1, 1], [], []>} : vector<16x128xbf16>, vector<128x128xbf16>, vector<16x128xf32> -> vector<16x128xf32>
    %c0_107 = arith.constant 0 : index
    %c0_108 = arith.constant 0 : index
    %406 = vector.load %arg8[%c0_107, %c0_108] : memref<1x128xf32, #tpu.memory_space<vmem>>, vector<1x128xf32>
    %407 = vector.broadcast %406 : vector<1x128xf32> to vector<16x128xf32>
    %408 = arith.addf %405, %407 : vector<16x128xf32>
    %c0_109 = arith.constant 0 : index
    %c0_110 = arith.constant 0 : index
    %409 = vector.load %arg9[%c0_109, %c0_110] : memref<16x128xf32, #tpu.memory_space<vmem>>, vector<16x128xf32>
    tpu.vector_store %arg9[%c0_109, %c0_110], %408 {strides = array<i32>} : memref<16x128xf32, #tpu.memory_space<vmem>>, vector<16x128xf32>,
    return
  }
}

</mosaic_0001>

<llo_original>
// kernel: base_lstm_forward.1
$region0: #{base_lstm_forward.1}
  #allocation0 [shape = 'u32[]', space=smem, size = 0x4, offset = 0x4, fixed_abs, tag = 'smem constant byte address 0x4 - core index']
  #allocation1 [shape = 'u32[144,128]{1,0:T(1,128)}', space=vmem, size = 0x12000, scoped, tag = 'internal scratch']
  #allocation2 [shape = 'f32[128,512]{1,0:T(8,128)}', space=vmem, size = 0x40000, scoped, tag = 'scratch operand']
  #allocation3 [shape = 'bf16[128,128]{1,0:T(16,128)(2,1)}', space=vmem, size = 0x8000, scoped, tag = 'scratch operand']
  %s0 = inlined_call_operand.hbm [shape: bf16[128,128], index: 0, kind: input, shape index: {}]
  %s1 = inlined_call_operand.hbm [shape: bf16[128,512], index: 1, kind: input, shape index: {}]
  %s2 = inlined_call_operand.hbm [shape: bf16[128,512], index: 2, kind: input, shape index: {}]
  %s3 = inlined_call_operand.hbm [shape: f32[1,512], index: 3, kind: input, shape index: {}]
  %s4 = inlined_call_operand.hbm [shape: bf16[128,512], index: 4, kind: input, shape index: {}]
  %s5 = inlined_call_operand.hbm [shape: bf16[128,512], index: 5, kind: input, shape index: {}]
  %s6 = inlined_call_operand.hbm [shape: f32[1,512], index: 6, kind: input, shape index: {}]
  %s7 = inlined_call_operand.hbm [shape: bf16[128,128], index: 7, kind: input, shape index: {}]
  %s8 = inlined_call_operand.hbm [shape: f32[1,128], index: 8, kind: input, shape index: {}]
  %s9 = inlined_call_operand.hbm [shape: f32[16,128], index: 9, kind: output, shape index: {}]
  %s10 = sld [smem:[#allocation0]]
  $region82: #{base_lstm_forward.1} parent=0
    _
  %s12 = ssub.s32 1, %s10
  %s13 = scalar_select 0, %s12, %s10
  $region1: #{base_lstm_forward.1} parent=0
    #allocation4 [shape = 'u8[32768]{0}', space=vmem, size = 0x8000, scoped, tag = 'input window, operand 0, single buffered']
    #allocation5 [shape = 's32[1]{0}', space=sflag, size = 0x4, scoped, tag = 'scoped memory for base_lstm_forward.1']
    #allocation6 [shape = 's32[1]{0}', space=sflag, size = 0x4, scoped, tag = 'scoped memory for base_lstm_forward.1']
    #allocation7 [shape = 'u8[131072]{0}', space=vmem, size = 0x20000, scoped, tag = 'input window, operand 1, single buffered']
    #allocation8 [shape = 's32[1]{0}', space=sflag, size = 0x4, scoped, tag = 'scoped memory for base_lstm_forward.1']
    #allocation9 [shape = 'u8[131072]{0}', space=vmem, size = 0x20000, scoped, tag = 'input window, operand 2, single buffered']
    #allocation10 [shape = 'u8[2048]{0}', space=vmem, size = 0x800, scoped, tag = 'input window, operand 3, single buffered']
    #allocation11 [shape = 's32[1]{0}', space=sflag, size = 0x4, scoped, tag = 'scoped memory for base_lstm_forward.1']
    #allocation12 [shape = 'u8[131072]{0}', space=vmem, size = 0x20000, scoped, tag = 'input window, operand 4, single buffered']
    #allocation13 [shape = 'u8[131072]{0}', space=vmem, size = 0x20000, scoped, tag = 'input window, operand 5, single buffered']
    #allocation14 [shape = 's32[1]{0}', space=sflag, size = 0x4, scoped, tag = 'scoped memory for base_lstm_forward.1']
    #allocation15 [shape = 'u8[2048]{0}', space=vmem, size = 0x800, scoped, tag = 'input window, operand 6, single buffered']
    #allocation16 [shape = 'u8[32768]{0}', space=vmem, size = 0x8000, scoped, tag = 'input window, operand 7, single buffered']
    #allocation17 [shape = 's32[1]{0}', space=sflag, size = 0x4, scoped, tag = 'scoped memory for base_lstm_forward.1']
    #allocation18 [shape = 'u8[512]{0}', space=vmem, size = 0x400, scoped, tag = 'input window, operand 8, single buffered']
    #allocation19 [shape = 'u8[8192]{0}', space=vmem, size = 0x2000, scoped, tag = 'output window, operand 0, single buffered']
    %14 = vsyncpa [#allocation5], 0
    %15 = vsyncpa [#allocation8], 0
    %16 = vsyncpa [#allocation11], 0
    %17 = vsyncpa [#allocation14], 0
    %18 = vsyncpa [#allocation17], 0
    %19 = vsyncpa [#allocation6], 0
    // Predicated region
    $region2: #{base_lstm_forward.1} parent=1 // pred_check
      _
    $region3: #{base_lstm_forward.1} parent=1 // pred_check_branch
      %21 = sbr.rel (0) target = $region5
    $region4: #{base_lstm_forward.1} parent=1 // pred_region
      %s23 = ssub.s32 1024, 1024
      %24 = vsyncadd [#allocation5], %s23
      %s25 = sshll.u32 [#allocation4], 4
      %s26 = int_to_ptr.vmem [resolvable:$true] %s25
      %31 = dma.hbm_to_vmem [thread:$0]  %s0, 1024, %s26, [#allocation5], 64, 64, 4
    $region5: #{base_lstm_forward.1} parent=1 // pred_fallthru
      _
    // Predicated region
    $region6: #{base_lstm_forward.1} parent=1 // pred_check
      _
    $region7: #{base_lstm_forward.1} parent=1 // pred_check_branch
      %33 = sbr.rel (0) target = $region9
    $region8: #{base_lstm_forward.1} parent=1 // pred_region
      %s35 = ssub.s32 4096, 4096
      %36 = vsyncadd [#allocation8], %s35
      %s37 = sshll.u32 [#allocation7], 4
      %s38 = int_to_ptr.vmem [resolvable:$true] %s37
      %43 = dma.hbm_to_vmem [thread:$0]  %s1, 4096, %s38, [#allocation8], 256, 256, 16
    $region9: #{base_lstm_forward.1} parent=1 // pred_fallthru
      _
    // Predicated region
    $region10: #{base_lstm_forward.1} parent=1 // pred_check
      _
    $region11: #{base_lstm_forward.1} parent=1 // pred_check_branch
      %45 = sbr.rel (0) target = $region13
    $region12: #{base_lstm_forward.1} parent=1 // pred_region
      %s47 = ssub.s32 4096, 4096
      %48 = vsyncadd [#allocation8], %s47
      %s49 = sshll.u32 [#allocation9], 4
      %s50 = int_to_ptr.vmem [resolvable:$true] %s49
      %55 = dma.hbm_to_vmem [thread:$0]  %s2, 4096, %s50, [#allocation8], 256, 256, 16
    $region13: #{base_lstm_forward.1} parent=1 // pred_fallthru
      _
    // Predicated region
    $region14: #{base_lstm_forward.1} parent=1 // pred_check
      _
    $region15: #{base_lstm_forward.1} parent=1 // pred_check_branch
      %57 = sbr.rel (0) target = $region17
    $region16: #{base_lstm_forward.1} parent=1 // pred_region
      %s59 = ssub.s32 64, 64
      %60 = vsyncadd [#allocation11], %s59
      %s62 = sshll.u32 [#allocation10], 4
      %s63 = int_to_ptr.vmem [resolvable:$true] %s62
      %65 = dma.hbm_to_vmem [thread:$0]  %s3, 64, %s63, [#allocation11]
    $region17: #{base_lstm_forward.1} parent=1 // pred_fallthru
      _
    // Predicated region
    $region18: #{base_lstm_forward.1} parent=1 // pred_check
      _
    $region19: #{base_lstm_forward.1} parent=1 // pred_check_branch
      %67 = sbr.rel (0) target = $region21
    $region20: #{base_lstm_forward.1} parent=1 // pred_region
      %s69 = ssub.s32 4096, 4096
      %70 = vsyncadd [#allocation11], %s69
      %s71 = sshll.u32 [#allocation12], 4
      %s72 = int_to_ptr.vmem [resolvable:$true] %s71
      %77 = dma.hbm_to_vmem [thread:$0]  %s4, 4096, %s72, [#allocation11], 256, 256, 16
    $region21: #{base_lstm_forward.1} parent=1 // pred_fallthru
      _
    // Predicated region
    $region22: #{base_lstm_forward.1} parent=1 // pred_check
      _
    $region23: #{base_lstm_forward.1} parent=1 // pred_check_branch
      %79 = sbr.rel (0) target = $region25
    $region24: #{base_lstm_forward.1} parent=1 // pred_region
      %s81 = ssub.s32 4096, 4096
      %82 = vsyncadd [#allocation14], %s81
      %s83 = sshll.u32 [#allocation13], 4
      %s84 = int_to_ptr.vmem [resolvable:$true] %s83
      %89 = dma.hbm_to_vmem [thread:$0]  %s5, 4096, %s84, [#allocation14], 256, 256, 16
    $region25: #{base_lstm_forward.1} parent=1 // pred_fallthru
      _
    // Predicated region
    $region26: #{base_lstm_forward.1} parent=1 // pred_check
      _
    $region27: #{base_lstm_forward.1} parent=1 // pred_check_branch
      %91 = sbr.rel (0) target = $region29
    $region28: #{base_lstm_forward.1} parent=1 // pred_region
      %s93 = ssub.s32 64, 64
      %94 = vsyncadd [#allocation14], %s93
      %s96 = sshll.u32 [#allocation15], 4
      %s97 = int_to_ptr.vmem [resolvable:$true] %s96
      %99 = dma.hbm_to_vmem [thread:$0]  %s6, 64, %s97, [#allocation14]
    $region29: #{base_lstm_forward.1} parent=1 // pred_fallthru
      _
    // Predicated region
    $region30: #{base_lstm_forward.1} parent=1 // pred_check
      _
    $region31: #{base_lstm_forward.1} parent=1 // pred_check_branch
      %101 = sbr.rel (0) target = $region33
    $region32: #{base_lstm_forward.1} parent=1 // pred_region
      %s103 = ssub.s32 1024, 1024
      %104 = vsyncadd [#allocation17], %s103
      %s105 = sshll.u32 [#allocation16], 4
      %s106 = int_to_ptr.vmem [resolvable:$true] %s105
      %111 = dma.hbm_to_vmem [thread:$0]  %s7, 1024, %s106, [#allocation17], 64, 64, 4
    $region33: #{base_lstm_forward.1} parent=1 // pred_fallthru
      _
    // Predicated region
    $region34: #{base_lstm_forward.1} parent=1 // pred_check
      _
    $region35: #{base_lstm_forward.1} parent=1 // pred_check_branch
      %113 = sbr.rel (0) target = $region37
    $region36: #{base_lstm_forward.1} parent=1 // pred_region
      %s115 = ssub.s32 16, 16
      %116 = vsyncadd [#allocation17], %s115
      %s118 = sshll.u32 [#allocation18], 4
      %s119 = int_to_ptr.vmem [resolvable:$true] %s118
      %121 = dma.hbm_to_vmem [thread:$0]  %s8, 16, %s119, [#allocation17]
    $region37: #{base_lstm_forward.1} parent=1 // pred_fallthru
      _
    // Predicated region
    $region38: #{base_lstm_forward.1} parent=1 // pred_check
      _
    $region39: #{base_lstm_forward.1} parent=1 // pred_check_branch
      %123 = sbr.rel (0) target = $region41
    $region40: #{base_lstm_forward.1} parent=1 // pred_region
      %124 = dma.done [#allocation5], 1024
    $region41: #{base_lstm_forward.1} parent=1 // pred_fallthru
      _
    // Predicated region
    $region42: #{base_lstm_forward.1} parent=1 // pred_check
      _
    $region43: #{base_lstm_forward.1} parent=1 // pred_check_branch
      %126 = sbr.rel (0) target = $region45
    $region44: #{base_lstm_forward.1} parent=1 // pred_region
      %127 = dma.done [#allocation8], 4096
    $region45: #{base_lstm_forward.1} parent=1 // pred_fallthru
      _
    // Predicated region
    $region46: #{base_lstm_forward.1} parent=1 // pred_check
      _
    $region47: #{base_lstm_forward.1} parent=1 // pred_check_branch
      %129 = sbr.rel (0) target = $region49
    $region48: #{base_lstm_forward.1} parent=1 // pred_region
      %130 = dma.done [#allocation8], 4096
    $region49: #{base_lstm_forward.1} parent=1 // pred_fallthru
      _
    // Predicated region
    $region50: #{base_lstm_forward.1} parent=1 // pred_check
      _
    $region51: #{base_lstm_forward.1} parent=1 // pred_check_branch
      %132 = sbr.rel (0) target = $region53
    $region52: #{base_lstm_forward.1} parent=1 // pred_region
      %133 = dma.done [#allocation11], 64
    $region53: #{base_lstm_forward.1} parent=1 // pred_fallthru
      _
    // Predicated region
    $region54: #{base_lstm_forward.1} parent=1 // pred_check
      _
    $region55: #{base_lstm_forward.1} parent=1 // pred_check_branch
      %135 = sbr.rel (0) target = $region57
    $region56: #{base_lstm_forward.1} parent=1 // pred_region
      %136 = dma.done [#allocation11], 4096
    $region57: #{base_lstm_forward.1} parent=1 // pred_fallthru
      _
    // Predicated region
    $region58: #{base_lstm_forward.1} parent=1 // pred_check
      _
    $region59: #{base_lstm_forward.1} parent=1 // pred_check_branch
      %138 = sbr.rel (0) target = $region61
    $region60: #{base_lstm_forward.1} parent=1 // pred_region
      %139 = dma.done [#allocation14], 4096
    $region61: #{base_lstm_forward.1} parent=1 // pred_fallthru
      _
    // Predicated region
    $region62: #{base_lstm_forward.1} parent=1 // pred_check
      _
    $region63: #{base_lstm_forward.1} parent=1 // pred_check_branch
      %141 = sbr.rel (0) target = $region65
    $region64: #{base_lstm_forward.1} parent=1 // pred_region
      %142 = dma.done [#allocation14], 64
    $region65: #{base_lstm_forward.1} parent=1 // pred_fallthru
      _
    // Predicated region
    $region66: #{base_lstm_forward.1} parent=1 // pred_check
      _
    $region67: #{base_lstm_forward.1} parent=1 // pred_check_branch
      %144 = sbr.rel (0) target = $region69
    $region68: #{base_lstm_forward.1} parent=1 // pred_region
      %145 = dma.done [#allocation17], 1024
    $region69: #{base_lstm_forward.1} parent=1 // pred_fallthru
      _
    // Predicated region
    $region70: #{base_lstm_forward.1} parent=1 // pred_check
      _
    $region71: #{base_lstm_forward.1} parent=1 // pred_check_branch
      %147 = sbr.rel (0) target = $region73
    $region72: #{base_lstm_forward.1} parent=1 // pred_region
      %148 = dma.done [#allocation17], 16
    $region73: #{base_lstm_forward.1} parent=1 // pred_fallthru
      _
    %v150 = vld [vmem:[#allocation4] sm:$0xf]
    %v151 = vld [vmem:[#allocation4 + $0x4] sm:$0xf]
    %v152 = vld [vmem:[#allocation4 + $0x8] sm:$0xf]
    %v153 = vld [vmem:[#allocation4 + $0xc] sm:$0xf]
    %v154 = vld [vmem:[#allocation4 + $0x10] sm:$0xf]
    %v155 = vld [vmem:[#allocation4 + $0x14] sm:$0xf]
    %v156 = vld [vmem:[#allocation4 + $0x18] sm:$0xf]
    %v157 = vld [vmem:[#allocation4 + $0x1c] sm:$0xf]
    %v158 = vld [vmem:[#allocation4 + $0x20] sm:$0xf]
    %v159 = vld [vmem:[#allocation4 + $0x24] sm:$0xf]
    %v160 = vld [vmem:[#allocation4 + $0x28] sm:$0xf]
    %v161 = vld [vmem:[#allocation4 + $0x2c] sm:$0xf]
    %v162 = vld [vmem:[#allocation4 + $0x30] sm:$0xf]
    %v163 = vld [vmem:[#allocation4 + $0x34] sm:$0xf]
    %v164 = vld [vmem:[#allocation4 + $0x38] sm:$0xf]
    %v165 = vld [vmem:[#allocation4 + $0x3c] sm:$0xf]
    %v166 = vld [vmem:[#allocation7] sm:$0xff]
    %v167 = vld [vmem:[#allocation7 + $0x8] sm:$0xff]
    %v168 = vld [vmem:[#allocation7 + $0x10] sm:$0xff]
    %v169 = vld [vmem:[#allocation7 + $0x18] sm:$0xff]
    %v170 = vld [vmem:[#allocation7 + $0x20] sm:$0xff]
    %v171 = vld [vmem:[#allocation7 + $0x28] sm:$0xff]
    %v172 = vld [vmem:[#allocation7 + $0x30] sm:$0xff]
    %v173 = vld [vmem:[#allocation7 + $0x38] sm:$0xff]
    %v174 = vld [vmem:[#allocation7 + $0x40] sm:$0xff]
    %v175 = vld [vmem:[#allocation7 + $0x48] sm:$0xff]
    %v176 = vld [vmem:[#allocation7 + $0x50] sm:$0xff]
    %v177 = vld [vmem:[#allocation7 + $0x58] sm:$0xff]
    %v178 = vld [vmem:[#allocation7 + $0x60] sm:$0xff]
    %v179 = vld [vmem:[#allocation7 + $0x68] sm:$0xff]
    %v180 = vld [vmem:[#allocation7 + $0x70] sm:$0xff]
    %v181 = vld [vmem:[#allocation7 + $0x78] sm:$0xff]
    %v182 = vld [vmem:[#allocation7 + $0x80] sm:$0xff]
    %v183 = vld [vmem:[#allocation7 + $0x88] sm:$0xff]
    %v184 = vld [vmem:[#allocation7 + $0x90] sm:$0xff]
    %v185 = vld [vmem:[#allocation7 + $0x98] sm:$0xff]
    %v186 = vld [vmem:[#allocation7 + $0xa0] sm:$0xff]
    %v187 = vld [vmem:[#allocation7 + $0xa8] sm:$0xff]
    %v188 = vld [vmem:[#allocation7 + $0xb0] sm:$0xff]
    %v189 = vld [vmem:[#allocation7 + $0xb8] sm:$0xff]
    %v190 = vld [vmem:[#allocation7 + $0xc0] sm:$0xff]
    %v191 = vld [vmem:[#allocation7 + $0xc8] sm:$0xff]
    %v192 = vld [vmem:[#allocation7 + $0xd0] sm:$0xff]
    %v193 = vld [vmem:[#allocation7 + $0xd8] sm:$0xff]
    %v194 = vld [vmem:[#allocation7 + $0xe0] sm:$0xff]
    %v195 = vld [vmem:[#allocation7 + $0xe8] sm:$0xff]
    %v196 = vld [vmem:[#allocation7 + $0xf0] sm:$0xff]
    %v197 = vld [vmem:[#allocation7 + $0xf8] sm:$0xff]
    %v198 = vld [vmem:[#allocation10] sm:$0xf]
    %v200 = vlaneseq
    %v201 = vshrl.u32 %v200, 7
    %v202 = vsub.s32 0, %v201
    %v203 = vrot.slane %v198, %v202
    %v204 = vlaneseq
    %v205 = vshrl.u32 %v204, 7
    %v206 = vsub.s32 1, %v205
    %v207 = vrot.slane %v198, %v206
    %v208 = vlaneseq
    %v209 = vshrl.u32 %v208, 7
    %v210 = vsub.s32 2, %v209
    %v211 = vrot.slane %v198, %v210
    %v212 = vlaneseq
    %v213 = vshrl.u32 %v212, 7
    %v214 = vsub.s32 3, %v213
    %v215 = vrot.slane %v198, %v214
    %v236 = vunpack.c.l.b16 %v150
    %v237 = vunpack.c.l.b16 %v151
    %v238 = vunpack.c.l.b16 %v152
    %v239 = vunpack.c.l.b16 %v153
    %v240 = vunpack.c.l.b16 %v154
    %v241 = vunpack.c.l.b16 %v155
    %v242 = vunpack.c.l.b16 %v156
    %v243 = vunpack.c.l.b16 %v157
    %v244 = vunpack.c.l.b16 %v158
    %v245 = vunpack.c.l.b16 %v159
    %v246 = vunpack.c.l.b16 %v160
    %v247 = vunpack.c.l.b16 %v161
    %v248 = vunpack.c.l.b16 %v162
    %v249 = vunpack.c.l.b16 %v163
    %v250 = vunpack.c.l.b16 %v164
    %v251 = vunpack.c.l.b16 %v165
    %v252 = vpack.c.b16 %v237, %v236
    %v253 = vpack.c.b16 %v239, %v238
    %v254 = vpack.c.b16 %v241, %v240
    %v255 = vpack.c.b16 %v243, %v242
    %v256 = vpack.c.b16 %v245, %v244
    %v257 = vpack.c.b16 %v247, %v246
    %v258 = vpack.c.b16 %v249, %v248
    %v259 = vpack.c.b16 %v251, %v250
    %v300 = vunpack.c.l.b16 %v166
    %v301 = vunpack.c.h.b16 %v166
    %v302 = vunpack.c.l.b16 %v167
    %v303 = vunpack.c.h.b16 %v167
    %v304 = vunpack.c.l.b16 %v168
    %v305 = vunpack.c.h.b16 %v168
    %v306 = vunpack.c.l.b16 %v169
    %v307 = vunpack.c.h.b16 %v169
    %v308 = vunpack.c.l.b16 %v170
    %v309 = vunpack.c.h.b16 %v170
    %v310 = vunpack.c.l.b16 %v171
    %v311 = vunpack.c.h.b16 %v171
    %v312 = vunpack.c.l.b16 %v172
    %v313 = vunpack.c.h.b16 %v172
    %v314 = vunpack.c.l.b16 %v173
    %v315 = vunpack.c.h.b16 %v173
    %v316 = vunpack.c.l.b16 %v174
    %v317 = vunpack.c.h.b16 %v174
    %v318 = vunpack.c.l.b16 %v175
    %v319 = vunpack.c.h.b16 %v175
    %v320 = vunpack.c.l.b16 %v176
    %v321 = vunpack.c.h.b16 %v176
    %v322 = vunpack.c.l.b16 %v177
    %v323 = vunpack.c.h.b16 %v177
    %v324 = vunpack.c.l.b16 %v178
    %v325 = vunpack.c.h.b16 %v178
    %v326 = vunpack.c.l.b16 %v179
    %v327 = vunpack.c.h.b16 %v179
    %v328 = vunpack.c.l.b16 %v180
    %v329 = vunpack.c.h.b16 %v180
    %v330 = vunpack.c.l.b16 %v181
    %v331 = vunpack.c.h.b16 %v181
    %v332 = vunpack.c.l.b16 %v182
    %v333 = vunpack.c.h.b16 %v182
    %v334 = vunpack.c.l.b16 %v183
    %v335 = vunpack.c.h.b16 %v183
    %v336 = vunpack.c.l.b16 %v184
    %v337 = vunpack.c.h.b16 %v184
    %v338 = vunpack.c.l.b16 %v185
    %v339 = vunpack.c.h.b16 %v185
    %v340 = vunpack.c.l.b16 %v186
    %v341 = vunpack.c.h.b16 %v186
    %v342 = vunpack.c.l.b16 %v187
    %v343 = vunpack.c.h.b16 %v187
    %v344 = vunpack.c.l.b16 %v188
    %v345 = vunpack.c.h.b16 %v188
    %v346 = vunpack.c.l.b16 %v189
    %v347 = vunpack.c.h.b16 %v189
    %v348 = vunpack.c.l.b16 %v190
    %v349 = vunpack.c.h.b16 %v190
    %v350 = vunpack.c.l.b16 %v191
    %v351 = vunpack.c.h.b16 %v191
    %v352 = vunpack.c.l.b16 %v192
    %v353 = vunpack.c.h.b16 %v192
    %v354 = vunpack.c.l.b16 %v193
    %v355 = vunpack.c.h.b16 %v193
    %v356 = vunpack.c.l.b16 %v194
    %v357 = vunpack.c.h.b16 %v194
    %v358 = vunpack.c.l.b16 %v195
    %v359 = vunpack.c.h.b16 %v195
    %v360 = vunpack.c.l.b16 %v196
    %v361 = vunpack.c.h.b16 %v196
    %v362 = vunpack.c.l.b16 %v197
    %v363 = vunpack.c.h.b16 %v197
    %v364 = vpack.c.b16 %v304, %v300
    %v365 = vpack.c.b16 %v305, %v301
    %v366 = vpack.c.b16 %v306, %v302
    %v367 = vpack.c.b16 %v307, %v303
    %v368 = vpack.c.b16 %v312, %v308
    %v369 = vpack.c.b16 %v313, %v309
    %v370 = vpack.c.b16 %v314, %v310
    %v371 = vpack.c.b16 %v315, %v311
    %v372 = vpack.c.b16 %v320, %v316
    %v373 = vpack.c.b16 %v321, %v317
    %v374 = vpack.c.b16 %v322, %v318
    %v375 = vpack.c.b16 %v323, %v319
    %v376 = vpack.c.b16 %v328, %v324
    %v377 = vpack.c.b16 %v329, %v325
    %v378 = vpack.c.b16 %v330, %v326
    %v379 = vpack.c.b16 %v331, %v327
    %v380 = vpack.c.b16 %v336, %v332
    %v381 = vpack.c.b16 %v337, %v333
    %v382 = vpack.c.b16 %v338, %v334
    %v383 = vpack.c.b16 %v339, %v335
    %v384 = vpack.c.b16 %v344, %v340
    %v385 = vpack.c.b16 %v345, %v341
    %v386 = vpack.c.b16 %v346, %v342
    %v387 = vpack.c.b16 %v347, %v343
    %v388 = vpack.c.b16 %v352, %v348
    %v389 = vpack.c.b16 %v353, %v349
    %v390 = vpack.c.b16 %v354, %v350
    %v391 = vpack.c.b16 %v355, %v351
    %v392 = vpack.c.b16 %v360, %v356
    %v393 = vpack.c.b16 %v361, %v357
    %v394 = vpack.c.b16 %v362, %v358
    %v395 = vpack.c.b16 %v363, %v359
    %428 = vmatprep.subr.bf16.mxu0 %v365
    %429 = vmatpush1.bf16.msra.mxu0 %v364
    %430 = vmatprep.subr.bf16.mxu0 %v369
    %431 = vmatpush1.bf16.msra.mxu0 %v368
    %432 = vmatprep.subr.bf16.mxu0 %v373
    %433 = vmatpush1.bf16.msra.mxu0 %v372
    %434 = vmatprep.subr.bf16.mxu0 %v377
    %435 = vmatpush1.bf16.msra.mxu0 %v376
    %436 = vmatprep.subr.bf16.mxu0 %v381
    %437 = vmatpush1.bf16.msra.mxu0 %v380
    %438 = vmatprep.subr.bf16.mxu0 %v385
    %439 = vmatpush1.bf16.msra.mxu0 %v384
    %440 = vmatprep.subr.bf16.mxu0 %v389
    %441 = vmatpush1.bf16.msra.mxu0 %v388
    %442 = vmatprep.subr.bf16.mxu0 %v393
    %443 = vmatpush1.bf16.msra.mxu0 %v392
    %444 = vmatprep.subr.bf16.mxu0 0
    %445 = vmatpush1.bf16.msra.mxu0 0
    %446 = vmatprep.subr.bf16.mxu0 0
    %447 = vmatpush1.bf16.msra.mxu0 0
    %448 = vmatprep.subr.bf16.mxu0 0
    %449 = vmatpush1.bf16.msra.mxu0 0
    %450 = vmatprep.subr.bf16.mxu0 0
    %451 = vmatpush1.bf16.msra.mxu0 0
    %452 = vmatprep.subr.bf16.mxu0 0
    %453 = vmatpush1.bf16.msra.mxu0 0
    %454 = vmatprep.subr.bf16.mxu0 0
    %455 = vmatpush1.bf16.msra.mxu0 0
    %456 = vmatprep.subr.bf16.mxu0 0
    %457 = vmatpush1.bf16.msra.mxu0 0
    %458 = vmatprep.subr.bf16.mxu0 0
    %459 = vmatpush1.bf16.msra.mxu0 0
    %460 = vmatprep.mubr.bf16.mxu0 0
    %461 = vmatmul.mubr.bf16.gmra.mrb[0].mxu0 %v252
    %v462 = vpop.f32.mrb[0].mxu0
    %v463 = vadd.f32 %v203, %v462
    %v464 = vpop.f32.mrb[0].mxu0
    %v465 = vadd.f32 %v207, %v464
    %v466 = vpop.f32.mrb[0].mxu0
    %v467 = vadd.f32 %v203, %v466
    %v468 = vpop.f32.mrb[0].mxu0
    %v469 = vadd.f32 %v207, %v468
    %470 = vmatprep.mubr.bf16.mxu0 0
    %471 = vmatmul.mubr.bf16.gmra.mrb[0].mxu0 %v253
    %v472 = vpop.f32.mrb[0].mxu0
    %v473 = vadd.f32 %v203, %v472
    %v474 = vpop.f32.mrb[0].mxu0
    %v475 = vadd.f32 %v207, %v474
    %v476 = vpop.f32.mrb[0].mxu0
    %v477 = vadd.f32 %v203, %v476
    %v478 = vpop.f32.mrb[0].mxu0
    %v479 = vadd.f32 %v207, %v478
    %480 = vmatprep.mubr.bf16.mxu0 0
    %481 = vmatmul.mubr.bf16.gmra.mrb[0].mxu0 %v254
    %v482 = vpop.f32.mrb[0].mxu0
    %v483 = vadd.f32 %v203, %v482
    %v484 = vpop.f32.mrb[0].mxu0
    %v485 = vadd.f32 %v207, %v484
    %v486 = vpop.f32.mrb[0].mxu0
    %v487 = vadd.f32 %v203, %v486
    %v488 = vpop.f32.mrb[0].mxu0
    %v489 = vadd.f32 %v207, %v488
    %490 = vmatprep.mubr.bf16.mxu0 0
    %491 = vmatmul.mubr.bf16.gmra.mrb[0].mxu0 %v255
    %v492 = vpop.f32.mrb[0].mxu0
    %v493 = vadd.f32 %v203, %v492
    %v494 = vpop.f32.mrb[0].mxu0
    %v495 = vadd.f32 %v207, %v494
    %v496 = vpop.f32.mrb[0].mxu0
    %v497 = vadd.f32 %v203, %v496
    %v498 = vpop.f32.mrb[0].mxu0
    %v499 = vadd.f32 %v207, %v498
    %500 = vmatprep.mubr.bf16.mxu0 0
    %501 = vmatmul.mubr.bf16.gmra.mrb[0].mxu0 %v256
    %v502 = vpop.f32.mrb[0].mxu0
    %v503 = vadd.f32 %v203, %v502
    %v504 = vpop.f32.mrb[0].mxu0
    %v505 = vadd.f32 %v207, %v504
    %v506 = vpop.f32.mrb[0].mxu0
    %v507 = vadd.f32 %v203, %v506
    %v508 = vpop.f32.mrb[0].mxu0
    %v509 = vadd.f32 %v207, %v508
    %510 = vmatprep.mubr.bf16.mxu0 0
    %511 = vmatmul.mubr.bf16.gmra.mrb[0].mxu0 %v257
    %v512 = vpop.f32.mrb[0].mxu0
    %v513 = vadd.f32 %v203, %v512
    %v514 = vpop.f32.mrb[0].mxu0
    %v515 = vadd.f32 %v207, %v514
    %v516 = vpop.f32.mrb[0].mxu0
    %v517 = vadd.f32 %v203, %v516
    %v518 = vpop.f32.mrb[0].mxu0
    %v519 = vadd.f32 %v207, %v518
    %520 = vmatprep.mubr.bf16.mxu0 0
    %521 = vmatmul.mubr.bf16.gmra.mrb[0].mxu0 %v258
    %v522 = vpop.f32.mrb[0].mxu0
    %v523 = vadd.f32 %v203, %v522
    %v524 = vpop.f32.mrb[0].mxu0
    %v525 = vadd.f32 %v207, %v524
    %v526 = vpop.f32.mrb[0].mxu0
    %v527 = vadd.f32 %v203, %v526
    %v528 = vpop.f32.mrb[0].mxu0
    %v529 = vadd.f32 %v207, %v528
    %530 = vmatprep.mubr.bf16.mxu0 0
    %531 = vmatmul.mubr.bf16.gmra.mrb[0].mxu0 %v259
    %v532 = vpop.f32.mrb[0].mxu0
    %v533 = vadd.f32 %v203, %v532
    %v534 = vpop.f32.mrb[0].mxu0
    %v535 = vadd.f32 %v207, %v534
    %v536 = vpop.f32.mrb[0].mxu0
    %v537 = vadd.f32 %v203, %v536
    %v538 = vpop.f32.mrb[0].mxu0
    %v539 = vadd.f32 %v207, %v538
    %540 = vdwg.mxu0
    %541 = vmatprep.subr.bf16.mxu0 %v367
    %542 = vmatpush1.bf16.msra.mxu0 %v366
    %543 = vmatprep.subr.bf16.mxu0 %v371
    %544 = vmatpush1.bf16.msra.mxu0 %v370
    %545 = vmatprep.subr.bf16.mxu0 %v375
    %546 = vmatpush1.bf16.msra.mxu0 %v374
    %547 = vmatprep.subr.bf16.mxu0 %v379
    %548 = vmatpush1.bf16.msra.mxu0 %v378
    %549 = vmatprep.subr.bf16.mxu0 %v383
    %550 = vmatpush1.bf16.msra.mxu0 %v382
    %551 = vmatprep.subr.bf16.mxu0 %v387
    %552 = vmatpush1.bf16.msra.mxu0 %v386
    %553 = vmatprep.subr.bf16.mxu0 %v391
    %554 = vmatpush1.bf16.msra.mxu0 %v390
    %555 = vmatprep.subr.bf16.mxu0 %v395
    %556 = vmatpush1.bf16.msra.mxu0 %v394
    %557 = vmatprep.subr.bf16.mxu0 0
    %558 = vmatpush1.bf16.msra.mxu0 0
    %559 = vmatprep.subr.bf16.mxu0 0
    %560 = vmatpush1.bf16.msra.mxu0 0
    %561 = vmatprep.subr.bf16.mxu0 0
    %562 = vmatpush1.bf16.msra.mxu0 0
    %563 = vmatprep.subr.bf16.mxu0 0
    %564 = vmatpush1.bf16.msra.mxu0 0
    %565 = vmatprep.subr.bf16.mxu0 0
    %566 = vmatpush1.bf16.msra.mxu0 0
    %567 = vmatprep.subr.bf16.mxu0 0
    %568 = vmatpush1.bf16.msra.mxu0 0
    %569 = vmatprep.subr.bf16.mxu0 0
    %570 = vmatpush1.bf16.msra.mxu0 0
    %571 = vmatprep.subr.bf16.mxu0 0
    %572 = vmatpush1.bf16.msra.mxu0 0
    %573 = vmatprep.mubr.bf16.mxu0 0
    %574 = vmatmul.mubr.bf16.gmra.mrb[0].mxu0 %v252
    %v575 = vpop.f32.mrb[0].mxu0
    %v576 = vadd.f32 %v211, %v575
    %v577 = vpop.f32.mrb[0].mxu0
    %v578 = vadd.f32 %v215, %v577
    %v579 = vpop.f32.mrb[0].mxu0
    %v580 = vadd.f32 %v211, %v579
    %v581 = vpop.f32.mrb[0].mxu0
    %v582 = vadd.f32 %v215, %v581
    %583 = vmatprep.mubr.bf16.mxu0 0
    %584 = vmatmul.mubr.bf16.gmra.mrb[0].mxu0 %v253
    %v585 = vpop.f32.mrb[0].mxu0
    %v586 = vadd.f32 %v211, %v585
    %v587 = vpop.f32.mrb[0].mxu0
    %v588 = vadd.f32 %v215, %v587
    %v589 = vpop.f32.mrb[0].mxu0
    %v590 = vadd.f32 %v211, %v589
    %v591 = vpop.f32.mrb[0].mxu0
    %v592 = vadd.f32 %v215, %v591
    %593 = vmatprep.mubr.bf16.mxu0 0
    %594 = vmatmul.mubr.bf16.gmra.mrb[0].mxu0 %v254
    %v595 = vpop.f32.mrb[0].mxu0
    %v596 = vadd.f32 %v211, %v595
    %v597 = vpop.f32.mrb[0].mxu0
    %v598 = vadd.f32 %v215, %v597
    %v599 = vpop.f32.mrb[0].mxu0
    %v600 = vadd.f32 %v211, %v599
    %v601 = vpop.f32.mrb[0].mxu0
    %v602 = vadd.f32 %v215, %v601
    %603 = vmatprep.mubr.bf16.mxu0 0
    %604 = vmatmul.mubr.bf16.gmra.mrb[0].mxu0 %v255
    %v605 = vpop.f32.mrb[0].mxu0
    %v606 = vadd.f32 %v211, %v605
    %v607 = vpop.f32.mrb[0].mxu0
    %v608 = vadd.f32 %v215, %v607
    %v609 = vpop.f32.mrb[0].mxu0
    %v610 = vadd.f32 %v211, %v609
    %v611 = vpop.f32.mrb[0].mxu0
    %v612 = vadd.f32 %v215, %v611
    %613 = vmatprep.mubr.bf16.mxu0 0
    %614 = vmatmul.mubr.bf16.gmra.mrb[0].mxu0 %v256
    %v615 = vpop.f32.mrb[0].mxu0
    %v616 = vadd.f32 %v211, %v615
    %v617 = vpop.f32.mrb[0].mxu0
    %v618 = vadd.f32 %v215, %v617
    %v619 = vpop.f32.mrb[0].mxu0
    %v620 = vadd.f32 %v211, %v619
    %v621 = vpop.f32.mrb[0].mxu0
    %v622 = vadd.f32 %v215, %v621
    %623 = vmatprep.mubr.bf16.mxu0 0
    %624 = vmatmul.mubr.bf16.gmra.mrb[0].mxu0 %v257
    %v625 = vpop.f32.mrb[0].mxu0
    %v626 = vadd.f32 %v211, %v625
    %v627 = vpop.f32.mrb[0].mxu0
    %v628 = vadd.f32 %v215, %v627
    %v629 = vpop.f32.mrb[0].mxu0
    %v630 = vadd.f32 %v211, %v629
    %v631 = vpop.f32.mrb[0].mxu0
    %v632 = vadd.f32 %v215, %v631
    %633 = vmatprep.mubr.bf16.mxu0 0
    %634 = vmatmul.mubr.bf16.gmra.mrb[0].mxu0 %v258
    %v635 = vpop.f32.mrb[0].mxu0
    %v636 = vadd.f32 %v211, %v635
    %v637 = vpop.f32.mrb[0].mxu0
    %v638 = vadd.f32 %v215, %v637
    %v639 = vpop.f32.mrb[0].mxu0
    %v640 = vadd.f32 %v211, %v639
    %v641 = vpop.f32.mrb[0].mxu0
    %v642 = vadd.f32 %v215, %v641
    %643 = vmatprep.mubr.bf16.mxu0 0
    %644 = vmatmul.mubr.bf16.gmra.mrb[0].mxu0 %v259
    %v645 = vpop.f32.mrb[0].mxu0
    %v646 = vadd.f32 %v211, %v645
    %v647 = vpop.f32.mrb[0].mxu0
    %v648 = vadd.f32 %v215, %v647
    %v649 = vpop.f32.mrb[0].mxu0
    %v650 = vadd.f32 %v211, %v649
    %v651 = vpop.f32.mrb[0].mxu0
    %v652 = vadd.f32 %v215, %v651
    %653 = vdwg.mxu0
    %654 = vst [vmem:[#allocation2] sm:$0xff] %v463
    %655 = vst [vmem:[#allocation2 + $0x8] sm:$0xff] %v465
    %656 = vst [vmem:[#allocation2 + $0x10] sm:$0xff] %v576
    %657 = vst [vmem:[#allocation2 + $0x18] sm:$0xff] %v578
    %658 = vst [vmem:[#allocation2 + $0x20] sm:$0xff] %v467
    %659 = vst [vmem:[#allocation2 + $0x28] sm:$0xff] %v469
    %660 = vst [vmem:[#allocation2 + $0x30] sm:$0xff] %v580
    %661 = vst [vmem:[#allocation2 + $0x38] sm:$0xff] %v582
    %662 = vst [vmem:[#allocation2 + $0x40] sm:$0xff] %v473
    %663 = vst [vmem:[#allocation2 + $0x48] sm:$0xff] %v475
    %664 = vst [vmem:[#allocation2 + $0x50] sm:$0xff] %v586
    %665 = vst [vmem:[#allocation2 + $0x58] sm:$0xff] %v588
    %666 = vst [vmem:[#allocation2 + $0x60] sm:$0xff] %v477
    %667 = vst [vmem:[#allocation2 + $0x68] sm:$0xff] %v479
    %668 = vst [vmem:[#allocation2 + $0x70] sm:$0xff] %v590
    %669 = vst [vmem:[#allocation2 + $0x78] sm:$0xff] %v592
    %670 = vst [vmem:[#allocation2 + $0x80] sm:$0xff] %v483
    %671 = vst [vmem:[#allocation2 + $0x88] sm:$0xff] %v485
    %672 = vst [vmem:[#allocation2 + $0x90] sm:$0xff] %v596
    %673 = vst [vmem:[#allocation2 + $0x98] sm:$0xff] %v598
    %674 = vst [vmem:[#allocation2 + $0xa0] sm:$0xff] %v487
    %675 = vst [vmem:[#allocation2 + $0xa8] sm:$0xff] %v489
    %676 = vst [vmem:[#allocation2 + $0xb0] sm:$0xff] %v600
    %677 = vst [vmem:[#allocation2 + $0xb8] sm:$0xff] %v602
    %678 = vst [vmem:[#allocation2 + $0xc0] sm:$0xff] %v493
    %679 = vst [vmem:[#allocation2 + $0xc8] sm:$0xff] %v495
    %680 = vst [vmem:[#allocation2 + $0xd0] sm:$0xff] %v606
    %681 = vst [vmem:[#allocation2 + $0xd8] sm:$0xff] %v608
    %682 = vst [vmem:[#allocation2 + $0xe0] sm:$0xff] %v497
    %683 = vst [vmem:[#allocation2 + $0xe8] sm:$0xff] %v499
    %684 = vst [vmem:[#allocation2 + $0xf0] sm:$0xff] %v610
    %685 = vst [vmem:[#allocation2 + $0xf8] sm:$0xff] %v612
    %686 = vst [vmem:[#allocation2 + $0x100] sm:$0xff] %v503
    %687 = vst [vmem:[#allocation2 + $0x108] sm:$0xff] %v505
    %688 = vst [vmem:[#allocation2 + $0x110] sm:$0xff] %v616
    %689 = vst [vmem:[#allocation2 + $0x118] sm:$0xff] %v618
    %690 = vst [vmem:[#allocation2 + $0x120] sm:$0xff] %v507
    %691 = vst [vmem:[#allocation2 + $0x128] sm:$0xff] %v509
    %692 = vst [vmem:[#allocation2 + $0x130] sm:$0xff] %v620
    %693 = vst [vmem:[#allocation2 + $0x138] sm:$0xff] %v622
    %694 = vst [vmem:[#allocation2 + $0x140] sm:$0xff] %v513
    %695 = vst [vmem:[#allocation2 + $0x148] sm:$0xff] %v515
    %696 = vst [vmem:[#allocation2 + $0x150] sm:$0xff] %v626
    %697 = vst [vmem:[#allocation2 + $0x158] sm:$0xff] %v628
    %698 = vst [vmem:[#allocation2 + $0x160] sm:$0xff] %v517
    %699 = vst [vmem:[#allocation2 + $0x168] sm:$0xff] %v519
    %700 = vst [vmem:[#allocation2 + $0x170] sm:$0xff] %v630
    %701 = vst [vmem:[#allocation2 + $0x178] sm:$0xff] %v632
    %702 = vst [vmem:[#allocation2 + $0x180] sm:$0xff] %v523
    %703 = vst [vmem:[#allocation2 + $0x188] sm:$0xff] %v525
    %704 = vst [vmem:[#allocation2 + $0x190] sm:$0xff] %v636
    %705 = vst [vmem:[#allocation2 + $0x198] sm:$0xff] %v638
    %706 = vst [vmem:[#allocation2 + $0x1a0] sm:$0xff] %v527
    %707 = vst [vmem:[#allocation2 + $0x1a8] sm:$0xff] %v529
    %708 = vst [vmem:[#allocation2 + $0x1b0] sm:$0xff] %v640
    %709 = vst [vmem:[#allocation2 + $0x1b8] sm:$0xff] %v642
    %710 = vst [vmem:[#allocation2 + $0x1c0] sm:$0xff] %v533
    %711 = vst [vmem:[#allocation2 + $0x1c8] sm:$0xff] %v535
    %712 = vst [vmem:[#allocation2 + $0x1d0] sm:$0xff] %v646
    %713 = vst [vmem:[#allocation2 + $0x1d8] sm:$0xff] %v648
    %714 = vst [vmem:[#allocation2 + $0x1e0] sm:$0xff] %v537
    %715 = vst [vmem:[#allocation2 + $0x1e8] sm:$0xff] %v539
    %716 = vst [vmem:[#allocation2 + $0x1f0] sm:$0xff] %v650
    %717 = vst [vmem:[#allocation2 + $0x1f8] sm:$0xff] %v652
    %v718 = vld [vmem:[#allocation9] sm:$0xff]
    %v719 = vld [vmem:[#allocation9 + $0x8] sm:$0xff]
    %v720 = vld [vmem:[#allocation9 + $0x10] sm:$0xff]
    %v721 = vld [vmem:[#allocation9 + $0x18] sm:$0xff]
    %v722 = vld [vmem:[#allocation9 + $0x20] sm:$0xff]
    %v723 = vld [vmem:[#allocation9 + $0x28] sm:$0xff]
    %v724 = vld [vmem:[#allocation9 + $0x30] sm:$0xff]
    %v725 = vld [vmem:[#allocation9 + $0x38] sm:$0xff]
    %v726 = vld [vmem:[#allocation9 + $0x40] sm:$0xff]
    %v727 = vld [vmem:[#allocation9 + $0x48] sm:$0xff]
    %v728 = vld [vmem:[#allocation9 + $0x50] sm:$0xff]
    %v729 = vld [vmem:[#allocation9 + $0x58] sm:$0xff]
    %v730 = vld [vmem:[#allocation9 + $0x60] sm:$0xff]
    %v731 = vld [vmem:[#allocation9 + $0x68] sm:$0xff]
    %v732 = vld [vmem:[#allocation9 + $0x70] sm:$0xff]
    %v733 = vld [vmem:[#allocation9 + $0x78] sm:$0xff]
    %v734 = vld [vmem:[#allocation9 + $0x80] sm:$0xff]
    %v735 = vld [vmem:[#allocation9 + $0x88] sm:$0xff]
    %v736 = vld [vmem:[#allocation9 + $0x90] sm:$0xff]
    %v737 = vld [vmem:[#allocation9 + $0x98] sm:$0xff]
    %v738 = vld [vmem:[#allocation9 + $0xa0] sm:$0xff]
    %v739 = vld [vmem:[#allocation9 + $0xa8] sm:$0xff]
    %v740 = vld [vmem:[#allocation9 + $0xb0] sm:$0xff]
    %v741 = vld [vmem:[#allocation9 + $0xb8] sm:$0xff]
    %v742 = vld [vmem:[#allocation9 + $0xc0] sm:$0xff]
    %v743 = vld [vmem:[#allocation9 + $0xc8] sm:$0xff]
    %v744 = vld [vmem:[#allocation9 + $0xd0] sm:$0xff]
    %v745 = vld [vmem:[#allocation9 + $0xd8] sm:$0xff]
    %v746 = vld [vmem:[#allocation9 + $0xe0] sm:$0xff]
    %v747 = vld [vmem:[#allocation9 + $0xe8] sm:$0xff]
    %v748 = vld [vmem:[#allocation9 + $0xf0] sm:$0xff]
    %v749 = vld [vmem:[#allocation9 + $0xf8] sm:$0xff]
    %s750 = smul.u32 0, 4
    %s751 = smul.addr %s750, 8
    %s752 = scalar_lea.vmem [#allocation2], %s751
    %v753 = vld [vmem:[%s752] sm:$0xff]
    %v754 = vld [vmem:[%s752 + $0x8] sm:$0xff]
    %v755 = vld [vmem:[%s752 + $0x10] sm:$0xff]
    %v756 = vld [vmem:[%s752 + $0x18] sm:$0xff]
    %v757 = vld [vmem:[%s752 + $0x20] sm:$0xff]
    %v758 = vld [vmem:[%s752 + $0x28] sm:$0xff]
    %v759 = vld [vmem:[%s752 + $0x30] sm:$0xff]
    %v760 = vld [vmem:[%s752 + $0x38] sm:$0xff]
    %v793 = vunpack.c.l.b16 %v718
    %v794 = vunpack.c.h.b16 %v718
    %v795 = vunpack.c.l.b16 %v719
    %v796 = vunpack.c.h.b16 %v719
    %v797 = vunpack.c.l.b16 %v720
    %v798 = vunpack.c.h.b16 %v720
    %v799 = vunpack.c.l.b16 %v721
    %v800 = vunpack.c.h.b16 %v721
    %v801 = vunpack.c.l.b16 %v722
    %v802 = vunpack.c.h.b16 %v722
    %v803 = vunpack.c.l.b16 %v723
    %v804 = vunpack.c.h.b16 %v723
    %v805 = vunpack.c.l.b16 %v724
    %v806 = vunpack.c.h.b16 %v724
    %v807 = vunpack.c.l.b16 %v725
    %v808 = vunpack.c.h.b16 %v725
    %v809 = vunpack.c.l.b16 %v726
    %v810 = vunpack.c.h.b16 %v726
    %v811 = vunpack.c.l.b16 %v727
    %v812 = vunpack.c.h.b16 %v727
    %v813 = vunpack.c.l.b16 %v728
    %v814 = vunpack.c.h.b16 %v728
    %v815 = vunpack.c.l.b16 %v729
    %v816 = vunpack.c.h.b16 %v729
    %v817 = vunpack.c.l.b16 %v730
    %v818 = vunpack.c.h.b16 %v730
    %v819 = vunpack.c.l.b16 %v731
    %v820 = vunpack.c.h.b16 %v731
    %v821 = vunpack.c.l.b16 %v732
    %v822 = vunpack.c.h.b16 %v732
    %v823 = vunpack.c.l.b16 %v733
    %v824 = vunpack.c.h.b16 %v733
    %v825 = vunpack.c.l.b16 %v734
    %v826 = vunpack.c.h.b16 %v734
    %v827 = vunpack.c.l.b16 %v735
    %v828 = vunpack.c.h.b16 %v735
    %v829 = vunpack.c.l.b16 %v736
    %v830 = vunpack.c.h.b16 %v736
    %v831 = vunpack.c.l.b16 %v737
    %v832 = vunpack.c.h.b16 %v737
    %v833 = vunpack.c.l.b16 %v738
    %v834 = vunpack.c.h.b16 %v738
    %v835 = vunpack.c.l.b16 %v739
    %v836 = vunpack.c.h.b16 %v739
    %v837 = vunpack.c.l.b16 %v740
    %v838 = vunpack.c.h.b16 %v740
    %v839 = vunpack.c.l.b16 %v741
    %v840 = vunpack.c.h.b16 %v741
    %v841 = vunpack.c.l.b16 %v742
    %v842 = vunpack.c.h.b16 %v742
    %v843 = vunpack.c.l.b16 %v743
    %v844 = vunpack.c.h.b16 %v743
    %v845 = vunpack.c.l.b16 %v744
    %v846 = vunpack.c.h.b16 %v744
    %v847 = vunpack.c.l.b16 %v745
    %v848 = vunpack.c.h.b16 %v745
    %v849 = vunpack.c.l.b16 %v746
    %v850 = vunpack.c.h.b16 %v746
    %v851 = vunpack.c.l.b16 %v747
    %v852 = vunpack.c.h.b16 %v747
    %v853 = vunpack.c.l.b16 %v748
    %v854 = vunpack.c.h.b16 %v748
    %v855 = vunpack.c.l.b16 %v749
    %v856 = vunpack.c.h.b16 %v749
    %v857 = vpack.c.b16 %v797, %v793
    %v858 = vpack.c.b16 %v798, %v794
    %v859 = vpack.c.b16 %v799, %v795
    %v860 = vpack.c.b16 %v800, %v796
    %v861 = vpack.c.b16 %v805, %v801
    %v862 = vpack.c.b16 %v806, %v802
    %v863 = vpack.c.b16 %v807, %v803
    %v864 = vpack.c.b16 %v808, %v804
    %v865 = vpack.c.b16 %v813, %v809
    %v866 = vpack.c.b16 %v814, %v810
    %v867 = vpack.c.b16 %v815, %v811
    %v868 = vpack.c.b16 %v816, %v812
    %v869 = vpack.c.b16 %v821, %v817
    %v870 = vpack.c.b16 %v822, %v818
    %v871 = vpack.c.b16 %v823, %v819
    %v872 = vpack.c.b16 %v824, %v820
    %v873 = vpack.c.b16 %v829, %v825
    %v874 = vpack.c.b16 %v830, %v826
    %v875 = vpack.c.b16 %v831, %v827
    %v876 = vpack.c.b16 %v832, %v828
    %v877 = vpack.c.b16 %v837, %v833
    %v878 = vpack.c.b16 %v838, %v834
    %v879 = vpack.c.b16 %v839, %v835
    %v880 = vpack.c.b16 %v840, %v836
    %v881 = vpack.c.b16 %v845, %v841
    %v882 = vpack.c.b16 %v846, %v842
    %v883 = vpack.c.b16 %v847, %v843
    %v884 = vpack.c.b16 %v848, %v844
    %v885 = vpack.c.b16 %v853, %v849
    %v886 = vpack.c.b16 %v854, %v850
    %v887 = vpack.c.b16 %v855, %v851
    %v888 = vpack.c.b16 %v856, %v852
    %921 = vmatprep.subr.bf16.mxu0 %v858
    %922 = vmatpush1.bf16.msra.mxu0 %v857
    %923 = vmatprep.subr.bf16.mxu0 %v862
    %924 = vmatpush1.bf16.msra.mxu0 %v861
    %925 = vmatprep.subr.bf16.mxu0 %v866
    %926 = vmatpush1.bf16.msra.mxu0 %v865
    %927 = vmatprep.subr.bf16.mxu0 %v870
    %928 = vmatpush1.bf16.msra.mxu0 %v869
    %929 = vmatprep.subr.bf16.mxu0 %v874
    %930 = vmatpush1.bf16.msra.mxu0 %v873
    %931 = vmatprep.subr.bf16.mxu0 %v878
    %932 = vmatpush1.bf16.msra.mxu0 %v877
    %933 = vmatprep.subr.bf16.mxu0 %v882
    %934 = vmatpush1.bf16.msra.mxu0 %v881
    %935 = vmatprep.subr.bf16.mxu0 %v886
    %936 = vmatpush1.bf16.msra.mxu0 %v885
    %937 = vmatprep.subr.bf16.mxu0 0
    %938 = vmatpush1.bf16.msra.mxu0 0
    %939 = vmatprep.subr.bf16.mxu0 0
    %940 = vmatpush1.bf16.msra.mxu0 0
    %941 = vmatprep.subr.bf16.mxu0 0
    %942 = vmatpush1.bf16.msra.mxu0 0
    %943 = vmatprep.subr.bf16.mxu0 0
    %944 = vmatpush1.bf16.msra.mxu0 0
    %945 = vmatprep.subr.bf16.mxu0 0
    %946 = vmatpush1.bf16.msra.mxu0 0
    %947 = vmatprep.subr.bf16.mxu0 0
    %948 = vmatpush1.bf16.msra.mxu0 0
    %949 = vmatprep.subr.bf16.mxu0 0
    %950 = vmatpush1.bf16.msra.mxu0 0
    %951 = vmatprep.subr.bf16.mxu0 0
    %952 = vmatpush1.bf16.msra.mxu0 0
    %953 = vmatprep.mubr.bf16.mxu0 0
    %954 = vmatmul.mubr.bf16.gmra.mrb[0].mxu0 0
    %v955 = vpop.f32.mrb[0].mxu0
    %v956 = vadd.f32 0.0, %v955
    %v957 = vpop.f32.mrb[0].mxu0
    %v958 = vadd.f32 0.0, %v957
    %v959 = vpop.f32.mrb[0].mxu0
    %v960 = vadd.f32 0.0, %v959
    %v961 = vpop.f32.mrb[0].mxu0
    %v962 = vadd.f32 0.0, %v961
    %963 = vdwg.mxu0
    %964 = vmatprep.subr.bf16.mxu0 %v860
    %965 = vmatpush1.bf16.msra.mxu0 %v859
    %966 = vmatprep.subr.bf16.mxu0 %v864
    %967 = vmatpush1.bf16.msra.mxu0 %v863
    %968 = vmatprep.subr.bf16.mxu0 %v868
    %969 = vmatpush1.bf16.msra.mxu0 %v867
    %970 = vmatprep.subr.bf16.mxu0 %v872
    %971 = vmatpush1.bf16.msra.mxu0 %v871
    %972 = vmatprep.subr.bf16.mxu0 %v876
    %973 = vmatpush1.bf16.msra.mxu0 %v875
    %974 = vmatprep.subr.bf16.mxu0 %v880
    %975 = vmatpush1.bf16.msra.mxu0 %v879
    %976 = vmatprep.subr.bf16.mxu0 %v884
    %977 = vmatpush1.bf16.msra.mxu0 %v883
    %978 = vmatprep.subr.bf16.mxu0 %v888
    %979 = vmatpush1.bf16.msra.mxu0 %v887
    %980 = vmatprep.subr.bf16.mxu0 0
    %981 = vmatpush1.bf16.msra.mxu0 0
    %982 = vmatprep.subr.bf16.mxu0 0
    %983 = vmatpush1.bf16.msra.mxu0 0
    %984 = vmatprep.subr.bf16.mxu0 0
    %985 = vmatpush1.bf16.msra.mxu0 0
    %986 = vmatprep.subr.bf16.mxu0 0
    %987 = vmatpush1.bf16.msra.mxu0 0
    %988 = vmatprep.subr.bf16.mxu0 0
    %989 = vmatpush1.bf16.msra.mxu0 0
    %990 = vmatprep.subr.bf16.mxu0 0
    %991 = vmatpush1.bf16.msra.mxu0 0
    %992 = vmatprep.subr.bf16.mxu0 0
    %993 = vmatpush1.bf16.msra.mxu0 0
    %994 = vmatprep.subr.bf16.mxu0 0
    %995 = vmatpush1.bf16.msra.mxu0 0
    %996 = vmatprep.mubr.bf16.mxu0 0
    %997 = vmatmul.mubr.bf16.gmra.mrb[0].mxu0 0
    %v998 = vpop.f32.mrb[0].mxu0
    %v999 = vadd.f32 0.0, %v998
    %v1000 = vpop.f32.mrb[0].mxu0
    %v1001 = vadd.f32 0.0, %v1000
    %v1002 = vpop.f32.mrb[0].mxu0
    %v1003 = vadd.f32 0.0, %v1002
    %v1004 = vpop.f32.mrb[0].mxu0
    %v1005 = vadd.f32 0.0, %v1004
    %1006 = vdwg.mxu0
    %v1007 = vadd.f32 %v753, %v956
    %v1008 = vadd.f32 %v754, %v958
    %v1009 = vadd.f32 %v755, %v999
    %v1010 = vadd.f32 %v756, %v1001
    %v1011 = vadd.f32 %v757, %v960
    %v1012 = vadd.f32 %v758, %v962
    %v1013 = vadd.f32 %v759, %v1003
    %v1014 = vadd.f32 %v760, %v1005
    %v1015 = vxor.u32 %v1007, 2147483648
    %v1016 = vxor.u32 %v1008, 2147483648
    %v1017 = vxor.u32 %v1009, 2147483648
    %v1018 = vxor.u32 %v1011, 2147483648
    %v1019 = vxor.u32 %v1012, 2147483648
    %v1020 = vxor.u32 %v1013, 2147483648
    %v1021 = vmul.f32 %v1015, 1.442695
    %v1022 = vpow.pop %v1021
    %v1023 = vmul.f32 %v1016, 1.442695
    %v1024 = vpow.pop %v1023
    %v1025 = vmul.f32 %v1017, 1.442695
    %v1026 = vpow.pop %v1025
    %v1027 = vmul.f32 %v1018, 1.442695
    %v1028 = vpow.pop %v1027
    %v1029 = vmul.f32 %v1019, 1.442695
    %v1030 = vpow.pop %v1029
    %v1031 = vmul.f32 %v1020, 1.442695
    %v1032 = vpow.pop %v1031
    %v1033 = vadd.f32 %v1022, 1.0
    %v1034 = vadd.f32 %v1024, 1.0
    %v1035 = vadd.f32 %v1026, 1.0
    %v1036 = vadd.f32 %v1028, 1.0
    %v1037 = vadd.f32 %v1030, 1.0
    %v1038 = vadd.f32 %v1032, 1.0
    %v1039 = vrcp.pop %v1033
    %v1040 = vmul.f32 1.0, %v1039
    %v1041 = vrcp.pop %v1034
    %v1042 = vmul.f32 1.0, %v1041
    %v1043 = vrcp.pop %v1035
    %v1044 = vmul.f32 1.0, %v1043
    %v1045 = vrcp.pop %v1036
    %v1046 = vmul.f32 1.0, %v1045
    %v1047 = vrcp.pop %v1037
    %v1048 = vmul.f32 1.0, %v1047
    %v1049 = vrcp.pop %v1038
    %v1050 = vmul.f32 1.0, %v1049
    %v1051 = vtanh.pop %v1010
    %v1052 = vtanh.pop %v1014
    %v1053 = vmul.f32 %v1042, 0.0
    %v1054 = vmul.f32 %v1048, 0.0
    %v1055 = vmul.f32 %v1040, %v1051
    %v1056 = vmul.f32 %v1046, %v1052
    %v1057 = vadd.f32 %v1053, %v1055
    %v1058 = vadd.f32 %v1054, %v1056
    %v1059 = vtanh.pop %v1057
    %v1060 = vtanh.pop %v1058
    %v1061 = vmul.f32 %v1044, %v1059
    %v1062 = vmul.f32 %v1050, %v1060
    %v1063 = vpack.c.bf16 %v1062, %v1061
    %1064 = vst [vmem:[#allocation3] sm:$0xff] %v1063
    %s1065 = smul.u32 2, 4
    %s1066 = smul.addr %s1065, 8
    %s1067 = scalar_lea.vmem [#allocation2], %s1066
    %v1068 = vld [vmem:[%s1067] sm:$0xff]
    %v1069 = vld [vmem:[%s1067 + $0x8] sm:$0xff]
    %v1070 = vld [vmem:[%s1067 + $0x10] sm:$0xff]
    %v1071 = vld [vmem:[%s1067 + $0x18] sm:$0xff]
    %v1072 = vld [vmem:[%s1067 + $0x20] sm:$0xff]
    %v1073 = vld [vmem:[%s1067 + $0x28] sm:$0xff]
    %v1074 = vld [vmem:[%s1067 + $0x30] sm:$0xff]
    %v1075 = vld [vmem:[%s1067 + $0x38] sm:$0xff]
    %1076 = vmatprep.subr.bf16.mxu0 %v858
    %1077 = vmatpush1.bf16.msra.mxu0 %v857
    %1078 = vmatprep.subr.bf16.mxu0 %v862
    %1079 = vmatpush1.bf16.msra.mxu0 %v861
    %1080 = vmatprep.subr.bf16.mxu0 %v866
    %1081 = vmatpush1.bf16.msra.mxu0 %v865
    %1082 = vmatprep.subr.bf16.mxu0 %v870
    %1083 = vmatpush1.bf16.msra.mxu0 %v869
    %1084 = vmatprep.subr.bf16.mxu0 %v874
    %1085 = vmatpush1.bf16.msra.mxu0 %v873
    %1086 = vmatprep.subr.bf16.mxu0 %v878
    %1087 = vmatpush1.bf16.msra.mxu0 %v877
    %1088 = vmatprep.subr.bf16.mxu0 %v882
    %1089 = vmatpush1.bf16.msra.mxu0 %v881
    %1090 = vmatprep.subr.bf16.mxu0 %v886
    %1091 = vmatpush1.bf16.msra.mxu0 %v885
    %1092 = vmatprep.subr.bf16.mxu0 0
    %1093 = vmatpush1.bf16.msra.mxu0 0
    %1094 = vmatprep.subr.bf16.mxu0 0
    %1095 = vmatpush1.bf16.msra.mxu0 0
    %1096 = vmatprep.subr.bf16.mxu0 0
    %1097 = vmatpush1.bf16.msra.mxu0 0
    %1098 = vmatprep.subr.bf16.mxu0 0
    %1099 = vmatpush1.bf16.msra.mxu0 0
    %1100 = vmatprep.subr.bf16.mxu0 0
    %1101 = vmatpush1.bf16.msra.mxu0 0
    %1102 = vmatprep.subr.bf16.mxu0 0
    %1103 = vmatpush1.bf16.msra.mxu0 0
    %1104 = vmatprep.subr.bf16.mxu0 0
    %1105 = vmatpush1.bf16.msra.mxu0 0
    %1106 = vmatprep.subr.bf16.mxu0 0
    %1107 = vmatpush1.bf16.msra.mxu0 0
    %1108 = vmatprep.mubr.bf16.mxu0 0
    %1109 = vmatmul.mubr.bf16.gmra.mrb[0].mxu0 %v1063
    %v1110 = vpop.f32.mrb[0].mxu0
    %v1111 = vadd.f32 0.0, %v1110
    %v1112 = vpop.f32.mrb[0].mxu0
    %v1113 = vadd.f32 0.0, %v1112
    %v1114 = vpop.f32.mrb[0].mxu0
    %v1115 = vadd.f32 0.0, %v1114
    %v1116 = vpop.f32.mrb[0].mxu0
    %v1117 = vadd.f32 0.0, %v1116
    %1118 = vdwg.mxu0
    %1119 = vmatprep.subr.bf16.mxu0 %v860
    %1120 = vmatpush1.bf16.msra.mxu0 %v859
    %1121 = vmatprep.subr.bf16.mxu0 %v864
    %1122 = vmatpush1.bf16.msra.mxu0 %v863
    %1123 = vmatprep.subr.bf16.mxu0 %v868
    %1124 = vmatpush1.bf16.msra.mxu0 %v867
    %1125 = vmatprep.subr.bf16.mxu0 %v872
    %1126 = vmatpush1.bf16.msra.mxu0 %v871
    %1127 = vmatprep.subr.bf16.mxu0 %v876
    %1128 = vmatpush1.bf16.msra.mxu0 %v875
    %1129 = vmatprep.subr.bf16.mxu0 %v880
    %1130 = vmatpush1.bf16.msra.mxu0 %v879
    %1131 = vmatprep.subr.bf16.mxu0 %v884
    %1132 = vmatpush1.bf16.msra.mxu0 %v883
    %1133 = vmatprep.subr.bf16.mxu0 %v888
    %1134 = vmatpush1.bf16.msra.mxu0 %v887
    %1135 = vmatprep.subr.bf16.mxu0 0
    %1136 = vmatpush1.bf16.msra.mxu0 0
    %1137 = vmatprep.subr.bf16.mxu0 0
    %1138 = vmatpush1.bf16.msra.mxu0 0
    %1139 = vmatprep.subr.bf16.mxu0 0
    %1140 = vmatpush1.bf16.msra.mxu0 0
    %1141 = vmatprep.subr.bf16.mxu0 0
    %1142 = vmatpush1.bf16.msra.mxu0 0
    %1143 = vmatprep.subr.bf16.mxu0 0
    %1144 = vmatpush1.bf16.msra.mxu0 0
    %1145 = vmatprep.subr.bf16.mxu0 0
    %1146 = vmatpush1.bf16.msra.mxu0 0
    %1147 = vmatprep.subr.bf16.mxu0 0
    %1148 = vmatpush1.bf16.msra.mxu0 0
    %1149 = vmatprep.subr.bf16.mxu0 0
    %1150 = vmatpush1.bf16.msra.mxu0 0
    %1151 = vmatprep.mubr.bf16.mxu0 0
    %1152 = vmatmul.mubr.bf16.gmra.mrb[0].mxu0 %v1063
    %v1153 = vpop.f32.mrb[0].mxu0
    %v1154 = vadd.f32 0.0, %v1153
    %v1155 = vpop.f32.mrb[0].mxu0
    %v1156 = vadd.f32 0.0, %v1155
    %v1157 = vpop.f32.mrb[0].mxu0
    %v1158 = vadd.f32 0.0, %v1157
    %v1159 = vpop.f32.mrb[0].mxu0
    %v1160 = vadd.f32 0.0, %v1159
    %1161 = vdwg.mxu0
    %v1162 = vadd.f32 %v1068, %v1111
    %v1163 = vadd.f32 %v1069, %v1113
    %v1164 = vadd.f32 %v1070, %v1154
    %v1165 = vadd.f32 %v1071, %v1156
    %v1166 = vadd.f32 %v1072, %v1115
    %v1167 = vadd.f32 %v1073, %v1117
    %v1168 = vadd.f32 %v1074, %v1158
    %v1169 = vadd.f32 %v1075, %v1160
    %v1170 = vxor.u32 %v1162, 2147483648
    %v1171 = vxor.u32 %v1163, 2147483648
    %v1172 = vxor.u32 %v1164, 2147483648
    %v1173 = vxor.u32 %v1166, 2147483648
    %v1174 = vxor.u32 %v1167, 2147483648
    %v1175 = vxor.u32 %v1168, 2147483648
    %v1176 = vmul.f32 %v1170, 1.442695
    %v1177 = vpow.pop %v1176
    %v1178 = vmul.f32 %v1171, 1.442695
    %v1179 = vpow.pop %v1178
    %v1180 = vmul.f32 %v1172, 1.442695
    %v1181 = vpow.pop %v1180
    %v1182 = vmul.f32 %v1173, 1.442695
    %v1183 = vpow.pop %v1182
    %v1184 = vmul.f32 %v1174, 1.442695
    %v1185 = vpow.pop %v1184
    %v1186 = vmul.f32 %v1175, 1.442695
    %v1187 = vpow.pop %v1186
    %v1188 = vadd.f32 %v1177, 1.0
    %v1189 = vadd.f32 %v1179, 1.0
    %v1190 = vadd.f32 %v1181, 1.0
    %v1191 = vadd.f32 %v1183, 1.0
    %v1192 = vadd.f32 %v1185, 1.0
    %v1193 = vadd.f32 %v1187, 1.0
    %v1194 = vrcp.pop %v1188
    %v1195 = vmul.f32 1.0, %v1194
    %v1196 = vrcp.pop %v1189
    %v1197 = vmul.f32 1.0, %v1196
    %v1198 = vrcp.pop %v1190
    %v1199 = vmul.f32 1.0, %v1198
    %v1200 = vrcp.pop %v1191
    %v1201 = vmul.f32 1.0, %v1200
    %v1202 = vrcp.pop %v1192
    %v1203 = vmul.f32 1.0, %v1202
    %v1204 = vrcp.pop %v1193
    %v1205 = vmul.f32 1.0, %v1204
    %v1206 = vtanh.pop %v1165
    %v1207 = vtanh.pop %v1169
    %v1208 = vmul.f32 %v1197, %v1057
    %v1209 = vmul.f32 %v1203, %v1058
    %v1210 = vmul.f32 %v1195, %v1206
    %v1211 = vmul.f32 %v1201, %v1207
    %v1212 = vadd.f32 %v1208, %v1210
    %v1213 = vadd.f32 %v1209, %v1211
    %v1214 = vtanh.pop %v1212
    %v1215 = vtanh.pop %v1213
    %v1216 = vmul.f32 %v1199, %v1214
    %v1217 = vmul.f32 %v1205, %v1215
    %v1218 = vpack.c.bf16 %v1217, %v1216
    %s1219 = scalar_lea.vmem [#allocation3], 8
    %1220 = vst [vmem:[%s1219] sm:$0xff] %v1218
    %s1221 = smul.u32 4, 4
    %s1222 = smul.addr %s1221, 8
    %s1223 = scalar_lea.vmem [#allocation2], %s1222
    %v1224 = vld [vmem:[%s1223] sm:$0xff]
    %v1225 = vld [vmem:[%s1223 + $0x8] sm:$0xff]
    %v1226 = vld [vmem:[%s1223 + $0x10] sm:$0xff]
    %v1227 = vld [vmem:[%s1223 + $0x18] sm:$0xff]
    %v1228 = vld [vmem:[%s1223 + $0x20] sm:$0xff]
    %v1229 = vld [vmem:[%s1223 + $0x28] sm:$0xff]
    %v1230 = vld [vmem:[%s1223 + $0x30] sm:$0xff]
    %v1231 = vld [vmem:[%s1223 + $0x38] sm:$0xff]
    %1232 = vmatprep.subr.bf16.mxu0 %v858
    %1233 = vmatpush1.bf16.msra.mxu0 %v857
    %1234 = vmatprep.subr.bf16.mxu0 %v862
    %1235 = vmatpush1.bf16.msra.mxu0 %v861
    %1236 = vmatprep.subr.bf16.mxu0 %v866
    %1237 = vmatpush1.bf16.msra.mxu0 %v865
    %1238 = vmatprep.subr.bf16.mxu0 %v870
    %1239 = vmatpush1.bf16.msra.mxu0 %v869
    %1240 = vmatprep.subr.bf16.mxu0 %v874
    %1241 = vmatpush1.bf16.msra.mxu0 %v873
    %1242 = vmatprep.subr.bf16.mxu0 %v878
    %1243 = vmatpush1.bf16.msra.mxu0 %v877
    %1244 = vmatprep.subr.bf16.mxu0 %v882
    %1245 = vmatpush1.bf16.msra.mxu0 %v881
    %1246 = vmatprep.subr.bf16.mxu0 %v886
    %1247 = vmatpush1.bf16.msra.mxu0 %v885
    %1248 = vmatprep.subr.bf16.mxu0 0
    %1249 = vmatpush1.bf16.msra.mxu0 0
    %1250 = vmatprep.subr.bf16.mxu0 0
    %1251 = vmatpush1.bf16.msra.mxu0 0
    %1252 = vmatprep.subr.bf16.mxu0 0
    %1253 = vmatpush1.bf16.msra.mxu0 0
    %1254 = vmatprep.subr.bf16.mxu0 0
    %1255 = vmatpush1.bf16.msra.mxu0 0
    %1256 = vmatprep.subr.bf16.mxu0 0
    %1257 = vmatpush1.bf16.msra.mxu0 0
    %1258 = vmatprep.subr.bf16.mxu0 0
    %1259 = vmatpush1.bf16.msra.mxu0 0
    %1260 = vmatprep.subr.bf16.mxu0 0
    %1261 = vmatpush1.bf16.msra.mxu0 0
    %1262 = vmatprep.subr.bf16.mxu0 0
    %1263 = vmatpush1.bf16.msra.mxu0 0
    %1264 = vmatprep.mubr.bf16.mxu0 0
    %1265 = vmatmul.mubr.bf16.gmra.mrb[0].mxu0 %v1218
    %v1266 = vpop.f32.mrb[0].mxu0
    %v1267 = vadd.f32 0.0, %v1266
    %v1268 = vpop.f32.mrb[0].mxu0
    %v1269 = vadd.f32 0.0, %v1268
    %v1270 = vpop.f32.mrb[0].mxu0
    %v1271 = vadd.f32 0.0, %v1270
    %v1272 = vpop.f32.mrb[0].mxu0
    %v1273 = vadd.f32 0.0, %v1272
    %1274 = vdwg.mxu0
    %1275 = vmatprep.subr.bf16.mxu0 %v860
    %1276 = vmatpush1.bf16.msra.mxu0 %v859
    %1277 = vmatprep.subr.bf16.mxu0 %v864
    %1278 = vmatpush1.bf16.msra.mxu0 %v863
    %1279 = vmatprep.subr.bf16.mxu0 %v868
    %1280 = vmatpush1.bf16.msra.mxu0 %v867
    %1281 = vmatprep.subr.bf16.mxu0 %v872
    %1282 = vmatpush1.bf16.msra.mxu0 %v871
    %1283 = vmatprep.subr.bf16.mxu0 %v876
    %1284 = vmatpush1.bf16.msra.mxu0 %v875
    %1285 = vmatprep.subr.bf16.mxu0 %v880
    %1286 = vmatpush1.bf16.msra.mxu0 %v879
    %1287 = vmatprep.subr.bf16.mxu0 %v884
    %1288 = vmatpush1.bf16.msra.mxu0 %v883
    %1289 = vmatprep.subr.bf16.mxu0 %v888
    %1290 = vmatpush1.bf16.msra.mxu0 %v887
    %1291 = vmatprep.subr.bf16.mxu0 0
    %1292 = vmatpush1.bf16.msra.mxu0 0
    %1293 = vmatprep.subr.bf16.mxu0 0
    %1294 = vmatpush1.bf16.msra.mxu0 0
    %1295 = vmatprep.subr.bf16.mxu0 0
    %1296 = vmatpush1.bf16.msra.mxu0 0
    %1297 = vmatprep.subr.bf16.mxu0 0
    %1298 = vmatpush1.bf16.msra.mxu0 0
    %1299 = vmatprep.subr.bf16.mxu0 0
    %1300 = vmatpush1.bf16.msra.mxu0 0
    %1301 = vmatprep.subr.bf16.mxu0 0
    %1302 = vmatpush1.bf16.msra.mxu0 0
    %1303 = vmatprep.subr.bf16.mxu0 0
    %1304 = vmatpush1.bf16.msra.mxu0 0
    %1305 = vmatprep.subr.bf16.mxu0 0
    %1306 = vmatpush1.bf16.msra.mxu0 0
    %1307 = vmatprep.mubr.bf16.mxu0 0
    %1308 = vmatmul.mubr.bf16.gmra.mrb[0].mxu0 %v1218
    %v1309 = vpop.f32.mrb[0].mxu0
    %v1310 = vadd.f32 0.0, %v1309
    %v1311 = vpop.f32.mrb[0].mxu0
    %v1312 = vadd.f32 0.0, %v1311
    %v1313 = vpop.f32.mrb[0].mxu0
    %v1314 = vadd.f32 0.0, %v1313
    %v1315 = vpop.f32.mrb[0].mxu0
    %v1316 = vadd.f32 0.0, %v1315
    %1317 = vdwg.mxu0
    %v1318 = vadd.f32 %v1224, %v1267
    %v1319 = vadd.f32 %v1225, %v1269
    %v1320 = vadd.f32 %v1226, %v1310
    %v1321 = vadd.f32 %v1227, %v1312
    %v1322 = vadd.f32 %v1228, %v1271
    %v1323 = vadd.f32 %v1229, %v1273
    %v1324 = vadd.f32 %v1230, %v1314
    %v1325 = vadd.f32 %v1231, %v1316
    %v1326 = vxor.u32 %v1318, 2147483648
    %v1327 = vxor.u32 %v1319, 2147483648
    %v1328 = vxor.u32 %v1320, 2147483648
    %v1329 = vxor.u32 %v1322, 2147483648
    %v1330 = vxor.u32 %v1323, 2147483648
    %v1331 = vxor.u32 %v1324, 2147483648
    %v1332 = vmul.f32 %v1326, 1.442695
    %v1333 = vpow.pop %v1332
    %v1334 = vmul.f32 %v1327, 1.442695
    %v1335 = vpow.pop %v1334
    %v1336 = vmul.f32 %v1328, 1.442695
    %v1337 = vpow.pop %v1336
    %v1338 = vmul.f32 %v1329, 1.442695
    %v1339 = vpow.pop %v1338
    %v1340 = vmul.f32 %v1330, 1.442695
    %v1341 = vpow.pop %v1340
    %v1342 = vmul.f32 %v1331, 1.442695
    %v1343 = vpow.pop %v1342
    %v1344 = vadd.f32 %v1333, 1.0
    %v1345 = vadd.f32 %v1335, 1.0
    %v1346 = vadd.f32 %v1337, 1.0
    %v1347 = vadd.f32 %v1339, 1.0
    %v1348 = vadd.f32 %v1341, 1.0
    %v1349 = vadd.f32 %v1343, 1.0
    %v1350 = vrcp.pop %v1344
    %v1351 = vmul.f32 1.0, %v1350
    %v1352 = vrcp.pop %v1345
    %v1353 = vmul.f32 1.0, %v1352
    %v1354 = vrcp.pop %v1346
    %v1355 = vmul.f32 1.0, %v1354
    %v1356 = vrcp.pop %v1347
    %v1357 = vmul.f32 1.0, %v1356
    %v1358 = vrcp.pop %v1348
    %v1359 = vmul.f32 1.0, %v1358
    %v1360 = vrcp.pop %v1349
    %v1361 = vmul.f32 1.0, %v1360
    %v1362 = vtanh.pop %v1321
    %v1363 = vtanh.pop %v1325
    %v1364 = vmul.f32 %v1353, %v1212
    %v1365 = vmul.f32 %v1359, %v1213
    %v1366 = vmul.f32 %v1351, %v1362
    %v1367 = vmul.f32 %v1357, %v1363
    %v1368 = vadd.f32 %v1364, %v1366
    %v1369 = vadd.f32 %v1365, %v1367
    %v1370 = vtanh.pop %v1368
    %v1371 = vtanh.pop %v1369
    %v1372 = vmul.f32 %v1355, %v1370
    %v1373 = vmul.f32 %v1361, %v1371
    %v1374 = vpack.c.bf16 %v1373, %v1372
    %s1375 = scalar_lea.vmem [#allocation3], 16
    %1376 = vst [vmem:[%s1375] sm:$0xff] %v1374
    %s1377 = smul.u32 6, 4
    %s1378 = smul.addr %s1377, 8
    %s1379 = scalar_lea.vmem [#allocation2], %s1378
    %v1380 = vld [vmem:[%s1379] sm:$0xff]
    %v1381 = vld [vmem:[%s1379 + $0x8] sm:$0xff]
    %v1382 = vld [vmem:[%s1379 + $0x10] sm:$0xff]
    %v1383 = vld [vmem:[%s1379 + $0x18] sm:$0xff]
    %v1384 = vld [vmem:[%s1379 + $0x20] sm:$0xff]
    %v1385 = vld [vmem:[%s1379 + $0x28] sm:$0xff]
    %v1386 = vld [vmem:[%s1379 + $0x30] sm:$0xff]
    %v1387 = vld [vmem:[%s1379 + $0x38] sm:$0xff]
    %1388 = vmatprep.subr.bf16.mxu0 %v858
    %1389 = vmatpush1.bf16.msra.mxu0 %v857
    %1390 = vmatprep.subr.bf16.mxu0 %v862
    %1391 = vmatpush1.bf16.msra.mxu0 %v861
    %1392 = vmatprep.subr.bf16.mxu0 %v866
    %1393 = vmatpush1.bf16.msra.mxu0 %v865
    %1394 = vmatprep.subr.bf16.mxu0 %v870
    %1395 = vmatpush1.bf16.msra.mxu0 %v869
    %1396 = vmatprep.subr.bf16.mxu0 %v874
    %1397 = vmatpush1.bf16.msra.mxu0 %v873
    %1398 = vmatprep.subr.bf16.mxu0 %v878
    %1399 = vmatpush1.bf16.msra.mxu0 %v877
    %1400 = vmatprep.subr.bf16.mxu0 %v882
    %1401 = vmatpush1.bf16.msra.mxu0 %v881
    %1402 = vmatprep.subr.bf16.mxu0 %v886
    %1403 = vmatpush1.bf16.msra.mxu0 %v885
    %1404 = vmatprep.subr.bf16.mxu0 0
    %1405 = vmatpush1.bf16.msra.mxu0 0
    %1406 = vmatprep.subr.bf16.mxu0 0
    %1407 = vmatpush1.bf16.msra.mxu0 0
    %1408 = vmatprep.subr.bf16.mxu0 0
    %1409 = vmatpush1.bf16.msra.mxu0 0
    %1410 = vmatprep.subr.bf16.mxu0 0
    %1411 = vmatpush1.bf16.msra.mxu0 0
    %1412 = vmatprep.subr.bf16.mxu0 0
    %1413 = vmatpush1.bf16.msra.mxu0 0
    %1414 = vmatprep.subr.bf16.mxu0 0
    %1415 = vmatpush1.bf16.msra.mxu0 0
    %1416 = vmatprep.subr.bf16.mxu0 0
    %1417 = vmatpush1.bf16.msra.mxu0 0
    %1418 = vmatprep.subr.bf16.mxu0 0
    %1419 = vmatpush1.bf16.msra.mxu0 0
    %1420 = vmatprep.mubr.bf16.mxu0 0
    %1421 = vmatmul.mubr.bf16.gmra.mrb[0].mxu0 %v1374
    %v1422 = vpop.f32.mrb[0].mxu0
    %v1423 = vadd.f32 0.0, %v1422
    %v1424 = vpop.f32.mrb[0].mxu0
    %v1425 = vadd.f32 0.0, %v1424
    %v1426 = vpop.f32.mrb[0].mxu0
    %v1427 = vadd.f32 0.0, %v1426
    %v1428 = vpop.f32.mrb[0].mxu0
    %v1429 = vadd.f32 0.0, %v1428
    %1430 = vdwg.mxu0
    %1431 = vmatprep.subr.bf16.mxu0 %v860
    %1432 = vmatpush1.bf16.msra.mxu0 %v859
    %1433 = vmatprep.subr.bf16.mxu0 %v864
    %1434 = vmatpush1.bf16.msra.mxu0 %v863
    %1435 = vmatprep.subr.bf16.mxu0 %v868
    %1436 = vmatpush1.bf16.msra.mxu0 %v867
    %1437 = vmatprep.subr.bf16.mxu0 %v872
    %1438 = vmatpush1.bf16.msra.mxu0 %v871
    %1439 = vmatprep.subr.bf16.mxu0 %v876
    %1440 = vmatpush1.bf16.msra.mxu0 %v875
    %1441 = vmatprep.subr.bf16.mxu0 %v880
    %1442 = vmatpush1.bf16.msra.mxu0 %v879
    %1443 = vmatprep.subr.bf16.mxu0 %v884
    %1444 = vmatpush1.bf16.msra.mxu0 %v883
    %1445 = vmatprep.subr.bf16.mxu0 %v888
    %1446 = vmatpush1.bf16.msra.mxu0 %v887
    %1447 = vmatprep.subr.bf16.mxu0 0
    %1448 = vmatpush1.bf16.msra.mxu0 0
    %1449 = vmatprep.subr.bf16.mxu0 0
    %1450 = vmatpush1.bf16.msra.mxu0 0
    %1451 = vmatprep.subr.bf16.mxu0 0
    %1452 = vmatpush1.bf16.msra.mxu0 0
    %1453 = vmatprep.subr.bf16.mxu0 0
    %1454 = vmatpush1.bf16.msra.mxu0 0
    %1455 = vmatprep.subr.bf16.mxu0 0
    %1456 = vmatpush1.bf16.msra.mxu0 0
    %1457 = vmatprep.subr.bf16.mxu0 0
    %1458 = vmatpush1.bf16.msra.mxu0 0
    %1459 = vmatprep.subr.bf16.mxu0 0
    %1460 = vmatpush1.bf16.msra.mxu0 0
    %1461 = vmatprep.subr.bf16.mxu0 0
    %1462 = vmatpush1.bf16.msra.mxu0 0
    %1463 = vmatprep.mubr.bf16.mxu0 0
    %1464 = vmatmul.mubr.bf16.gmra.mrb[0].mxu0 %v1374
    %v1465 = vpop.f32.mrb[0].mxu0
    %v1466 = vadd.f32 0.0, %v1465
    %v1467 = vpop.f32.mrb[0].mxu0
    %v1468 = vadd.f32 0.0, %v1467
    %v1469 = vpop.f32.mrb[0].mxu0
    %v1470 = vadd.f32 0.0, %v1469
    %v1471 = vpop.f32.mrb[0].mxu0
    %v1472 = vadd.f32 0.0, %v1471
    %1473 = vdwg.mxu0
    %v1474 = vadd.f32 %v1380, %v1423
    %v1475 = vadd.f32 %v1381, %v1425
    %v1476 = vadd.f32 %v1382, %v1466
    %v1477 = vadd.f32 %v1383, %v1468
    %v1478 = vadd.f32 %v1384, %v1427
    %v1479 = vadd.f32 %v1385, %v1429
    %v1480 = vadd.f32 %v1386, %v1470
    %v1481 = vadd.f32 %v1387, %v1472
    %v1482 = vxor.u32 %v1474, 2147483648
    %v1483 = vxor.u32 %v1475, 2147483648
    %v1484 = vxor.u32 %v1476, 2147483648
    %v1485 = vxor.u32 %v1478, 2147483648
    %v1486 = vxor.u32 %v1479, 2147483648
    %v1487 = vxor.u32 %v1480, 2147483648
    %v1488 = vmul.f32 %v1482, 1.442695
    %v1489 = vpow.pop %v1488
    %v1490 = vmul.f32 %v1483, 1.442695
    %v1491 = vpow.pop %v1490
    %v1492 = vmul.f32 %v1484, 1.442695
    %v1493 = vpow.pop %v1492
    %v1494 = vmul.f32 %v1485, 1.442695
    %v1495 = vpow.pop %v1494
    %v1496 = vmul.f32 %v1486, 1.442695
    %v1497 = vpow.pop %v1496
    %v1498 = vmul.f32 %v1487, 1.442695
    %v1499 = vpow.pop %v1498
    %v1500 = vadd.f32 %v1489, 1.0
    %v1501 = vadd.f32 %v1491, 1.0
    %v1502 = vadd.f32 %v1493, 1.0
    %v1503 = vadd.f32 %v1495, 1.0
    %v1504 = vadd.f32 %v1497, 1.0
    %v1505 = vadd.f32 %v1499, 1.0
    %v1506 = vrcp.pop %v1500
    %v1507 = vmul.f32 1.0, %v1506
    %v1508 = vrcp.pop %v1501
    %v1509 = vmul.f32 1.0, %v1508
    %v1510 = vrcp.pop %v1502
    %v1511 = vmul.f32 1.0, %v1510
    %v1512 = vrcp.pop %v1503
    %v1513 = vmul.f32 1.0, %v1512
    %v1514 = vrcp.pop %v1504
    %v1515 = vmul.f32 1.0, %v1514
    %v1516 = vrcp.pop %v1505
    %v1517 = vmul.f32 1.0, %v1516
    %v1518 = vtanh.pop %v1477
    %v1519 = vtanh.pop %v1481
    %v1520 = vmul.f32 %v1509, %v1368
    %v1521 = vmul.f32 %v1515, %v1369
    %v1522 = vmul.f32 %v1507, %v1518
    %v1523 = vmul.f32 %v1513, %v1519
    %v1524 = vadd.f32 %v1520, %v1522
    %v1525 = vadd.f32 %v1521, %v1523
    %v1526 = vtanh.pop %v1524
    %v1527 = vtanh.pop %v1525
    %v1528 = vmul.f32 %v1511, %v1526
    %v1529 = vmul.f32 %v1517, %v1527
    %v1530 = vpack.c.bf16 %v1529, %v1528
    %s1531 = scalar_lea.vmem [#allocation3], 24
    %1532 = vst [vmem:[%s1531] sm:$0xff] %v1530
    %s1533 = smul.u32 8, 4
    %s1534 = smul.addr %s1533, 8
    %s1535 = scalar_lea.vmem [#allocation2], %s1534
    %v1536 = vld [vmem:[%s1535] sm:$0xff]
    %v1537 = vld [vmem:[%s1535 + $0x8] sm:$0xff]
    %v1538 = vld [vmem:[%s1535 + $0x10] sm:$0xff]
    %v1539 = vld [vmem:[%s1535 + $0x18] sm:$0xff]
    %v1540 = vld [vmem:[%s1535 + $0x20] sm:$0xff]
    %v1541 = vld [vmem:[%s1535 + $0x28] sm:$0xff]
    %v1542 = vld [vmem:[%s1535 + $0x30] sm:$0xff]
    %v1543 = vld [vmem:[%s1535 + $0x38] sm:$0xff]
    %1544 = vmatprep.subr.bf16.mxu0 %v858
    %1545 = vmatpush1.bf16.msra.mxu0 %v857
    %1546 = vmatprep.subr.bf16.mxu0 %v862
    %1547 = vmatpush1.bf16.msra.mxu0 %v861
    %1548 = vmatprep.subr.bf16.mxu0 %v866
    %1549 = vmatpush1.bf16.msra.mxu0 %v865
    %1550 = vmatprep.subr.bf16.mxu0 %v870
    %1551 = vmatpush1.bf16.msra.mxu0 %v869
    %1552 = vmatprep.subr.bf16.mxu0 %v874
    %1553 = vmatpush1.bf16.msra.mxu0 %v873
    %1554 = vmatprep.subr.bf16.mxu0 %v878
    %1555 = vmatpush1.bf16.msra.mxu0 %v877
    %1556 = vmatprep.subr.bf16.mxu0 %v882
    %1557 = vmatpush1.bf16.msra.mxu0 %v881
    %1558 = vmatprep.subr.bf16.mxu0 %v886
    %1559 = vmatpush1.bf16.msra.mxu0 %v885
    %1560 = vmatprep.subr.bf16.mxu0 0
    %1561 = vmatpush1.bf16.msra.mxu0 0
    %1562 = vmatprep.subr.bf16.mxu0 0
    %1563 = vmatpush1.bf16.msra.mxu0 0
    %1564 = vmatprep.subr.bf16.mxu0 0
    %1565 = vmatpush1.bf16.msra.mxu0 0
    %1566 = vmatprep.subr.bf16.mxu0 0
    %1567 = vmatpush1.bf16.msra.mxu0 0
    %1568 = vmatprep.subr.bf16.mxu0 0
    %1569 = vmatpush1.bf16.msra.mxu0 0
    %1570 = vmatprep.subr.bf16.mxu0 0
    %1571 = vmatpush1.bf16.msra.mxu0 0
    %1572 = vmatprep.subr.bf16.mxu0 0
    %1573 = vmatpush1.bf16.msra.mxu0 0
    %1574 = vmatprep.subr.bf16.mxu0 0
    %1575 = vmatpush1.bf16.msra.mxu0 0
    %1576 = vmatprep.mubr.bf16.mxu0 0
    %1577 = vmatmul.mubr.bf16.gmra.mrb[0].mxu0 %v1530
    %v1578 = vpop.f32.mrb[0].mxu0
    %v1579 = vadd.f32 0.0, %v1578
    %v1580 = vpop.f32.mrb[0].mxu0
    %v1581 = vadd.f32 0.0, %v1580
    %v1582 = vpop.f32.mrb[0].mxu0
    %v1583 = vadd.f32 0.0, %v1582
    %v1584 = vpop.f32.mrb[0].mxu0
    %v1585 = vadd.f32 0.0, %v1584
    %1586 = vdwg.mxu0
    %1587 = vmatprep.subr.bf16.mxu0 %v860
    %1588 = vmatpush1.bf16.msra.mxu0 %v859
    %1589 = vmatprep.subr.bf16.mxu0 %v864
    %1590 = vmatpush1.bf16.msra.mxu0 %v863
    %1591 = vmatprep.subr.bf16.mxu0 %v868
    %1592 = vmatpush1.bf16.msra.mxu0 %v867
    %1593 = vmatprep.subr.bf16.mxu0 %v872
    %1594 = vmatpush1.bf16.msra.mxu0 %v871
    %1595 = vmatprep.subr.bf16.mxu0 %v876
    %1596 = vmatpush1.bf16.msra.mxu0 %v875
    %1597 = vmatprep.subr.bf16.mxu0 %v880
    %1598 = vmatpush1.bf16.msra.mxu0 %v879
    %1599 = vmatprep.subr.bf16.mxu0 %v884
    %1600 = vmatpush1.bf16.msra.mxu0 %v883
    %1601 = vmatprep.subr.bf16.mxu0 %v888
    %1602 = vmatpush1.bf16.msra.mxu0 %v887
    %1603 = vmatprep.subr.bf16.mxu0 0
    %1604 = vmatpush1.bf16.msra.mxu0 0
    %1605 = vmatprep.subr.bf16.mxu0 0
    %1606 = vmatpush1.bf16.msra.mxu0 0
    %1607 = vmatprep.subr.bf16.mxu0 0
    %1608 = vmatpush1.bf16.msra.mxu0 0
    %1609 = vmatprep.subr.bf16.mxu0 0
    %1610 = vmatpush1.bf16.msra.mxu0 0
    %1611 = vmatprep.subr.bf16.mxu0 0
    %1612 = vmatpush1.bf16.msra.mxu0 0
    %1613 = vmatprep.subr.bf16.mxu0 0
    %1614 = vmatpush1.bf16.msra.mxu0 0
    %1615 = vmatprep.subr.bf16.mxu0 0
    %1616 = vmatpush1.bf16.msra.mxu0 0
    %1617 = vmatprep.subr.bf16.mxu0 0
    %1618 = vmatpush1.bf16.msra.mxu0 0
    %1619 = vmatprep.mubr.bf16.mxu0 0
    %1620 = vmatmul.mubr.bf16.gmra.mrb[0].mxu0 %v1530
    %v1621 = vpop.f32.mrb[0].mxu0
    %v1622 = vadd.f32 0.0, %v1621
    %v1623 = vpop.f32.mrb[0].mxu0
    %v1624 = vadd.f32 0.0, %v1623
    %v1625 = vpop.f32.mrb[0].mxu0
    %v1626 = vadd.f32 0.0, %v1625
    %v1627 = vpop.f32.mrb[0].mxu0
    %v1628 = vadd.f32 0.0, %v1627
    %1629 = vdwg.mxu0
    %v1630 = vadd.f32 %v1536, %v1579
    %v1631 = vadd.f32 %v1537, %v1581
    %v1632 = vadd.f32 %v1538, %v1622
    %v1633 = vadd.f32 %v1539, %v1624
    %v1634 = vadd.f32 %v1540, %v1583
    %v1635 = vadd.f32 %v1541, %v1585
    %v1636 = vadd.f32 %v1542, %v1626
    %v1637 = vadd.f32 %v1543, %v1628
    %v1638 = vxor.u32 %v1630, 2147483648
    %v1639 = vxor.u32 %v1631, 2147483648
    %v1640 = vxor.u32 %v1632, 2147483648
    %v1641 = vxor.u32 %v1634, 2147483648
    %v1642 = vxor.u32 %v1635, 2147483648
    %v1643 = vxor.u32 %v1636, 2147483648
    %v1644 = vmul.f32 %v1638, 1.442695
    %v1645 = vpow.pop %v1644
    %v1646 = vmul.f32 %v1639, 1.442695
    %v1647 = vpow.pop %v1646
    %v1648 = vmul.f32 %v1640, 1.442695
    %v1649 = vpow.pop %v1648
    %v1650 = vmul.f32 %v1641, 1.442695
    %v1651 = vpow.pop %v1650
    %v1652 = vmul.f32 %v1642, 1.442695
    %v1653 = vpow.pop %v1652
    %v1654 = vmul.f32 %v1643, 1.442695
    %v1655 = vpow.pop %v1654
    %v1656 = vadd.f32 %v1645, 1.0
    %v1657 = vadd.f32 %v1647, 1.0
    %v1658 = vadd.f32 %v1649, 1.0
    %v1659 = vadd.f32 %v1651, 1.0
    %v1660 = vadd.f32 %v1653, 1.0
    %v1661 = vadd.f32 %v1655, 1.0
    %v1662 = vrcp.pop %v1656
    %v1663 = vmul.f32 1.0, %v1662
    %v1664 = vrcp.pop %v1657
    %v1665 = vmul.f32 1.0, %v1664
    %v1666 = vrcp.pop %v1658
    %v1667 = vmul.f32 1.0, %v1666
    %v1668 = vrcp.pop %v1659
    %v1669 = vmul.f32 1.0, %v1668
    %v1670 = vrcp.pop %v1660
    %v1671 = vmul.f32 1.0, %v1670
    %v1672 = vrcp.pop %v1661
    %v1673 = vmul.f32 1.0, %v1672
    %v1674 = vtanh.pop %v1633
    %v1675 = vtanh.pop %v1637
    %v1676 = vmul.f32 %v1665, %v1524
    %v1677 = vmul.f32 %v1671, %v1525
    %v1678 = vmul.f32 %v1663, %v1674
    %v1679 = vmul.f32 %v1669, %v1675
    %v1680 = vadd.f32 %v1676, %v1678
    %v1681 = vadd.f32 %v1677, %v1679
    %v1682 = vtanh.pop %v1680
    %v1683 = vtanh.pop %v1681
    %v1684 = vmul.f32 %v1667, %v1682
    %v1685 = vmul.f32 %v1673, %v1683
    %v1686 = vpack.c.bf16 %v1685, %v1684
    %s1687 = scalar_lea.vmem [#allocation3], 32
    %1688 = vst [vmem:[%s1687] sm:$0xff] %v1686
    %s1689 = smul.u32 10, 4
    %s1690 = smul.addr %s1689, 8
    %s1691 = scalar_lea.vmem [#allocation2], %s1690
    %v1692 = vld [vmem:[%s1691] sm:$0xff]
    %v1693 = vld [vmem:[%s1691 + $0x8] sm:$0xff]
    %v1694 = vld [vmem:[%s1691 + $0x10] sm:$0xff]
    %v1695 = vld [vmem:[%s1691 + $0x18] sm:$0xff]
    %v1696 = vld [vmem:[%s1691 + $0x20] sm:$0xff]
    %v1697 = vld [vmem:[%s1691 + $0x28] sm:$0xff]
    %v1698 = vld [vmem:[%s1691 + $0x30] sm:$0xff]
    %v1699 = vld [vmem:[%s1691 + $0x38] sm:$0xff]
    %1700 = vmatprep.subr.bf16.mxu0 %v858
    %1701 = vmatpush1.bf16.msra.mxu0 %v857
    %1702 = vmatprep.subr.bf16.mxu0 %v862
    %1703 = vmatpush1.bf16.msra.mxu0 %v861
    %1704 = vmatprep.subr.bf16.mxu0 %v866
    %1705 = vmatpush1.bf16.msra.mxu0 %v865
    %1706 = vmatprep.subr.bf16.mxu0 %v870
    %1707 = vmatpush1.bf16.msra.mxu0 %v869
    %1708 = vmatprep.subr.bf16.mxu0 %v874
    %1709 = vmatpush1.bf16.msra.mxu0 %v873
    %1710 = vmatprep.subr.bf16.mxu0 %v878
    %1711 = vmatpush1.bf16.msra.mxu0 %v877
    %1712 = vmatprep.subr.bf16.mxu0 %v882
    %1713 = vmatpush1.bf16.msra.mxu0 %v881
    %1714 = vmatprep.subr.bf16.mxu0 %v886
    %1715 = vmatpush1.bf16.msra.mxu0 %v885
    %1716 = vmatprep.subr.bf16.mxu0 0
    %1717 = vmatpush1.bf16.msra.mxu0 0
    %1718 = vmatprep.subr.bf16.mxu0 0
    %1719 = vmatpush1.bf16.msra.mxu0 0
    %1720 = vmatprep.subr.bf16.mxu0 0
    %1721 = vmatpush1.bf16.msra.mxu0 0
    %1722 = vmatprep.subr.bf16.mxu0 0
    %1723 = vmatpush1.bf16.msra.mxu0 0
    %1724 = vmatprep.subr.bf16.mxu0 0
    %1725 = vmatpush1.bf16.msra.mxu0 0
    %1726 = vmatprep.subr.bf16.mxu0 0
    %1727 = vmatpush1.bf16.msra.mxu0 0
    %1728 = vmatprep.subr.bf16.mxu0 0
    %1729 = vmatpush1.bf16.msra.mxu0 0
    %1730 = vmatprep.subr.bf16.mxu0 0
    %1731 = vmatpush1.bf16.msra.mxu0 0
    %1732 = vmatprep.mubr.bf16.mxu0 0
    %1733 = vmatmul.mubr.bf16.gmra.mrb[0].mxu0 %v1686
    %v1734 = vpop.f32.mrb[0].mxu0
    %v1735 = vadd.f32 0.0, %v1734
    %v1736 = vpop.f32.mrb[0].mxu0
    %v1737 = vadd.f32 0.0, %v1736
    %v1738 = vpop.f32.mrb[0].mxu0
    %v1739 = vadd.f32 0.0, %v1738
    %v1740 = vpop.f32.mrb[0].mxu0
    %v1741 = vadd.f32 0.0, %v1740
    %1742 = vdwg.mxu0
    %1743 = vmatprep.subr.bf16.mxu0 %v860
    %1744 = vmatpush1.bf16.msra.mxu0 %v859
    %1745 = vmatprep.subr.bf16.mxu0 %v864
    %1746 = vmatpush1.bf16.msra.mxu0 %v863
    %1747 = vmatprep.subr.bf16.mxu0 %v868
    %1748 = vmatpush1.bf16.msra.mxu0 %v867
    %1749 = vmatprep.subr.bf16.mxu0 %v872
    %1750 = vmatpush1.bf16.msra.mxu0 %v871
    %1751 = vmatprep.subr.bf16.mxu0 %v876
    %1752 = vmatpush1.bf16.msra.mxu0 %v875
    %1753 = vmatprep.subr.bf16.mxu0 %v880
    %1754 = vmatpush1.bf16.msra.mxu0 %v879
    %1755 = vmatprep.subr.bf16.mxu0 %v884
    %1756 = vmatpush1.bf16.msra.mxu0 %v883
    %1757 = vmatprep.subr.bf16.mxu0 %v888
    %1758 = vmatpush1.bf16.msra.mxu0 %v887
    %1759 = vmatprep.subr.bf16.mxu0 0
    %1760 = vmatpush1.bf16.msra.mxu0 0
    %1761 = vmatprep.subr.bf16.mxu0 0
    %1762 = vmatpush1.bf16.msra.mxu0 0
    %1763 = vmatprep.subr.bf16.mxu0 0
    %1764 = vmatpush1.bf16.msra.mxu0 0
    %1765 = vmatprep.subr.bf16.mxu0 0
    %1766 = vmatpush1.bf16.msra.mxu0 0
    %1767 = vmatprep.subr.bf16.mxu0 0
    %1768 = vmatpush1.bf16.msra.mxu0 0
    %1769 = vmatprep.subr.bf16.mxu0 0
    %1770 = vmatpush1.bf16.msra.mxu0 0
    %1771 = vmatprep.subr.bf16.mxu0 0
    %1772 = vmatpush1.bf16.msra.mxu0 0
    %1773 = vmatprep.subr.bf16.mxu0 0
    %1774 = vmatpush1.bf16.msra.mxu0 0
    %1775 = vmatprep.mubr.bf16.mxu0 0
    %1776 = vmatmul.mubr.bf16.gmra.mrb[0].mxu0 %v1686
    %v1777 = vpop.f32.mrb[0].mxu0
    %v1778 = vadd.f32 0.0, %v1777
    %v1779 = vpop.f32.mrb[0].mxu0
    %v1780 = vadd.f32 0.0, %v1779
    %v1781 = vpop.f32.mrb[0].mxu0
    %v1782 = vadd.f32 0.0, %v1781
    %v1783 = vpop.f32.mrb[0].mxu0
    %v1784 = vadd.f32 0.0, %v1783
    %1785 = vdwg.mxu0
    %v1786 = vadd.f32 %v1692, %v1735
    %v1787 = vadd.f32 %v1693, %v1737
    %v1788 = vadd.f32 %v1694, %v1778
    %v1789 = vadd.f32 %v1695, %v1780
    %v1790 = vadd.f32 %v1696, %v1739
    %v1791 = vadd.f32 %v1697, %v1741
    %v1792 = vadd.f32 %v1698, %v1782
    %v1793 = vadd.f32 %v1699, %v1784
    %v1794 = vxor.u32 %v1786, 2147483648
    %v1795 = vxor.u32 %v1787, 2147483648
    %v1796 = vxor.u32 %v1788, 2147483648
    %v1797 = vxor.u32 %v1790, 2147483648
    %v1798 = vxor.u32 %v1791, 2147483648
    %v1799 = vxor.u32 %v1792, 2147483648
    %v1800 = vmul.f32 %v1794, 1.442695
    %v1801 = vpow.pop %v1800
    %v1802 = vmul.f32 %v1795, 1.442695
    %v1803 = vpow.pop %v1802
    %v1804 = vmul.f32 %v1796, 1.442695
    %v1805 = vpow.pop %v1804
    %v1806 = vmul.f32 %v1797, 1.442695
    %v1807 = vpow.pop %v1806
    %v1808 = vmul.f32 %v1798, 1.442695
    %v1809 = vpow.pop %v1808
    %v1810 = vmul.f32 %v1799, 1.442695
    %v1811 = vpow.pop %v1810
    %v1812 = vadd.f32 %v1801, 1.0
    %v1813 = vadd.f32 %v1803, 1.0
    %v1814 = vadd.f32 %v1805, 1.0
    %v1815 = vadd.f32 %v1807, 1.0
    %v1816 = vadd.f32 %v1809, 1.0
    %v1817 = vadd.f32 %v1811, 1.0
    %v1818 = vrcp.pop %v1812
    %v1819 = vmul.f32 1.0, %v1818
    %v1820 = vrcp.pop %v1813
    %v1821 = vmul.f32 1.0, %v1820
    %v1822 = vrcp.pop %v1814
    %v1823 = vmul.f32 1.0, %v1822
    %v1824 = vrcp.pop %v1815
    %v1825 = vmul.f32 1.0, %v1824
    %v1826 = vrcp.pop %v1816
    %v1827 = vmul.f32 1.0, %v1826
    %v1828 = vrcp.pop %v1817
    %v1829 = vmul.f32 1.0, %v1828
    %v1830 = vtanh.pop %v1789
    %v1831 = vtanh.pop %v1793
    %v1832 = vmul.f32 %v1821, %v1680
    %v1833 = vmul.f32 %v1827, %v1681
    %v1834 = vmul.f32 %v1819, %v1830
    %v1835 = vmul.f32 %v1825, %v1831
    %v1836 = vadd.f32 %v1832, %v1834
    %v1837 = vadd.f32 %v1833, %v1835
    %v1838 = vtanh.pop %v1836
    %v1839 = vtanh.pop %v1837
    %v1840 = vmul.f32 %v1823, %v1838
    %v1841 = vmul.f32 %v1829, %v1839
    %v1842 = vpack.c.bf16 %v1841, %v1840
    %s1843 = scalar_lea.vmem [#allocation3], 40
    %1844 = vst [vmem:[%s1843] sm:$0xff] %v1842
    %s1845 = smul.u32 12, 4
    %s1846 = smul.addr %s1845, 8
    %s1847 = scalar_lea.vmem [#allocation2], %s1846
    %v1848 = vld [vmem:[%s1847] sm:$0xff]
    %v1849 = vld [vmem:[%s1847 + $0x8] sm:$0xff]
    %v1850 = vld [vmem:[%s1847 + $0x10] sm:$0xff]
    %v1851 = vld [vmem:[%s1847 + $0x18] sm:$0xff]
    %v1852 = vld [vmem:[%s1847 + $0x20] sm:$0xff]
    %v1853 = vld [vmem:[%s1847 + $0x28] sm:$0xff]
    %v1854 = vld [vmem:[%s1847 + $0x30] sm:$0xff]
    %v1855 = vld [vmem:[%s1847 + $0x38] sm:$0xff]
    %1856 = vmatprep.subr.bf16.mxu0 %v858
    %1857 = vmatpush1.bf16.msra.mxu0 %v857
    %1858 = vmatprep.subr.bf16.mxu0 %v862
    %1859 = vmatpush1.bf16.msra.mxu0 %v861
    %1860 = vmatprep.subr.bf16.mxu0 %v866
    %1861 = vmatpush1.bf16.msra.mxu0 %v865
    %1862 = vmatprep.subr.bf16.mxu0 %v870
    %1863 = vmatpush1.bf16.msra.mxu0 %v869
    %1864 = vmatprep.subr.bf16.mxu0 %v874
    %1865 = vmatpush1.bf16.msra.mxu0 %v873
    %1866 = vmatprep.subr.bf16.mxu0 %v878
    %1867 = vmatpush1.bf16.msra.mxu0 %v877
    %1868 = vmatprep.subr.bf16.mxu0 %v882
    %1869 = vmatpush1.bf16.msra.mxu0 %v881
    %1870 = vmatprep.subr.bf16.mxu0 %v886
    %1871 = vmatpush1.bf16.msra.mxu0 %v885
    %1872 = vmatprep.subr.bf16.mxu0 0
    %1873 = vmatpush1.bf16.msra.mxu0 0
    %1874 = vmatprep.subr.bf16.mxu0 0
    %1875 = vmatpush1.bf16.msra.mxu0 0
    %1876 = vmatprep.subr.bf16.mxu0 0
    %1877 = vmatpush1.bf16.msra.mxu0 0
    %1878 = vmatprep.subr.bf16.mxu0 0
    %1879 = vmatpush1.bf16.msra.mxu0 0
    %1880 = vmatprep.subr.bf16.mxu0 0
    %1881 = vmatpush1.bf16.msra.mxu0 0
    %1882 = vmatprep.subr.bf16.mxu0 0
    %1883 = vmatpush1.bf16.msra.mxu0 0
    %1884 = vmatprep.subr.bf16.mxu0 0
    %1885 = vmatpush1.bf16.msra.mxu0 0
    %1886 = vmatprep.subr.bf16.mxu0 0
    %1887 = vmatpush1.bf16.msra.mxu0 0
    %1888 = vmatprep.mubr.bf16.mxu0 0
    %1889 = vmatmul.mubr.bf16.gmra.mrb[0].mxu0 %v1842
    %v1890 = vpop.f32.mrb[0].mxu0
    %v1891 = vadd.f32 0.0, %v1890
    %v1892 = vpop.f32.mrb[0].mxu0
    %v1893 = vadd.f32 0.0, %v1892
    %v1894 = vpop.f32.mrb[0].mxu0
    %v1895 = vadd.f32 0.0, %v1894
    %v1896 = vpop.f32.mrb[0].mxu0
    %v1897 = vadd.f32 0.0, %v1896
    %1898 = vdwg.mxu0
    %1899 = vmatprep.subr.bf16.mxu0 %v860
    %1900 = vmatpush1.bf16.msra.mxu0 %v859
    %1901 = vmatprep.subr.bf16.mxu0 %v864
    %1902 = vmatpush1.bf16.msra.mxu0 %v863
    %1903 = vmatprep.subr.bf16.mxu0 %v868
    %1904 = vmatpush1.bf16.msra.mxu0 %v867
    %1905 = vmatprep.subr.bf16.mxu0 %v872
    %1906 = vmatpush1.bf16.msra.mxu0 %v871
    %1907 = vmatprep.subr.bf16.mxu0 %v876
    %1908 = vmatpush1.bf16.msra.mxu0 %v875
    %1909 = vmatprep.subr.bf16.mxu0 %v880
    %1910 = vmatpush1.bf16.msra.mxu0 %v879
    %1911 = vmatprep.subr.bf16.mxu0 %v884
    %1912 = vmatpush1.bf16.msra.mxu0 %v883
    %1913 = vmatprep.subr.bf16.mxu0 %v888
    %1914 = vmatpush1.bf16.msra.mxu0 %v887
    %1915 = vmatprep.subr.bf16.mxu0 0
    %1916 = vmatpush1.bf16.msra.mxu0 0
    %1917 = vmatprep.subr.bf16.mxu0 0
    %1918 = vmatpush1.bf16.msra.mxu0 0
    %1919 = vmatprep.subr.bf16.mxu0 0
    %1920 = vmatpush1.bf16.msra.mxu0 0
    %1921 = vmatprep.subr.bf16.mxu0 0
    %1922 = vmatpush1.bf16.msra.mxu0 0
    %1923 = vmatprep.subr.bf16.mxu0 0
    %1924 = vmatpush1.bf16.msra.mxu0 0
    %1925 = vmatprep.subr.bf16.mxu0 0
    %1926 = vmatpush1.bf16.msra.mxu0 0
    %1927 = vmatprep.subr.bf16.mxu0 0
    %1928 = vmatpush1.bf16.msra.mxu0 0
    %1929 = vmatprep.subr.bf16.mxu0 0
    %1930 = vmatpush1.bf16.msra.mxu0 0
    %1931 = vmatprep.mubr.bf16.mxu0 0
    %1932 = vmatmul.mubr.bf16.gmra.mrb[0].mxu0 %v1842
    %v1933 = vpop.f32.mrb[0].mxu0
    %v1934 = vadd.f32 0.0, %v1933
    %v1935 = vpop.f32.mrb[0].mxu0
    %v1936 = vadd.f32 0.0, %v1935
    %v1937 = vpop.f32.mrb[0].mxu0
    %v1938 = vadd.f32 0.0, %v1937
    %v1939 = vpop.f32.mrb[0].mxu0
    %v1940 = vadd.f32 0.0, %v1939
    %1941 = vdwg.mxu0
    %v1942 = vadd.f32 %v1848, %v1891
    %v1943 = vadd.f32 %v1849, %v1893
    %v1944 = vadd.f32 %v1850, %v1934
    %v1945 = vadd.f32 %v1851, %v1936
    %v1946 = vadd.f32 %v1852, %v1895
    %v1947 = vadd.f32 %v1853, %v1897
    %v1948 = vadd.f32 %v1854, %v1938
    %v1949 = vadd.f32 %v1855, %v1940
    %v1950 = vxor.u32 %v1942, 2147483648
    %v1951 = vxor.u32 %v1943, 2147483648
    %v1952 = vxor.u32 %v1944, 2147483648
    %v1953 = vxor.u32 %v1946, 2147483648
    %v1954 = vxor.u32 %v1947, 2147483648
    %v1955 = vxor.u32 %v1948, 2147483648
    %v1956 = vmul.f32 %v1950, 1.442695
    %v1957 = vpow.pop %v1956
    %v1958 = vmul.f32 %v1951, 1.442695
    %v1959 = vpow.pop %v1958
    %v1960 = vmul.f32 %v1952, 1.442695
    %v1961 = vpow.pop %v1960
    %v1962 = vmul.f32 %v1953, 1.442695
    %v1963 = vpow.pop %v1962
    %v1964 = vmul.f32 %v1954, 1.442695
    %v1965 = vpow.pop %v1964
    %v1966 = vmul.f32 %v1955, 1.442695
    %v1967 = vpow.pop %v1966
    %v1968 = vadd.f32 %v1957, 1.0
    %v1969 = vadd.f32 %v1959, 1.0
    %v1970 = vadd.f32 %v1961, 1.0
    %v1971 = vadd.f32 %v1963, 1.0
    %v1972 = vadd.f32 %v1965, 1.0
    %v1973 = vadd.f32 %v1967, 1.0
    %v1974 = vrcp.pop %v1968
    %v1975 = vmul.f32 1.0, %v1974
    %v1976 = vrcp.pop %v1969
    %v1977 = vmul.f32 1.0, %v1976
    %v1978 = vrcp.pop %v1970
    %v1979 = vmul.f32 1.0, %v1978
    %v1980 = vrcp.pop %v1971
    %v1981 = vmul.f32 1.0, %v1980
    %v1982 = vrcp.pop %v1972
    %v1983 = vmul.f32 1.0, %v1982
    %v1984 = vrcp.pop %v1973
    %v1985 = vmul.f32 1.0, %v1984
    %v1986 = vtanh.pop %v1945
    %v1987 = vtanh.pop %v1949
    %v1988 = vmul.f32 %v1977, %v1836
    %v1989 = vmul.f32 %v1983, %v1837
    %v1990 = vmul.f32 %v1975, %v1986
    %v1991 = vmul.f32 %v1981, %v1987
    %v1992 = vadd.f32 %v1988, %v1990
    %v1993 = vadd.f32 %v1989, %v1991
    %v1994 = vtanh.pop %v1992
    %v1995 = vtanh.pop %v1993
    %v1996 = vmul.f32 %v1979, %v1994
    %v1997 = vmul.f32 %v1985, %v1995
    %v1998 = vpack.c.bf16 %v1997, %v1996
    %s1999 = scalar_lea.vmem [#allocation3], 48
    %2000 = vst [vmem:[%s1999] sm:$0xff] %v1998
    %s2001 = smul.u32 14, 4
    %s2002 = smul.addr %s2001, 8
    %s2003 = scalar_lea.vmem [#allocation2], %s2002
    %v2004 = vld [vmem:[%s2003] sm:$0xff]
    %v2005 = vld [vmem:[%s2003 + $0x8] sm:$0xff]
    %v2006 = vld [vmem:[%s2003 + $0x10] sm:$0xff]
    %v2007 = vld [vmem:[%s2003 + $0x18] sm:$0xff]
    %v2008 = vld [vmem:[%s2003 + $0x20] sm:$0xff]
    %v2009 = vld [vmem:[%s2003 + $0x28] sm:$0xff]
    %v2010 = vld [vmem:[%s2003 + $0x30] sm:$0xff]
    %v2011 = vld [vmem:[%s2003 + $0x38] sm:$0xff]
    %2012 = vmatprep.subr.bf16.mxu0 %v858
    %2013 = vmatpush1.bf16.msra.mxu0 %v857
    %2014 = vmatprep.subr.bf16.mxu0 %v862
    %2015 = vmatpush1.bf16.msra.mxu0 %v861
    %2016 = vmatprep.subr.bf16.mxu0 %v866
    %2017 = vmatpush1.bf16.msra.mxu0 %v865
    %2018 = vmatprep.subr.bf16.mxu0 %v870
    %2019 = vmatpush1.bf16.msra.mxu0 %v869
    %2020 = vmatprep.subr.bf16.mxu0 %v874
    %2021 = vmatpush1.bf16.msra.mxu0 %v873
    %2022 = vmatprep.subr.bf16.mxu0 %v878
    %2023 = vmatpush1.bf16.msra.mxu0 %v877
    %2024 = vmatprep.subr.bf16.mxu0 %v882
    %2025 = vmatpush1.bf16.msra.mxu0 %v881
    %2026 = vmatprep.subr.bf16.mxu0 %v886
    %2027 = vmatpush1.bf16.msra.mxu0 %v885
    %2028 = vmatprep.subr.bf16.mxu0 0
    %2029 = vmatpush1.bf16.msra.mxu0 0
    %2030 = vmatprep.subr.bf16.mxu0 0
    %2031 = vmatpush1.bf16.msra.mxu0 0
    %2032 = vmatprep.subr.bf16.mxu0 0
    %2033 = vmatpush1.bf16.msra.mxu0 0
    %2034 = vmatprep.subr.bf16.mxu0 0
    %2035 = vmatpush1.bf16.msra.mxu0 0
    %2036 = vmatprep.subr.bf16.mxu0 0
    %2037 = vmatpush1.bf16.msra.mxu0 0
    %2038 = vmatprep.subr.bf16.mxu0 0
    %2039 = vmatpush1.bf16.msra.mxu0 0
    %2040 = vmatprep.subr.bf16.mxu0 0
    %2041 = vmatpush1.bf16.msra.mxu0 0
    %2042 = vmatprep.subr.bf16.mxu0 0
    %2043 = vmatpush1.bf16.msra.mxu0 0
    %2044 = vmatprep.mubr.bf16.mxu0 0
    %2045 = vmatmul.mubr.bf16.gmra.mrb[0].mxu0 %v1998
    %v2046 = vpop.f32.mrb[0].mxu0
    %v2047 = vadd.f32 0.0, %v2046
    %v2048 = vpop.f32.mrb[0].mxu0
    %v2049 = vadd.f32 0.0, %v2048
    %v2050 = vpop.f32.mrb[0].mxu0
    %v2051 = vadd.f32 0.0, %v2050
    %v2052 = vpop.f32.mrb[0].mxu0
    %v2053 = vadd.f32 0.0, %v2052
    %2054 = vdwg.mxu0
    %2055 = vmatprep.subr.bf16.mxu0 %v860
    %2056 = vmatpush1.bf16.msra.mxu0 %v859
    %2057 = vmatprep.subr.bf16.mxu0 %v864
    %2058 = vmatpush1.bf16.msra.mxu0 %v863
    %2059 = vmatprep.subr.bf16.mxu0 %v868
    %2060 = vmatpush1.bf16.msra.mxu0 %v867
    %2061 = vmatprep.subr.bf16.mxu0 %v872
    %2062 = vmatpush1.bf16.msra.mxu0 %v871
    %2063 = vmatprep.subr.bf16.mxu0 %v876
    %2064 = vmatpush1.bf16.msra.mxu0 %v875
    %2065 = vmatprep.subr.bf16.mxu0 %v880
    %2066 = vmatpush1.bf16.msra.mxu0 %v879
    %2067 = vmatprep.subr.bf16.mxu0 %v884
    %2068 = vmatpush1.bf16.msra.mxu0 %v883
    %2069 = vmatprep.subr.bf16.mxu0 %v888
    %2070 = vmatpush1.bf16.msra.mxu0 %v887
    %2071 = vmatprep.subr.bf16.mxu0 0
    %2072 = vmatpush1.bf16.msra.mxu0 0
    %2073 = vmatprep.subr.bf16.mxu0 0
    %2074 = vmatpush1.bf16.msra.mxu0 0
    %2075 = vmatprep.subr.bf16.mxu0 0
    %2076 = vmatpush1.bf16.msra.mxu0 0
    %2077 = vmatprep.subr.bf16.mxu0 0
    %2078 = vmatpush1.bf16.msra.mxu0 0
    %2079 = vmatprep.subr.bf16.mxu0 0
    %2080 = vmatpush1.bf16.msra.mxu0 0
    %2081 = vmatprep.subr.bf16.mxu0 0
    %2082 = vmatpush1.bf16.msra.mxu0 0
    %2083 = vmatprep.subr.bf16.mxu0 0
    %2084 = vmatpush1.bf16.msra.mxu0 0
    %2085 = vmatprep.subr.bf16.mxu0 0
    %2086 = vmatpush1.bf16.msra.mxu0 0
    %2087 = vmatprep.mubr.bf16.mxu0 0
    %2088 = vmatmul.mubr.bf16.gmra.mrb[0].mxu0 %v1998
    %v2089 = vpop.f32.mrb[0].mxu0
    %v2090 = vadd.f32 0.0, %v2089
    %v2091 = vpop.f32.mrb[0].mxu0
    %v2092 = vadd.f32 0.0, %v2091
    %v2093 = vpop.f32.mrb[0].mxu0
    %v2094 = vadd.f32 0.0, %v2093
    %v2095 = vpop.f32.mrb[0].mxu0
    %v2096 = vadd.f32 0.0, %v2095
    %2097 = vdwg.mxu0
    %v2098 = vadd.f32 %v2004, %v2047
    %v2099 = vadd.f32 %v2005, %v2049
    %v2100 = vadd.f32 %v2006, %v2090
    %v2101 = vadd.f32 %v2007, %v2092
    %v2102 = vadd.f32 %v2008, %v2051
    %v2103 = vadd.f32 %v2009, %v2053
    %v2104 = vadd.f32 %v2010, %v2094
    %v2105 = vadd.f32 %v2011, %v2096
    %v2106 = vxor.u32 %v2098, 2147483648
    %v2107 = vxor.u32 %v2099, 2147483648
    %v2108 = vxor.u32 %v2100, 2147483648
    %v2109 = vxor.u32 %v2102, 2147483648
    %v2110 = vxor.u32 %v2103, 2147483648
    %v2111 = vxor.u32 %v2104, 2147483648
    %v2112 = vmul.f32 %v2106, 1.442695
    %v2113 = vpow.pop %v2112
    %v2114 = vmul.f32 %v2107, 1.442695
    %v2115 = vpow.pop %v2114
    %v2116 = vmul.f32 %v2108, 1.442695
    %v2117 = vpow.pop %v2116
    %v2118 = vmul.f32 %v2109, 1.442695
    %v2119 = vpow.pop %v2118
    %v2120 = vmul.f32 %v2110, 1.442695
    %v2121 = vpow.pop %v2120
    %v2122 = vmul.f32 %v2111, 1.442695
    %v2123 = vpow.pop %v2122
    %v2124 = vadd.f32 %v2113, 1.0
    %v2125 = vadd.f32 %v2115, 1.0
    %v2126 = vadd.f32 %v2117, 1.0
    %v2127 = vadd.f32 %v2119, 1.0
    %v2128 = vadd.f32 %v2121, 1.0
    %v2129 = vadd.f32 %v2123, 1.0
    %v2130 = vrcp.pop %v2124
    %v2131 = vmul.f32 1.0, %v2130
    %v2132 = vrcp.pop %v2125
    %v2133 = vmul.f32 1.0, %v2132
    %v2134 = vrcp.pop %v2126
    %v2135 = vmul.f32 1.0, %v2134
    %v2136 = vrcp.pop %v2127
    %v2137 = vmul.f32 1.0, %v2136
    %v2138 = vrcp.pop %v2128
    %v2139 = vmul.f32 1.0, %v2138
    %v2140 = vrcp.pop %v2129
    %v2141 = vmul.f32 1.0, %v2140
    %v2142 = vtanh.pop %v2101
    %v2143 = vtanh.pop %v2105
    %v2144 = vmul.f32 %v2133, %v1992
    %v2145 = vmul.f32 %v2139, %v1993
    %v2146 = vmul.f32 %v2131, %v2142
    %v2147 = vmul.f32 %v2137, %v2143
    %v2148 = vadd.f32 %v2144, %v2146
    %v2149 = vadd.f32 %v2145, %v2147
    %v2150 = vtanh.pop %v2148
    %v2151 = vtanh.pop %v2149
    %v2152 = vmul.f32 %v2135, %v2150
    %v2153 = vmul.f32 %v2141, %v2151
    %v2154 = vpack.c.bf16 %v2153, %v2152
    %s2155 = scalar_lea.vmem [#allocation3], 56
    %2156 = vst [vmem:[%s2155] sm:$0xff] %v2154
    %v2157 = vld [vmem:[#allocation3] sm:$0xff]
    %v2158 = vld [vmem:[#allocation3 + $0x8] sm:$0xff]
    %v2159 = vld [vmem:[#allocation3 + $0x10] sm:$0xff]
    %v2160 = vld [vmem:[#allocation3 + $0x18] sm:$0xff]
    %v2161 = vld [vmem:[#allocation3 + $0x20] sm:$0xff]
    %v2162 = vld [vmem:[#allocation3 + $0x28] sm:$0xff]
    %v2163 = vld [vmem:[#allocation3 + $0x30] sm:$0xff]
    %v2164 = vld [vmem:[#allocation3 + $0x38] sm:$0xff]
    %v2165 = vld [vmem:[#allocation12] sm:$0xff]
    %v2166 = vld [vmem:[#allocation12 + $0x8] sm:$0xff]
    %v2167 = vld [vmem:[#allocation12 + $0x10] sm:$0xff]
    %v2168 = vld [vmem:[#allocation12 + $0x18] sm:$0xff]
    %v2169 = vld [vmem:[#allocation12 + $0x20] sm:$0xff]
    %v2170 = vld [vmem:[#allocation12 + $0x28] sm:$0xff]
    %v2171 = vld [vmem:[#allocation12 + $0x30] sm:$0xff]
    %v2172 = vld [vmem:[#allocation12 + $0x38] sm:$0xff]
    %v2173 = vld [vmem:[#allocation12 + $0x40] sm:$0xff]
    %v2174 = vld [vmem:[#allocation12 + $0x48] sm:$0xff]
    %v2175 = vld [vmem:[#allocation12 + $0x50] sm:$0xff]
    %v2176 = vld [vmem:[#allocation12 + $0x58] sm:$0xff]
    %v2177 = vld [vmem:[#allocation12 + $0x60] sm:$0xff]
    %v2178 = vld [vmem:[#allocation12 + $0x68] sm:$0xff]
    %v2179 = vld [vmem:[#allocation12 + $0x70] sm:$0xff]
    %v2180 = vld [vmem:[#allocation12 + $0x78] sm:$0xff]
    %v2181 = vld [vmem:[#allocation12 + $0x80] sm:$0xff]
    %v2182 = vld [vmem:[#allocation12 + $0x88] sm:$0xff]
    %v2183 = vld [vmem:[#allocation12 + $0x90] sm:$0xff]
    %v2184 = vld [vmem:[#allocation12 + $0x98] sm:$0xff]
    %v2185 = vld [vmem:[#allocation12 + $0xa0] sm:$0xff]
    %v2186 = vld [vmem:[#allocation12 + $0xa8] sm:$0xff]
    %v2187 = vld [vmem:[#allocation12 + $0xb0] sm:$0xff]
    %v2188 = vld [vmem:[#allocation12 + $0xb8] sm:$0xff]
    %v2189 = vld [vmem:[#allocation12 + $0xc0] sm:$0xff]
    %v2190 = vld [vmem:[#allocation12 + $0xc8] sm:$0xff]
    %v2191 = vld [vmem:[#allocation12 + $0xd0] sm:$0xff]
    %v2192 = vld [vmem:[#allocation12 + $0xd8] sm:$0xff]
    %v2193 = vld [vmem:[#allocation12 + $0xe0] sm:$0xff]
    %v2194 = vld [vmem:[#allocation12 + $0xe8] sm:$0xff]
    %v2195 = vld [vmem:[#allocation12 + $0xf0] sm:$0xff]
    %v2196 = vld [vmem:[#allocation12 + $0xf8] sm:$0xff]
    %v2197 = vld [vmem:[#allocation15] sm:$0xf]
    %v2199 = vlaneseq
    %v2200 = vshrl.u32 %v2199, 7
    %v2201 = vsub.s32 0, %v2200
    %v2202 = vrot.slane %v2197, %v2201
    %v2203 = vlaneseq
    %v2204 = vshrl.u32 %v2203, 7
    %v2205 = vsub.s32 1, %v2204
    %v2206 = vrot.slane %v2197, %v2205
    %v2207 = vlaneseq
    %v2208 = vshrl.u32 %v2207, 7
    %v2209 = vsub.s32 2, %v2208
    %v2210 = vrot.slane %v2197, %v2209
    %v2211 = vlaneseq
    %v2212 = vshrl.u32 %v2211, 7
    %v2213 = vsub.s32 3, %v2212
    %v2214 = vrot.slane %v2197, %v2213
    %v2251 = vunpack.c.l.b16 %v2165
    %v2252 = vunpack.c.h.b16 %v2165
    %v2253 = vunpack.c.l.b16 %v2166
    %v2254 = vunpack.c.h.b16 %v2166
    %v2255 = vunpack.c.l.b16 %v2167
    %v2256 = vunpack.c.h.b16 %v2167
    %v2257 = vunpack.c.l.b16 %v2168
    %v2258 = vunpack.c.h.b16 %v2168
    %v2259 = vunpack.c.l.b16 %v2169
    %v2260 = vunpack.c.h.b16 %v2169
    %v2261 = vunpack.c.l.b16 %v2170
    %v2262 = vunpack.c.h.b16 %v2170
    %v2263 = vunpack.c.l.b16 %v2171
    %v2264 = vunpack.c.h.b16 %v2171
    %v2265 = vunpack.c.l.b16 %v2172
    %v2266 = vunpack.c.h.b16 %v2172
    %v2267 = vunpack.c.l.b16 %v2173
    %v2268 = vunpack.c.h.b16 %v2173
    %v2269 = vunpack.c.l.b16 %v2174
    %v2270 = vunpack.c.h.b16 %v2174
    %v2271 = vunpack.c.l.b16 %v2175
    %v2272 = vunpack.c.h.b16 %v2175
    %v2273 = vunpack.c.l.b16 %v2176
    %v2274 = vunpack.c.h.b16 %v2176
    %v2275 = vunpack.c.l.b16 %v2177
    %v2276 = vunpack.c.h.b16 %v2177
    %v2277 = vunpack.c.l.b16 %v2178
    %v2278 = vunpack.c.h.b16 %v2178
    %v2279 = vunpack.c.l.b16 %v2179
    %v2280 = vunpack.c.h.b16 %v2179
    %v2281 = vunpack.c.l.b16 %v2180
    %v2282 = vunpack.c.h.b16 %v2180
    %v2283 = vunpack.c.l.b16 %v2181
    %v2284 = vunpack.c.h.b16 %v2181
    %v2285 = vunpack.c.l.b16 %v2182
    %v2286 = vunpack.c.h.b16 %v2182
    %v2287 = vunpack.c.l.b16 %v2183
    %v2288 = vunpack.c.h.b16 %v2183
    %v2289 = vunpack.c.l.b16 %v2184
    %v2290 = vunpack.c.h.b16 %v2184
    %v2291 = vunpack.c.l.b16 %v2185
    %v2292 = vunpack.c.h.b16 %v2185
    %v2293 = vunpack.c.l.b16 %v2186
    %v2294 = vunpack.c.h.b16 %v2186
    %v2295 = vunpack.c.l.b16 %v2187
    %v2296 = vunpack.c.h.b16 %v2187
    %v2297 = vunpack.c.l.b16 %v2188
    %v2298 = vunpack.c.h.b16 %v2188
    %v2299 = vunpack.c.l.b16 %v2189
    %v2300 = vunpack.c.h.b16 %v2189
    %v2301 = vunpack.c.l.b16 %v2190
    %v2302 = vunpack.c.h.b16 %v2190
    %v2303 = vunpack.c.l.b16 %v2191
    %v2304 = vunpack.c.h.b16 %v2191
    %v2305 = vunpack.c.l.b16 %v2192
    %v2306 = vunpack.c.h.b16 %v2192
    %v2307 = vunpack.c.l.b16 %v2193
    %v2308 = vunpack.c.h.b16 %v2193
    %v2309 = vunpack.c.l.b16 %v2194
    %v2310 = vunpack.c.h.b16 %v2194
    %v2311 = vunpack.c.l.b16 %v2195
    %v2312 = vunpack.c.h.b16 %v2195
    %v2313 = vunpack.c.l.b16 %v2196
    %v2314 = vunpack.c.h.b16 %v2196
    %v2315 = vpack.c.b16 %v2255, %v2251
    %v2316 = vpack.c.b16 %v2256, %v2252
    %v2317 = vpack.c.b16 %v2257, %v2253
    %v2318 = vpack.c.b16 %v2258, %v2254
    %v2319 = vpack.c.b16 %v2263, %v2259
    %v2320 = vpack.c.b16 %v2264, %v2260
    %v2321 = vpack.c.b16 %v2265, %v2261
    %v2322 = vpack.c.b16 %v2266, %v2262
    %v2323 = vpack.c.b16 %v2271, %v2267
    %v2324 = vpack.c.b16 %v2272, %v2268
    %v2325 = vpack.c.b16 %v2273, %v2269
    %v2326 = vpack.c.b16 %v2274, %v2270
    %v2327 = vpack.c.b16 %v2279, %v2275
    %v2328 = vpack.c.b16 %v2280, %v2276
    %v2329 = vpack.c.b16 %v2281, %v2277
    %v2330 = vpack.c.b16 %v2282, %v2278
    %v2331 = vpack.c.b16 %v2287, %v2283
    %v2332 = vpack.c.b16 %v2288, %v2284
    %v2333 = vpack.c.b16 %v2289, %v2285
    %v2334 = vpack.c.b16 %v2290, %v2286
    %v2335 = vpack.c.b16 %v2295, %v2291
    %v2336 = vpack.c.b16 %v2296, %v2292
    %v2337 = vpack.c.b16 %v2297, %v2293
    %v2338 = vpack.c.b16 %v2298, %v2294
    %v2339 = vpack.c.b16 %v2303, %v2299
    %v2340 = vpack.c.b16 %v2304, %v2300
    %v2341 = vpack.c.b16 %v2305, %v2301
    %v2342 = vpack.c.b16 %v2306, %v2302
    %v2343 = vpack.c.b16 %v2311, %v2307
    %v2344 = vpack.c.b16 %v2312, %v2308
    %v2345 = vpack.c.b16 %v2313, %v2309
    %v2346 = vpack.c.b16 %v2314, %v2310
    %2379 = vmatprep.subr.bf16.mxu0 %v2316
    %2380 = vmatpush1.bf16.msra.mxu0 %v2315
    %2381 = vmatprep.subr.bf16.mxu0 %v2320
    %2382 = vmatpush1.bf16.msra.mxu0 %v2319
    %2383 = vmatprep.subr.bf16.mxu0 %v2324
    %2384 = vmatpush1.bf16.msra.mxu0 %v2323
    %2385 = vmatprep.subr.bf16.mxu0 %v2328
    %2386 = vmatpush1.bf16.msra.mxu0 %v2327
    %2387 = vmatprep.subr.bf16.mxu0 %v2332
    %2388 = vmatpush1.bf16.msra.mxu0 %v2331
    %2389 = vmatprep.subr.bf16.mxu0 %v2336
    %2390 = vmatpush1.bf16.msra.mxu0 %v2335
    %2391 = vmatprep.subr.bf16.mxu0 %v2340
    %2392 = vmatpush1.bf16.msra.mxu0 %v2339
    %2393 = vmatprep.subr.bf16.mxu0 %v2344
    %2394 = vmatpush1.bf16.msra.mxu0 %v2343
    %2395 = vmatprep.subr.bf16.mxu0 0
    %2396 = vmatpush1.bf16.msra.mxu0 0
    %2397 = vmatprep.subr.bf16.mxu0 0
    %2398 = vmatpush1.bf16.msra.mxu0 0
    %2399 = vmatprep.subr.bf16.mxu0 0
    %2400 = vmatpush1.bf16.msra.mxu0 0
    %2401 = vmatprep.subr.bf16.mxu0 0
    %2402 = vmatpush1.bf16.msra.mxu0 0
    %2403 = vmatprep.subr.bf16.mxu0 0
    %2404 = vmatpush1.bf16.msra.mxu0 0
    %2405 = vmatprep.subr.bf16.mxu0 0
    %2406 = vmatpush1.bf16.msra.mxu0 0
    %2407 = vmatprep.subr.bf16.mxu0 0
    %2408 = vmatpush1.bf16.msra.mxu0 0
    %2409 = vmatprep.subr.bf16.mxu0 0
    %2410 = vmatpush1.bf16.msra.mxu0 0
    %2411 = vmatprep.mubr.bf16.mxu0 0
    %2412 = vmatmul.mubr.bf16.gmra.mrb[0].mxu0 %v2157
    %v2413 = vpop.f32.mrb[0].mxu0
    %v2414 = vadd.f32 %v2202, %v2413
    %v2415 = vpop.f32.mrb[0].mxu0
    %v2416 = vadd.f32 %v2206, %v2415
    %v2417 = vpop.f32.mrb[0].mxu0
    %v2418 = vadd.f32 %v2202, %v2417
    %v2419 = vpop.f32.mrb[0].mxu0
    %v2420 = vadd.f32 %v2206, %v2419
    %2421 = vmatprep.mubr.bf16.mxu0 0
    %2422 = vmatmul.mubr.bf16.gmra.mrb[0].mxu0 %v2158
    %v2423 = vpop.f32.mrb[0].mxu0
    %v2424 = vadd.f32 %v2202, %v2423
    %v2425 = vpop.f32.mrb[0].mxu0
    %v2426 = vadd.f32 %v2206, %v2425
    %v2427 = vpop.f32.mrb[0].mxu0
    %v2428 = vadd.f32 %v2202, %v2427
    %v2429 = vpop.f32.mrb[0].mxu0
    %v2430 = vadd.f32 %v2206, %v2429
    %2431 = vmatprep.mubr.bf16.mxu0 0
    %2432 = vmatmul.mubr.bf16.gmra.mrb[0].mxu0 %v2159
    %v2433 = vpop.f32.mrb[0].mxu0
    %v2434 = vadd.f32 %v2202, %v2433
    %v2435 = vpop.f32.mrb[0].mxu0
    %v2436 = vadd.f32 %v2206, %v2435
    %v2437 = vpop.f32.mrb[0].mxu0
    %v2438 = vadd.f32 %v2202, %v2437
    %v2439 = vpop.f32.mrb[0].mxu0
    %v2440 = vadd.f32 %v2206, %v2439
    %2441 = vmatprep.mubr.bf16.mxu0 0
    %2442 = vmatmul.mubr.bf16.gmra.mrb[0].mxu0 %v2160
    %v2443 = vpop.f32.mrb[0].mxu0
    %v2444 = vadd.f32 %v2202, %v2443
    %v2445 = vpop.f32.mrb[0].mxu0
    %v2446 = vadd.f32 %v2206, %v2445
    %v2447 = vpop.f32.mrb[0].mxu0
    %v2448 = vadd.f32 %v2202, %v2447
    %v2449 = vpop.f32.mrb[0].mxu0
    %v2450 = vadd.f32 %v2206, %v2449
    %2451 = vmatprep.mubr.bf16.mxu0 0
    %2452 = vmatmul.mubr.bf16.gmra.mrb[0].mxu0 %v2161
    %v2453 = vpop.f32.mrb[0].mxu0
    %v2454 = vadd.f32 %v2202, %v2453
    %v2455 = vpop.f32.mrb[0].mxu0
    %v2456 = vadd.f32 %v2206, %v2455
    %v2457 = vpop.f32.mrb[0].mxu0
    %v2458 = vadd.f32 %v2202, %v2457
    %v2459 = vpop.f32.mrb[0].mxu0
    %v2460 = vadd.f32 %v2206, %v2459
    %2461 = vmatprep.mubr.bf16.mxu0 0
    %2462 = vmatmul.mubr.bf16.gmra.mrb[0].mxu0 %v2162
    %v2463 = vpop.f32.mrb[0].mxu0
    %v2464 = vadd.f32 %v2202, %v2463
    %v2465 = vpop.f32.mrb[0].mxu0
    %v2466 = vadd.f32 %v2206, %v2465
    %v2467 = vpop.f32.mrb[0].mxu0
    %v2468 = vadd.f32 %v2202, %v2467
    %v2469 = vpop.f32.mrb[0].mxu0
    %v2470 = vadd.f32 %v2206, %v2469
    %2471 = vmatprep.mubr.bf16.mxu0 0
    %2472 = vmatmul.mubr.bf16.gmra.mrb[0].mxu0 %v2163
    %v2473 = vpop.f32.mrb[0].mxu0
    %v2474 = vadd.f32 %v2202, %v2473
    %v2475 = vpop.f32.mrb[0].mxu0
    %v2476 = vadd.f32 %v2206, %v2475
    %v2477 = vpop.f32.mrb[0].mxu0
    %v2478 = vadd.f32 %v2202, %v2477
    %v2479 = vpop.f32.mrb[0].mxu0
    %v2480 = vadd.f32 %v2206, %v2479
    %2481 = vmatprep.mubr.bf16.mxu0 0
    %2482 = vmatmul.mubr.bf16.gmra.mrb[0].mxu0 %v2164
    %v2483 = vpop.f32.mrb[0].mxu0
    %v2484 = vadd.f32 %v2202, %v2483
    %v2485 = vpop.f32.mrb[0].mxu0
    %v2486 = vadd.f32 %v2206, %v2485
    %v2487 = vpop.f32.mrb[0].mxu0
    %v2488 = vadd.f32 %v2202, %v2487
    %v2489 = vpop.f32.mrb[0].mxu0
    %v2490 = vadd.f32 %v2206, %v2489
    %2491 = vdwg.mxu0
    %2492 = vmatprep.subr.bf16.mxu0 %v2318
    %2493 = vmatpush1.bf16.msra.mxu0 %v2317
    %2494 = vmatprep.subr.bf16.mxu0 %v2322
    %2495 = vmatpush1.bf16.msra.mxu0 %v2321
    %2496 = vmatprep.subr.bf16.mxu0 %v2326
    %2497 = vmatpush1.bf16.msra.mxu0 %v2325
    %2498 = vmatprep.subr.bf16.mxu0 %v2330
    %2499 = vmatpush1.bf16.msra.mxu0 %v2329
    %2500 = vmatprep.subr.bf16.mxu0 %v2334
    %2501 = vmatpush1.bf16.msra.mxu0 %v2333
    %2502 = vmatprep.subr.bf16.mxu0 %v2338
    %2503 = vmatpush1.bf16.msra.mxu0 %v2337
    %2504 = vmatprep.subr.bf16.mxu0 %v2342
    %2505 = vmatpush1.bf16.msra.mxu0 %v2341
    %2506 = vmatprep.subr.bf16.mxu0 %v2346
    %2507 = vmatpush1.bf16.msra.mxu0 %v2345
    %2508 = vmatprep.subr.bf16.mxu0 0
    %2509 = vmatpush1.bf16.msra.mxu0 0
    %2510 = vmatprep.subr.bf16.mxu0 0
    %2511 = vmatpush1.bf16.msra.mxu0 0
    %2512 = vmatprep.subr.bf16.mxu0 0
    %2513 = vmatpush1.bf16.msra.mxu0 0
    %2514 = vmatprep.subr.bf16.mxu0 0
    %2515 = vmatpush1.bf16.msra.mxu0 0
    %2516 = vmatprep.subr.bf16.mxu0 0
    %2517 = vmatpush1.bf16.msra.mxu0 0
    %2518 = vmatprep.subr.bf16.mxu0 0
    %2519 = vmatpush1.bf16.msra.mxu0 0
    %2520 = vmatprep.subr.bf16.mxu0 0
    %2521 = vmatpush1.bf16.msra.mxu0 0
    %2522 = vmatprep.subr.bf16.mxu0 0
    %2523 = vmatpush1.bf16.msra.mxu0 0
    %2524 = vmatprep.mubr.bf16.mxu0 0
    %2525 = vmatmul.mubr.bf16.gmra.mrb[0].mxu0 %v2157
    %v2526 = vpop.f32.mrb[0].mxu0
    %v2527 = vadd.f32 %v2210, %v2526
    %v2528 = vpop.f32.mrb[0].mxu0
    %v2529 = vadd.f32 %v2214, %v2528
    %v2530 = vpop.f32.mrb[0].mxu0
    %v2531 = vadd.f32 %v2210, %v2530
    %v2532 = vpop.f32.mrb[0].mxu0
    %v2533 = vadd.f32 %v2214, %v2532
    %2534 = vmatprep.mubr.bf16.mxu0 0
    %2535 = vmatmul.mubr.bf16.gmra.mrb[0].mxu0 %v2158
    %v2536 = vpop.f32.mrb[0].mxu0
    %v2537 = vadd.f32 %v2210, %v2536
    %v2538 = vpop.f32.mrb[0].mxu0
    %v2539 = vadd.f32 %v2214, %v2538
    %v2540 = vpop.f32.mrb[0].mxu0
    %v2541 = vadd.f32 %v2210, %v2540
    %v2542 = vpop.f32.mrb[0].mxu0
    %v2543 = vadd.f32 %v2214, %v2542
    %2544 = vmatprep.mubr.bf16.mxu0 0
    %2545 = vmatmul.mubr.bf16.gmra.mrb[0].mxu0 %v2159
    %v2546 = vpop.f32.mrb[0].mxu0
    %v2547 = vadd.f32 %v2210, %v2546
    %v2548 = vpop.f32.mrb[0].mxu0
    %v2549 = vadd.f32 %v2214, %v2548
    %v2550 = vpop.f32.mrb[0].mxu0
    %v2551 = vadd.f32 %v2210, %v2550
    %v2552 = vpop.f32.mrb[0].mxu0
    %v2553 = vadd.f32 %v2214, %v2552
    %2554 = vmatprep.mubr.bf16.mxu0 0
    %2555 = vmatmul.mubr.bf16.gmra.mrb[0].mxu0 %v2160
    %v2556 = vpop.f32.mrb[0].mxu0
    %v2557 = vadd.f32 %v2210, %v2556
    %v2558 = vpop.f32.mrb[0].mxu0
    %v2559 = vadd.f32 %v2214, %v2558
    %v2560 = vpop.f32.mrb[0].mxu0
    %v2561 = vadd.f32 %v2210, %v2560
    %v2562 = vpop.f32.mrb[0].mxu0
    %v2563 = vadd.f32 %v2214, %v2562
    %2564 = vmatprep.mubr.bf16.mxu0 0
    %2565 = vmatmul.mubr.bf16.gmra.mrb[0].mxu0 %v2161
    %v2566 = vpop.f32.mrb[0].mxu0
    %v2567 = vadd.f32 %v2210, %v2566
    %v2568 = vpop.f32.mrb[0].mxu0
    %v2569 = vadd.f32 %v2214, %v2568
    %v2570 = vpop.f32.mrb[0].mxu0
    %v2571 = vadd.f32 %v2210, %v2570
    %v2572 = vpop.f32.mrb[0].mxu0
    %v2573 = vadd.f32 %v2214, %v2572
    %2574 = vmatprep.mubr.bf16.mxu0 0
    %2575 = vmatmul.mubr.bf16.gmra.mrb[0].mxu0 %v2162
    %v2576 = vpop.f32.mrb[0].mxu0
    %v2577 = vadd.f32 %v2210, %v2576
    %v2578 = vpop.f32.mrb[0].mxu0
    %v2579 = vadd.f32 %v2214, %v2578
    %v2580 = vpop.f32.mrb[0].mxu0
    %v2581 = vadd.f32 %v2210, %v2580
    %v2582 = vpop.f32.mrb[0].mxu0
    %v2583 = vadd.f32 %v2214, %v2582
    %2584 = vmatprep.mubr.bf16.mxu0 0
    %2585 = vmatmul.mubr.bf16.gmra.mrb[0].mxu0 %v2163
    %v2586 = vpop.f32.mrb[0].mxu0
    %v2587 = vadd.f32 %v2210, %v2586
    %v2588 = vpop.f32.mrb[0].mxu0
    %v2589 = vadd.f32 %v2214, %v2588
    %v2590 = vpop.f32.mrb[0].mxu0
    %v2591 = vadd.f32 %v2210, %v2590
    %v2592 = vpop.f32.mrb[0].mxu0
    %v2593 = vadd.f32 %v2214, %v2592
    %2594 = vmatprep.mubr.bf16.mxu0 0
    %2595 = vmatmul.mubr.bf16.gmra.mrb[0].mxu0 %v2164
    %v2596 = vpop.f32.mrb[0].mxu0
    %v2597 = vadd.f32 %v2210, %v2596
    %v2598 = vpop.f32.mrb[0].mxu0
    %v2599 = vadd.f32 %v2214, %v2598
    %v2600 = vpop.f32.mrb[0].mxu0
    %v2601 = vadd.f32 %v2210, %v2600
    %v2602 = vpop.f32.mrb[0].mxu0
    %v2603 = vadd.f32 %v2214, %v2602
    %2604 = vdwg.mxu0
    %2605 = vst [vmem:[#allocation2] sm:$0xff] %v2414
    %2606 = vst [vmem:[#allocation2 + $0x8] sm:$0xff] %v2416
    %2607 = vst [vmem:[#allocation2 + $0x10] sm:$0xff] %v2527
    %2608 = vst [vmem:[#allocation2 + $0x18] sm:$0xff] %v2529
    %2609 = vst [vmem:[#allocation2 + $0x20] sm:$0xff] %v2418
    %2610 = vst [vmem:[#allocation2 + $0x28] sm:$0xff] %v2420
    %2611 = vst [vmem:[#allocation2 + $0x30] sm:$0xff] %v2531
    %2612 = vst [vmem:[#allocation2 + $0x38] sm:$0xff] %v2533
    %2613 = vst [vmem:[#allocation2 + $0x40] sm:$0xff] %v2424
    %2614 = vst [vmem:[#allocation2 + $0x48] sm:$0xff] %v2426
    %2615 = vst [vmem:[#allocation2 + $0x50] sm:$0xff] %v2537
    %2616 = vst [vmem:[#allocation2 + $0x58] sm:$0xff] %v2539
    %2617 = vst [vmem:[#allocation2 + $0x60] sm:$0xff] %v2428
    %2618 = vst [vmem:[#allocation2 + $0x68] sm:$0xff] %v2430
    %2619 = vst [vmem:[#allocation2 + $0x70] sm:$0xff] %v2541
    %2620 = vst [vmem:[#allocation2 + $0x78] sm:$0xff] %v2543
    %2621 = vst [vmem:[#allocation2 + $0x80] sm:$0xff] %v2434
    %2622 = vst [vmem:[#allocation2 + $0x88] sm:$0xff] %v2436
    %2623 = vst [vmem:[#allocation2 + $0x90] sm:$0xff] %v2547
    %2624 = vst [vmem:[#allocation2 + $0x98] sm:$0xff] %v2549
    %2625 = vst [vmem:[#allocation2 + $0xa0] sm:$0xff] %v2438
    %2626 = vst [vmem:[#allocation2 + $0xa8] sm:$0xff] %v2440
    %2627 = vst [vmem:[#allocation2 + $0xb0] sm:$0xff] %v2551
    %2628 = vst [vmem:[#allocation2 + $0xb8] sm:$0xff] %v2553
    %2629 = vst [vmem:[#allocation2 + $0xc0] sm:$0xff] %v2444
    %2630 = vst [vmem:[#allocation2 + $0xc8] sm:$0xff] %v2446
    %2631 = vst [vmem:[#allocation2 + $0xd0] sm:$0xff] %v2557
    %2632 = vst [vmem:[#allocation2 + $0xd8] sm:$0xff] %v2559
    %2633 = vst [vmem:[#allocation2 + $0xe0] sm:$0xff] %v2448
    %2634 = vst [vmem:[#allocation2 + $0xe8] sm:$0xff] %v2450
    %2635 = vst [vmem:[#allocation2 + $0xf0] sm:$0xff] %v2561
    %2636 = vst [vmem:[#allocation2 + $0xf8] sm:$0xff] %v2563
    %2637 = vst [vmem:[#allocation2 + $0x100] sm:$0xff] %v2454
    %2638 = vst [vmem:[#allocation2 + $0x108] sm:$0xff] %v2456
    %2639 = vst [vmem:[#allocation2 + $0x110] sm:$0xff] %v2567
    %2640 = vst [vmem:[#allocation2 + $0x118] sm:$0xff] %v2569
    %2641 = vst [vmem:[#allocation2 + $0x120] sm:$0xff] %v2458
    %2642 = vst [vmem:[#allocation2 + $0x128] sm:$0xff] %v2460
    %2643 = vst [vmem:[#allocation2 + $0x130] sm:$0xff] %v2571
    %2644 = vst [vmem:[#allocation2 + $0x138] sm:$0xff] %v2573
    %2645 = vst [vmem:[#allocation2 + $0x140] sm:$0xff] %v2464
    %2646 = vst [vmem:[#allocation2 + $0x148] sm:$0xff] %v2466
    %2647 = vst [vmem:[#allocation2 + $0x150] sm:$0xff] %v2577
    %2648 = vst [vmem:[#allocation2 + $0x158] sm:$0xff] %v2579
    %2649 = vst [vmem:[#allocation2 + $0x160] sm:$0xff] %v2468
    %2650 = vst [vmem:[#allocation2 + $0x168] sm:$0xff] %v2470
    %2651 = vst [vmem:[#allocation2 + $0x170] sm:$0xff] %v2581
    %2652 = vst [vmem:[#allocation2 + $0x178] sm:$0xff] %v2583
    %2653 = vst [vmem:[#allocation2 + $0x180] sm:$0xff] %v2474
    %2654 = vst [vmem:[#allocation2 + $0x188] sm:$0xff] %v2476
    %2655 = vst [vmem:[#allocation2 + $0x190] sm:$0xff] %v2587
    %2656 = vst [vmem:[#allocation2 + $0x198] sm:$0xff] %v2589
    %2657 = vst [vmem:[#allocation2 + $0x1a0] sm:$0xff] %v2478
    %2658 = vst [vmem:[#allocation2 + $0x1a8] sm:$0xff] %v2480
    %2659 = vst [vmem:[#allocation2 + $0x1b0] sm:$0xff] %v2591
    %2660 = vst [vmem:[#allocation2 + $0x1b8] sm:$0xff] %v2593
    %2661 = vst [vmem:[#allocation2 + $0x1c0] sm:$0xff] %v2484
    %2662 = vst [vmem:[#allocation2 + $0x1c8] sm:$0xff] %v2486
    %2663 = vst [vmem:[#allocation2 + $0x1d0] sm:$0xff] %v2597
    %2664 = vst [vmem:[#allocation2 + $0x1d8] sm:$0xff] %v2599
    %2665 = vst [vmem:[#allocation2 + $0x1e0] sm:$0xff] %v2488
    %2666 = vst [vmem:[#allocation2 + $0x1e8] sm:$0xff] %v2490
    %2667 = vst [vmem:[#allocation2 + $0x1f0] sm:$0xff] %v2601
    %2668 = vst [vmem:[#allocation2 + $0x1f8] sm:$0xff] %v2603
    %v2669 = vld [vmem:[#allocation13] sm:$0xff]
    %v2670 = vld [vmem:[#allocation13 + $0x8] sm:$0xff]
    %v2671 = vld [vmem:[#allocation13 + $0x10] sm:$0xff]
    %v2672 = vld [vmem:[#allocation13 + $0x18] sm:$0xff]
    %v2673 = vld [vmem:[#allocation13 + $0x20] sm:$0xff]
    %v2674 = vld [vmem:[#allocation13 + $0x28] sm:$0xff]
    %v2675 = vld [vmem:[#allocation13 + $0x30] sm:$0xff]
    %v2676 = vld [vmem:[#allocation13 + $0x38] sm:$0xff]
    %v2677 = vld [vmem:[#allocation13 + $0x40] sm:$0xff]
    %v2678 = vld [vmem:[#allocation13 + $0x48] sm:$0xff]
    %v2679 = vld [vmem:[#allocation13 + $0x50] sm:$0xff]
    %v2680 = vld [vmem:[#allocation13 + $0x58] sm:$0xff]
    %v2681 = vld [vmem:[#allocation13 + $0x60] sm:$0xff]
    %v2682 = vld [vmem:[#allocation13 + $0x68] sm:$0xff]
    %v2683 = vld [vmem:[#allocation13 + $0x70] sm:$0xff]
    %v2684 = vld [vmem:[#allocation13 + $0x78] sm:$0xff]
    %v2685 = vld [vmem:[#allocation13 + $0x80] sm:$0xff]
    %v2686 = vld [vmem:[#allocation13 + $0x88] sm:$0xff]
    %v2687 = vld [vmem:[#allocation13 + $0x90] sm:$0xff]
    %v2688 = vld [vmem:[#allocation13 + $0x98] sm:$0xff]
    %v2689 = vld [vmem:[#allocation13 + $0xa0] sm:$0xff]
    %v2690 = vld [vmem:[#allocation13 + $0xa8] sm:$0xff]
    %v2691 = vld [vmem:[#allocation13 + $0xb0] sm:$0xff]
    %v2692 = vld [vmem:[#allocation13 + $0xb8] sm:$0xff]
    %v2693 = vld [vmem:[#allocation13 + $0xc0] sm:$0xff]
    %v2694 = vld [vmem:[#allocation13 + $0xc8] sm:$0xff]
    %v2695 = vld [vmem:[#allocation13 + $0xd0] sm:$0xff]
    %v2696 = vld [vmem:[#allocation13 + $0xd8] sm:$0xff]
    %v2697 = vld [vmem:[#allocation13 + $0xe0] sm:$0xff]
    %v2698 = vld [vmem:[#allocation13 + $0xe8] sm:$0xff]
    %v2699 = vld [vmem:[#allocation13 + $0xf0] sm:$0xff]
    %v2700 = vld [vmem:[#allocation13 + $0xf8] sm:$0xff]
    %v2701 = vld [vmem:[%s752] sm:$0xff]
    %v2702 = vld [vmem:[%s752 + $0x8] sm:$0xff]
    %v2703 = vld [vmem:[%s752 + $0x10] sm:$0xff]
    %v2704 = vld [vmem:[%s752 + $0x18] sm:$0xff]
    %v2705 = vld [vmem:[%s752 + $0x20] sm:$0xff]
    %v2706 = vld [vmem:[%s752 + $0x28] sm:$0xff]
    %v2707 = vld [vmem:[%s752 + $0x30] sm:$0xff]
    %v2708 = vld [vmem:[%s752 + $0x38] sm:$0xff]
    %v2741 = vunpack.c.l.b16 %v2669
    %v2742 = vunpack.c.h.b16 %v2669
    %v2743 = vunpack.c.l.b16 %v2670
    %v2744 = vunpack.c.h.b16 %v2670
    %v2745 = vunpack.c.l.b16 %v2671
    %v2746 = vunpack.c.h.b16 %v2671
    %v2747 = vunpack.c.l.b16 %v2672
    %v2748 = vunpack.c.h.b16 %v2672
    %v2749 = vunpack.c.l.b16 %v2673
    %v2750 = vunpack.c.h.b16 %v2673
    %v2751 = vunpack.c.l.b16 %v2674
    %v2752 = vunpack.c.h.b16 %v2674
    %v2753 = vunpack.c.l.b16 %v2675
    %v2754 = vunpack.c.h.b16 %v2675
    %v2755 = vunpack.c.l.b16 %v2676
    %v2756 = vunpack.c.h.b16 %v2676
    %v2757 = vunpack.c.l.b16 %v2677
    %v2758 = vunpack.c.h.b16 %v2677
    %v2759 = vunpack.c.l.b16 %v2678
    %v2760 = vunpack.c.h.b16 %v2678
    %v2761 = vunpack.c.l.b16 %v2679
    %v2762 = vunpack.c.h.b16 %v2679
    %v2763 = vunpack.c.l.b16 %v2680
    %v2764 = vunpack.c.h.b16 %v2680
    %v2765 = vunpack.c.l.b16 %v2681
    %v2766 = vunpack.c.h.b16 %v2681
    %v2767 = vunpack.c.l.b16 %v2682
    %v2768 = vunpack.c.h.b16 %v2682
    %v2769 = vunpack.c.l.b16 %v2683
    %v2770 = vunpack.c.h.b16 %v2683
    %v2771 = vunpack.c.l.b16 %v2684
    %v2772 = vunpack.c.h.b16 %v2684
    %v2773 = vunpack.c.l.b16 %v2685
    %v2774 = vunpack.c.h.b16 %v2685
    %v2775 = vunpack.c.l.b16 %v2686
    %v2776 = vunpack.c.h.b16 %v2686
    %v2777 = vunpack.c.l.b16 %v2687
    %v2778 = vunpack.c.h.b16 %v2687
    %v2779 = vunpack.c.l.b16 %v2688
    %v2780 = vunpack.c.h.b16 %v2688
    %v2781 = vunpack.c.l.b16 %v2689
    %v2782 = vunpack.c.h.b16 %v2689
    %v2783 = vunpack.c.l.b16 %v2690
    %v2784 = vunpack.c.h.b16 %v2690
    %v2785 = vunpack.c.l.b16 %v2691
    %v2786 = vunpack.c.h.b16 %v2691
    %v2787 = vunpack.c.l.b16 %v2692
    %v2788 = vunpack.c.h.b16 %v2692
    %v2789 = vunpack.c.l.b16 %v2693
    %v2790 = vunpack.c.h.b16 %v2693
    %v2791 = vunpack.c.l.b16 %v2694
    %v2792 = vunpack.c.h.b16 %v2694
    %v2793 = vunpack.c.l.b16 %v2695
    %v2794 = vunpack.c.h.b16 %v2695
    %v2795 = vunpack.c.l.b16 %v2696
    %v2796 = vunpack.c.h.b16 %v2696
    %v2797 = vunpack.c.l.b16 %v2697
    %v2798 = vunpack.c.h.b16 %v2697
    %v2799 = vunpack.c.l.b16 %v2698
    %v2800 = vunpack.c.h.b16 %v2698
    %v2801 = vunpack.c.l.b16 %v2699
    %v2802 = vunpack.c.h.b16 %v2699
    %v2803 = vunpack.c.l.b16 %v2700
    %v2804 = vunpack.c.h.b16 %v2700
    %v2805 = vpack.c.b16 %v2745, %v2741
    %v2806 = vpack.c.b16 %v2746, %v2742
    %v2807 = vpack.c.b16 %v2747, %v2743
    %v2808 = vpack.c.b16 %v2748, %v2744
    %v2809 = vpack.c.b16 %v2753, %v2749
    %v2810 = vpack.c.b16 %v2754, %v2750
    %v2811 = vpack.c.b16 %v2755, %v2751
    %v2812 = vpack.c.b16 %v2756, %v2752
    %v2813 = vpack.c.b16 %v2761, %v2757
    %v2814 = vpack.c.b16 %v2762, %v2758
    %v2815 = vpack.c.b16 %v2763, %v2759
    %v2816 = vpack.c.b16 %v2764, %v2760
    %v2817 = vpack.c.b16 %v2769, %v2765
    %v2818 = vpack.c.b16 %v2770, %v2766
    %v2819 = vpack.c.b16 %v2771, %v2767
    %v2820 = vpack.c.b16 %v2772, %v2768
    %v2821 = vpack.c.b16 %v2777, %v2773
    %v2822 = vpack.c.b16 %v2778, %v2774
    %v2823 = vpack.c.b16 %v2779, %v2775
    %v2824 = vpack.c.b16 %v2780, %v2776
    %v2825 = vpack.c.b16 %v2785, %v2781
    %v2826 = vpack.c.b16 %v2786, %v2782
    %v2827 = vpack.c.b16 %v2787, %v2783
    %v2828 = vpack.c.b16 %v2788, %v2784
    %v2829 = vpack.c.b16 %v2793, %v2789
    %v2830 = vpack.c.b16 %v2794, %v2790
    %v2831 = vpack.c.b16 %v2795, %v2791
    %v2832 = vpack.c.b16 %v2796, %v2792
    %v2833 = vpack.c.b16 %v2801, %v2797
    %v2834 = vpack.c.b16 %v2802, %v2798
    %v2835 = vpack.c.b16 %v2803, %v2799
    %v2836 = vpack.c.b16 %v2804, %v2800
    %2869 = vmatprep.subr.bf16.mxu0 %v2806
    %2870 = vmatpush1.bf16.msra.mxu0 %v2805
    %2871 = vmatprep.subr.bf16.mxu0 %v2810
    %2872 = vmatpush1.bf16.msra.mxu0 %v2809
    %2873 = vmatprep.subr.bf16.mxu0 %v2814
    %2874 = vmatpush1.bf16.msra.mxu0 %v2813
    %2875 = vmatprep.subr.bf16.mxu0 %v2818
    %2876 = vmatpush1.bf16.msra.mxu0 %v2817
    %2877 = vmatprep.subr.bf16.mxu0 %v2822
    %2878 = vmatpush1.bf16.msra.mxu0 %v2821
    %2879 = vmatprep.subr.bf16.mxu0 %v2826
    %2880 = vmatpush1.bf16.msra.mxu0 %v2825
    %2881 = vmatprep.subr.bf16.mxu0 %v2830
    %2882 = vmatpush1.bf16.msra.mxu0 %v2829
    %2883 = vmatprep.subr.bf16.mxu0 %v2834
    %2884 = vmatpush1.bf16.msra.mxu0 %v2833
    %2885 = vmatprep.subr.bf16.mxu0 0
    %2886 = vmatpush1.bf16.msra.mxu0 0
    %2887 = vmatprep.subr.bf16.mxu0 0
    %2888 = vmatpush1.bf16.msra.mxu0 0
    %2889 = vmatprep.subr.bf16.mxu0 0
    %2890 = vmatpush1.bf16.msra.mxu0 0
    %2891 = vmatprep.subr.bf16.mxu0 0
    %2892 = vmatpush1.bf16.msra.mxu0 0
    %2893 = vmatprep.subr.bf16.mxu0 0
    %2894 = vmatpush1.bf16.msra.mxu0 0
    %2895 = vmatprep.subr.bf16.mxu0 0
    %2896 = vmatpush1.bf16.msra.mxu0 0
    %2897 = vmatprep.subr.bf16.mxu0 0
    %2898 = vmatpush1.bf16.msra.mxu0 0
    %2899 = vmatprep.subr.bf16.mxu0 0
    %2900 = vmatpush1.bf16.msra.mxu0 0
    %2901 = vmatprep.mubr.bf16.mxu0 0
    %2902 = vmatmul.mubr.bf16.gmra.mrb[0].mxu0 0
    %v2903 = vpop.f32.mrb[0].mxu0
    %v2904 = vadd.f32 0.0, %v2903
    %v2905 = vpop.f32.mrb[0].mxu0
    %v2906 = vadd.f32 0.0, %v2905
    %v2907 = vpop.f32.mrb[0].mxu0
    %v2908 = vadd.f32 0.0, %v2907
    %v2909 = vpop.f32.mrb[0].mxu0
    %v2910 = vadd.f32 0.0, %v2909
    %2911 = vdwg.mxu0
    %2912 = vmatprep.subr.bf16.mxu0 %v2808
    %2913 = vmatpush1.bf16.msra.mxu0 %v2807
    %2914 = vmatprep.subr.bf16.mxu0 %v2812
    %2915 = vmatpush1.bf16.msra.mxu0 %v2811
    %2916 = vmatprep.subr.bf16.mxu0 %v2816
    %2917 = vmatpush1.bf16.msra.mxu0 %v2815
    %2918 = vmatprep.subr.bf16.mxu0 %v2820
    %2919 = vmatpush1.bf16.msra.mxu0 %v2819
    %2920 = vmatprep.subr.bf16.mxu0 %v2824
    %2921 = vmatpush1.bf16.msra.mxu0 %v2823
    %2922 = vmatprep.subr.bf16.mxu0 %v2828
    %2923 = vmatpush1.bf16.msra.mxu0 %v2827
    %2924 = vmatprep.subr.bf16.mxu0 %v2832
    %2925 = vmatpush1.bf16.msra.mxu0 %v2831
    %2926 = vmatprep.subr.bf16.mxu0 %v2836
    %2927 = vmatpush1.bf16.msra.mxu0 %v2835
    %2928 = vmatprep.subr.bf16.mxu0 0
    %2929 = vmatpush1.bf16.msra.mxu0 0
    %2930 = vmatprep.subr.bf16.mxu0 0
    %2931 = vmatpush1.bf16.msra.mxu0 0
    %2932 = vmatprep.subr.bf16.mxu0 0
    %2933 = vmatpush1.bf16.msra.mxu0 0
    %2934 = vmatprep.subr.bf16.mxu0 0
    %2935 = vmatpush1.bf16.msra.mxu0 0
    %2936 = vmatprep.subr.bf16.mxu0 0
    %2937 = vmatpush1.bf16.msra.mxu0 0
    %2938 = vmatprep.subr.bf16.mxu0 0
    %2939 = vmatpush1.bf16.msra.mxu0 0
    %2940 = vmatprep.subr.bf16.mxu0 0
    %2941 = vmatpush1.bf16.msra.mxu0 0
    %2942 = vmatprep.subr.bf16.mxu0 0
    %2943 = vmatpush1.bf16.msra.mxu0 0
    %2944 = vmatprep.mubr.bf16.mxu0 0
    %2945 = vmatmul.mubr.bf16.gmra.mrb[0].mxu0 0
    %v2946 = vpop.f32.mrb[0].mxu0
    %v2947 = vadd.f32 0.0, %v2946
    %v2948 = vpop.f32.mrb[0].mxu0
    %v2949 = vadd.f32 0.0, %v2948
    %v2950 = vpop.f32.mrb[0].mxu0
    %v2951 = vadd.f32 0.0, %v2950
    %v2952 = vpop.f32.mrb[0].mxu0
    %v2953 = vadd.f32 0.0, %v2952
    %2954 = vdwg.mxu0
    %v2955 = vadd.f32 %v2701, %v2904
    %v2956 = vadd.f32 %v2702, %v2906
    %v2957 = vadd.f32 %v2703, %v2947
    %v2958 = vadd.f32 %v2704, %v2949
    %v2959 = vadd.f32 %v2705, %v2908
    %v2960 = vadd.f32 %v2706, %v2910
    %v2961 = vadd.f32 %v2707, %v2951
    %v2962 = vadd.f32 %v2708, %v2953
    %v2963 = vxor.u32 %v2955, 2147483648
    %v2964 = vxor.u32 %v2956, 2147483648
    %v2965 = vxor.u32 %v2957, 2147483648
    %v2966 = vxor.u32 %v2959, 2147483648
    %v2967 = vxor.u32 %v2960, 2147483648
    %v2968 = vxor.u32 %v2961, 2147483648
    %v2969 = vmul.f32 %v2963, 1.442695
    %v2970 = vpow.pop %v2969
    %v2971 = vmul.f32 %v2964, 1.442695
    %v2972 = vpow.pop %v2971
    %v2973 = vmul.f32 %v2965, 1.442695
    %v2974 = vpow.pop %v2973
    %v2975 = vmul.f32 %v2966, 1.442695
    %v2976 = vpow.pop %v2975
    %v2977 = vmul.f32 %v2967, 1.442695
    %v2978 = vpow.pop %v2977
    %v2979 = vmul.f32 %v2968, 1.442695
    %v2980 = vpow.pop %v2979
    %v2981 = vadd.f32 %v2970, 1.0
    %v2982 = vadd.f32 %v2972, 1.0
    %v2983 = vadd.f32 %v2974, 1.0
    %v2984 = vadd.f32 %v2976, 1.0
    %v2985 = vadd.f32 %v2978, 1.0
    %v2986 = vadd.f32 %v2980, 1.0
    %v2987 = vrcp.pop %v2981
    %v2988 = vmul.f32 1.0, %v2987
    %v2989 = vrcp.pop %v2982
    %v2990 = vmul.f32 1.0, %v2989
    %v2991 = vrcp.pop %v2983
    %v2992 = vmul.f32 1.0, %v2991
    %v2993 = vrcp.pop %v2984
    %v2994 = vmul.f32 1.0, %v2993
    %v2995 = vrcp.pop %v2985
    %v2996 = vmul.f32 1.0, %v2995
    %v2997 = vrcp.pop %v2986
    %v2998 = vmul.f32 1.0, %v2997
    %v2999 = vtanh.pop %v2958
    %v3000 = vtanh.pop %v2962
    %v3001 = vmul.f32 %v2990, 0.0
    %v3002 = vmul.f32 %v2996, 0.0
    %v3003 = vmul.f32 %v2988, %v2999
    %v3004 = vmul.f32 %v2994, %v3000
    %v3005 = vadd.f32 %v3001, %v3003
    %v3006 = vadd.f32 %v3002, %v3004
    %v3007 = vtanh.pop %v3005
    %v3008 = vtanh.pop %v3006
    %v3009 = vmul.f32 %v2992, %v3007
    %v3010 = vmul.f32 %v2998, %v3008
    %v3011 = vpack.c.bf16 %v3010, %v3009
    %v3012 = vld [vmem:[%s1067] sm:$0xff]
    %v3013 = vld [vmem:[%s1067 + $0x8] sm:$0xff]
    %v3014 = vld [vmem:[%s1067 + $0x10] sm:$0xff]
    %v3015 = vld [vmem:[%s1067 + $0x18] sm:$0xff]
    %v3016 = vld [vmem:[%s1067 + $0x20] sm:$0xff]
    %v3017 = vld [vmem:[%s1067 + $0x28] sm:$0xff]
    %v3018 = vld [vmem:[%s1067 + $0x30] sm:$0xff]
    %v3019 = vld [vmem:[%s1067 + $0x38] sm:$0xff]
    %3020 = vmatprep.subr.bf16.mxu0 %v2806
    %3021 = vmatpush1.bf16.msra.mxu0 %v2805
    %3022 = vmatprep.subr.bf16.mxu0 %v2810
    %3023 = vmatpush1.bf16.msra.mxu0 %v2809
    %3024 = vmatprep.subr.bf16.mxu0 %v2814
    %3025 = vmatpush1.bf16.msra.mxu0 %v2813
    %3026 = vmatprep.subr.bf16.mxu0 %v2818
    %3027 = vmatpush1.bf16.msra.mxu0 %v2817
    %3028 = vmatprep.subr.bf16.mxu0 %v2822
    %3029 = vmatpush1.bf16.msra.mxu0 %v2821
    %3030 = vmatprep.subr.bf16.mxu0 %v2826
    %3031 = vmatpush1.bf16.msra.mxu0 %v2825
    %3032 = vmatprep.subr.bf16.mxu0 %v2830
    %3033 = vmatpush1.bf16.msra.mxu0 %v2829
    %3034 = vmatprep.subr.bf16.mxu0 %v2834
    %3035 = vmatpush1.bf16.msra.mxu0 %v2833
    %3036 = vmatprep.subr.bf16.mxu0 0
    %3037 = vmatpush1.bf16.msra.mxu0 0
    %3038 = vmatprep.subr.bf16.mxu0 0
    %3039 = vmatpush1.bf16.msra.mxu0 0
    %3040 = vmatprep.subr.bf16.mxu0 0
    %3041 = vmatpush1.bf16.msra.mxu0 0
    %3042 = vmatprep.subr.bf16.mxu0 0
    %3043 = vmatpush1.bf16.msra.mxu0 0
    %3044 = vmatprep.subr.bf16.mxu0 0
    %3045 = vmatpush1.bf16.msra.mxu0 0
    %3046 = vmatprep.subr.bf16.mxu0 0
    %3047 = vmatpush1.bf16.msra.mxu0 0
    %3048 = vmatprep.subr.bf16.mxu0 0
    %3049 = vmatpush1.bf16.msra.mxu0 0
    %3050 = vmatprep.subr.bf16.mxu0 0
    %3051 = vmatpush1.bf16.msra.mxu0 0
    %3052 = vmatprep.mubr.bf16.mxu0 0
    %3053 = vmatmul.mubr.bf16.gmra.mrb[0].mxu0 %v3011
    %v3054 = vpop.f32.mrb[0].mxu0
    %v3055 = vadd.f32 0.0, %v3054
    %v3056 = vpop.f32.mrb[0].mxu0
    %v3057 = vadd.f32 0.0, %v3056
    %v3058 = vpop.f32.mrb[0].mxu0
    %v3059 = vadd.f32 0.0, %v3058
    %v3060 = vpop.f32.mrb[0].mxu0
    %v3061 = vadd.f32 0.0, %v3060
    %3062 = vdwg.mxu0
    %3063 = vmatprep.subr.bf16.mxu0 %v2808
    %3064 = vmatpush1.bf16.msra.mxu0 %v2807
    %3065 = vmatprep.subr.bf16.mxu0 %v2812
    %3066 = vmatpush1.bf16.msra.mxu0 %v2811
    %3067 = vmatprep.subr.bf16.mxu0 %v2816
    %3068 = vmatpush1.bf16.msra.mxu0 %v2815
    %3069 = vmatprep.subr.bf16.mxu0 %v2820
    %3070 = vmatpush1.bf16.msra.mxu0 %v2819
    %3071 = vmatprep.subr.bf16.mxu0 %v2824
    %3072 = vmatpush1.bf16.msra.mxu0 %v2823
    %3073 = vmatprep.subr.bf16.mxu0 %v2828
    %3074 = vmatpush1.bf16.msra.mxu0 %v2827
    %3075 = vmatprep.subr.bf16.mxu0 %v2832
    %3076 = vmatpush1.bf16.msra.mxu0 %v2831
    %3077 = vmatprep.subr.bf16.mxu0 %v2836
    %3078 = vmatpush1.bf16.msra.mxu0 %v2835
    %3079 = vmatprep.subr.bf16.mxu0 0
    %3080 = vmatpush1.bf16.msra.mxu0 0
    %3081 = vmatprep.subr.bf16.mxu0 0
    %3082 = vmatpush1.bf16.msra.mxu0 0
    %3083 = vmatprep.subr.bf16.mxu0 0
    %3084 = vmatpush1.bf16.msra.mxu0 0
    %3085 = vmatprep.subr.bf16.mxu0 0
    %3086 = vmatpush1.bf16.msra.mxu0 0
    %3087 = vmatprep.subr.bf16.mxu0 0
    %3088 = vmatpush1.bf16.msra.mxu0 0
    %3089 = vmatprep.subr.bf16.mxu0 0
    %3090 = vmatpush1.bf16.msra.mxu0 0
    %3091 = vmatprep.subr.bf16.mxu0 0
    %3092 = vmatpush1.bf16.msra.mxu0 0
    %3093 = vmatprep.subr.bf16.mxu0 0
    %3094 = vmatpush1.bf16.msra.mxu0 0
    %3095 = vmatprep.mubr.bf16.mxu0 0
    %3096 = vmatmul.mubr.bf16.gmra.mrb[0].mxu0 %v3011
    %v3097 = vpop.f32.mrb[0].mxu0
    %v3098 = vadd.f32 0.0, %v3097
    %v3099 = vpop.f32.mrb[0].mxu0
    %v3100 = vadd.f32 0.0, %v3099
    %v3101 = vpop.f32.mrb[0].mxu0
    %v3102 = vadd.f32 0.0, %v3101
    %v3103 = vpop.f32.mrb[0].mxu0
    %v3104 = vadd.f32 0.0, %v3103
    %3105 = vdwg.mxu0
    %v3106 = vadd.f32 %v3012, %v3055
    %v3107 = vadd.f32 %v3013, %v3057
    %v3108 = vadd.f32 %v3014, %v3098
    %v3109 = vadd.f32 %v3015, %v3100
    %v3110 = vadd.f32 %v3016, %v3059
    %v3111 = vadd.f32 %v3017, %v3061
    %v3112 = vadd.f32 %v3018, %v3102
    %v3113 = vadd.f32 %v3019, %v3104
    %v3114 = vxor.u32 %v3106, 2147483648
    %v3115 = vxor.u32 %v3107, 2147483648
    %v3116 = vxor.u32 %v3108, 2147483648
    %v3117 = vxor.u32 %v3110, 2147483648
    %v3118 = vxor.u32 %v3111, 2147483648
    %v3119 = vxor.u32 %v3112, 2147483648
    %v3120 = vmul.f32 %v3114, 1.442695
    %v3121 = vpow.pop %v3120
    %v3122 = vmul.f32 %v3115, 1.442695
    %v3123 = vpow.pop %v3122
    %v3124 = vmul.f32 %v3116, 1.442695
    %v3125 = vpow.pop %v3124
    %v3126 = vmul.f32 %v3117, 1.442695
    %v3127 = vpow.pop %v3126
    %v3128 = vmul.f32 %v3118, 1.442695
    %v3129 = vpow.pop %v3128
    %v3130 = vmul.f32 %v3119, 1.442695
    %v3131 = vpow.pop %v3130
    %v3132 = vadd.f32 %v3121, 1.0
    %v3133 = vadd.f32 %v3123, 1.0
    %v3134 = vadd.f32 %v3125, 1.0
    %v3135 = vadd.f32 %v3127, 1.0
    %v3136 = vadd.f32 %v3129, 1.0
    %v3137 = vadd.f32 %v3131, 1.0
    %v3138 = vrcp.pop %v3132
    %v3139 = vmul.f32 1.0, %v3138
    %v3140 = vrcp.pop %v3133
    %v3141 = vmul.f32 1.0, %v3140
    %v3142 = vrcp.pop %v3134
    %v3143 = vmul.f32 1.0, %v3142
    %v3144 = vrcp.pop %v3135
    %v3145 = vmul.f32 1.0, %v3144
    %v3146 = vrcp.pop %v3136
    %v3147 = vmul.f32 1.0, %v3146
    %v3148 = vrcp.pop %v3137
    %v3149 = vmul.f32 1.0, %v3148
    %v3150 = vtanh.pop %v3109
    %v3151 = vtanh.pop %v3113
    %v3152 = vmul.f32 %v3141, %v3005
    %v3153 = vmul.f32 %v3147, %v3006
    %v3154 = vmul.f32 %v3139, %v3150
    %v3155 = vmul.f32 %v3145, %v3151
    %v3156 = vadd.f32 %v3152, %v3154
    %v3157 = vadd.f32 %v3153, %v3155
    %v3158 = vtanh.pop %v3156
    %v3159 = vtanh.pop %v3157
    %v3160 = vmul.f32 %v3143, %v3158
    %v3161 = vmul.f32 %v3149, %v3159
    %v3162 = vpack.c.bf16 %v3161, %v3160
    %v3163 = vld [vmem:[%s1223] sm:$0xff]
    %v3164 = vld [vmem:[%s1223 + $0x8] sm:$0xff]
    %v3165 = vld [vmem:[%s1223 + $0x10] sm:$0xff]
    %v3166 = vld [vmem:[%s1223 + $0x18] sm:$0xff]
    %v3167 = vld [vmem:[%s1223 + $0x20] sm:$0xff]
    %v3168 = vld [vmem:[%s1223 + $0x28] sm:$0xff]
    %v3169 = vld [vmem:[%s1223 + $0x30] sm:$0xff]
    %v3170 = vld [vmem:[%s1223 + $0x38] sm:$0xff]
    %3171 = vmatprep.subr.bf16.mxu0 %v2806
    %3172 = vmatpush1.bf16.msra.mxu0 %v2805
    %3173 = vmatprep.subr.bf16.mxu0 %v2810
    %3174 = vmatpush1.bf16.msra.mxu0 %v2809
    %3175 = vmatprep.subr.bf16.mxu0 %v2814
    %3176 = vmatpush1.bf16.msra.mxu0 %v2813
    %3177 = vmatprep.subr.bf16.mxu0 %v2818
    %3178 = vmatpush1.bf16.msra.mxu0 %v2817
    %3179 = vmatprep.subr.bf16.mxu0 %v2822
    %3180 = vmatpush1.bf16.msra.mxu0 %v2821
    %3181 = vmatprep.subr.bf16.mxu0 %v2826
    %3182 = vmatpush1.bf16.msra.mxu0 %v2825
    %3183 = vmatprep.subr.bf16.mxu0 %v2830
    %3184 = vmatpush1.bf16.msra.mxu0 %v2829
    %3185 = vmatprep.subr.bf16.mxu0 %v2834
    %3186 = vmatpush1.bf16.msra.mxu0 %v2833
    %3187 = vmatprep.subr.bf16.mxu0 0
    %3188 = vmatpush1.bf16.msra.mxu0 0
    %3189 = vmatprep.subr.bf16.mxu0 0
    %3190 = vmatpush1.bf16.msra.mxu0 0
    %3191 = vmatprep.subr.bf16.mxu0 0
    %3192 = vmatpush1.bf16.msra.mxu0 0
    %3193 = vmatprep.subr.bf16.mxu0 0
    %3194 = vmatpush1.bf16.msra.mxu0 0
    %3195 = vmatprep.subr.bf16.mxu0 0
    %3196 = vmatpush1.bf16.msra.mxu0 0
    %3197 = vmatprep.subr.bf16.mxu0 0
    %3198 = vmatpush1.bf16.msra.mxu0 0
    %3199 = vmatprep.subr.bf16.mxu0 0
    %3200 = vmatpush1.bf16.msra.mxu0 0
    %3201 = vmatprep.subr.bf16.mxu0 0
    %3202 = vmatpush1.bf16.msra.mxu0 0
    %3203 = vmatprep.mubr.bf16.mxu0 0
    %3204 = vmatmul.mubr.bf16.gmra.mrb[0].mxu0 %v3162
    %v3205 = vpop.f32.mrb[0].mxu0
    %v3206 = vadd.f32 0.0, %v3205
    %v3207 = vpop.f32.mrb[0].mxu0
    %v3208 = vadd.f32 0.0, %v3207
    %v3209 = vpop.f32.mrb[0].mxu0
    %v3210 = vadd.f32 0.0, %v3209
    %v3211 = vpop.f32.mrb[0].mxu0
    %v3212 = vadd.f32 0.0, %v3211
    %3213 = vdwg.mxu0
    %3214 = vmatprep.subr.bf16.mxu0 %v2808
    %3215 = vmatpush1.bf16.msra.mxu0 %v2807
    %3216 = vmatprep.subr.bf16.mxu0 %v2812
    %3217 = vmatpush1.bf16.msra.mxu0 %v2811
    %3218 = vmatprep.subr.bf16.mxu0 %v2816
    %3219 = vmatpush1.bf16.msra.mxu0 %v2815
    %3220 = vmatprep.subr.bf16.mxu0 %v2820
    %3221 = vmatpush1.bf16.msra.mxu0 %v2819
    %3222 = vmatprep.subr.bf16.mxu0 %v2824
    %3223 = vmatpush1.bf16.msra.mxu0 %v2823
    %3224 = vmatprep.subr.bf16.mxu0 %v2828
    %3225 = vmatpush1.bf16.msra.mxu0 %v2827
    %3226 = vmatprep.subr.bf16.mxu0 %v2832
    %3227 = vmatpush1.bf16.msra.mxu0 %v2831
    %3228 = vmatprep.subr.bf16.mxu0 %v2836
    %3229 = vmatpush1.bf16.msra.mxu0 %v2835
    %3230 = vmatprep.subr.bf16.mxu0 0
    %3231 = vmatpush1.bf16.msra.mxu0 0
    %3232 = vmatprep.subr.bf16.mxu0 0
    %3233 = vmatpush1.bf16.msra.mxu0 0
    %3234 = vmatprep.subr.bf16.mxu0 0
    %3235 = vmatpush1.bf16.msra.mxu0 0
    %3236 = vmatprep.subr.bf16.mxu0 0
    %3237 = vmatpush1.bf16.msra.mxu0 0
    %3238 = vmatprep.subr.bf16.mxu0 0
    %3239 = vmatpush1.bf16.msra.mxu0 0
    %3240 = vmatprep.subr.bf16.mxu0 0
    %3241 = vmatpush1.bf16.msra.mxu0 0
    %3242 = vmatprep.subr.bf16.mxu0 0
    %3243 = vmatpush1.bf16.msra.mxu0 0
    %3244 = vmatprep.subr.bf16.mxu0 0
    %3245 = vmatpush1.bf16.msra.mxu0 0
    %3246 = vmatprep.mubr.bf16.mxu0 0
    %3247 = vmatmul.mubr.bf16.gmra.mrb[0].mxu0 %v3162
    %v3248 = vpop.f32.mrb[0].mxu0
    %v3249 = vadd.f32 0.0, %v3248
    %v3250 = vpop.f32.mrb[0].mxu0
    %v3251 = vadd.f32 0.0, %v3250
    %v3252 = vpop.f32.mrb[0].mxu0
    %v3253 = vadd.f32 0.0, %v3252
    %v3254 = vpop.f32.mrb[0].mxu0
    %v3255 = vadd.f32 0.0, %v3254
    %3256 = vdwg.mxu0
    %v3257 = vadd.f32 %v3163, %v3206
    %v3258 = vadd.f32 %v3164, %v3208
    %v3259 = vadd.f32 %v3165, %v3249
    %v3260 = vadd.f32 %v3166, %v3251
    %v3261 = vadd.f32 %v3167, %v3210
    %v3262 = vadd.f32 %v3168, %v3212
    %v3263 = vadd.f32 %v3169, %v3253
    %v3264 = vadd.f32 %v3170, %v3255
    %v3265 = vxor.u32 %v3257, 2147483648
    %v3266 = vxor.u32 %v3258, 2147483648
    %v3267 = vxor.u32 %v3259, 2147483648
    %v3268 = vxor.u32 %v3261, 2147483648
    %v3269 = vxor.u32 %v3262, 2147483648
    %v3270 = vxor.u32 %v3263, 2147483648
    %v3271 = vmul.f32 %v3265, 1.442695
    %v3272 = vpow.pop %v3271
    %v3273 = vmul.f32 %v3266, 1.442695
    %v3274 = vpow.pop %v3273
    %v3275 = vmul.f32 %v3267, 1.442695
    %v3276 = vpow.pop %v3275
    %v3277 = vmul.f32 %v3268, 1.442695
    %v3278 = vpow.pop %v3277
    %v3279 = vmul.f32 %v3269, 1.442695
    %v3280 = vpow.pop %v3279
    %v3281 = vmul.f32 %v3270, 1.442695
    %v3282 = vpow.pop %v3281
    %v3283 = vadd.f32 %v3272, 1.0
    %v3284 = vadd.f32 %v3274, 1.0
    %v3285 = vadd.f32 %v3276, 1.0
    %v3286 = vadd.f32 %v3278, 1.0
    %v3287 = vadd.f32 %v3280, 1.0
    %v3288 = vadd.f32 %v3282, 1.0
    %v3289 = vrcp.pop %v3283
    %v3290 = vmul.f32 1.0, %v3289
    %v3291 = vrcp.pop %v3284
    %v3292 = vmul.f32 1.0, %v3291
    %v3293 = vrcp.pop %v3285
    %v3294 = vmul.f32 1.0, %v3293
    %v3295 = vrcp.pop %v3286
    %v3296 = vmul.f32 1.0, %v3295
    %v3297 = vrcp.pop %v3287
    %v3298 = vmul.f32 1.0, %v3297
    %v3299 = vrcp.pop %v3288
    %v3300 = vmul.f32 1.0, %v3299
    %v3301 = vtanh.pop %v3260
    %v3302 = vtanh.pop %v3264
    %v3303 = vmul.f32 %v3292, %v3156
    %v3304 = vmul.f32 %v3298, %v3157
    %v3305 = vmul.f32 %v3290, %v3301
    %v3306 = vmul.f32 %v3296, %v3302
    %v3307 = vadd.f32 %v3303, %v3305
    %v3308 = vadd.f32 %v3304, %v3306
    %v3309 = vtanh.pop %v3307
    %v3310 = vtanh.pop %v3308
    %v3311 = vmul.f32 %v3294, %v3309
    %v3312 = vmul.f32 %v3300, %v3310
    %v3313 = vpack.c.bf16 %v3312, %v3311
    %v3314 = vld [vmem:[%s1379] sm:$0xff]
    %v3315 = vld [vmem:[%s1379 + $0x8] sm:$0xff]
    %v3316 = vld [vmem:[%s1379 + $0x10] sm:$0xff]
    %v3317 = vld [vmem:[%s1379 + $0x18] sm:$0xff]
    %v3318 = vld [vmem:[%s1379 + $0x20] sm:$0xff]
    %v3319 = vld [vmem:[%s1379 + $0x28] sm:$0xff]
    %v3320 = vld [vmem:[%s1379 + $0x30] sm:$0xff]
    %v3321 = vld [vmem:[%s1379 + $0x38] sm:$0xff]
    %3322 = vmatprep.subr.bf16.mxu0 %v2806
    %3323 = vmatpush1.bf16.msra.mxu0 %v2805
    %3324 = vmatprep.subr.bf16.mxu0 %v2810
    %3325 = vmatpush1.bf16.msra.mxu0 %v2809
    %3326 = vmatprep.subr.bf16.mxu0 %v2814
    %3327 = vmatpush1.bf16.msra.mxu0 %v2813
    %3328 = vmatprep.subr.bf16.mxu0 %v2818
    %3329 = vmatpush1.bf16.msra.mxu0 %v2817
    %3330 = vmatprep.subr.bf16.mxu0 %v2822
    %3331 = vmatpush1.bf16.msra.mxu0 %v2821
    %3332 = vmatprep.subr.bf16.mxu0 %v2826
    %3333 = vmatpush1.bf16.msra.mxu0 %v2825
    %3334 = vmatprep.subr.bf16.mxu0 %v2830
    %3335 = vmatpush1.bf16.msra.mxu0 %v2829
    %3336 = vmatprep.subr.bf16.mxu0 %v2834
    %3337 = vmatpush1.bf16.msra.mxu0 %v2833
    %3338 = vmatprep.subr.bf16.mxu0 0
    %3339 = vmatpush1.bf16.msra.mxu0 0
    %3340 = vmatprep.subr.bf16.mxu0 0
    %3341 = vmatpush1.bf16.msra.mxu0 0
    %3342 = vmatprep.subr.bf16.mxu0 0
    %3343 = vmatpush1.bf16.msra.mxu0 0
    %3344 = vmatprep.subr.bf16.mxu0 0
    %3345 = vmatpush1.bf16.msra.mxu0 0
    %3346 = vmatprep.subr.bf16.mxu0 0
    %3347 = vmatpush1.bf16.msra.mxu0 0
    %3348 = vmatprep.subr.bf16.mxu0 0
    %3349 = vmatpush1.bf16.msra.mxu0 0
    %3350 = vmatprep.subr.bf16.mxu0 0
    %3351 = vmatpush1.bf16.msra.mxu0 0
    %3352 = vmatprep.subr.bf16.mxu0 0
    %3353 = vmatpush1.bf16.msra.mxu0 0
    %3354 = vmatprep.mubr.bf16.mxu0 0
    %3355 = vmatmul.mubr.bf16.gmra.mrb[0].mxu0 %v3313
    %v3356 = vpop.f32.mrb[0].mxu0
    %v3357 = vadd.f32 0.0, %v3356
    %v3358 = vpop.f32.mrb[0].mxu0
    %v3359 = vadd.f32 0.0, %v3358
    %v3360 = vpop.f32.mrb[0].mxu0
    %v3361 = vadd.f32 0.0, %v3360
    %v3362 = vpop.f32.mrb[0].mxu0
    %v3363 = vadd.f32 0.0, %v3362
    %3364 = vdwg.mxu0
    %3365 = vmatprep.subr.bf16.mxu0 %v2808
    %3366 = vmatpush1.bf16.msra.mxu0 %v2807
    %3367 = vmatprep.subr.bf16.mxu0 %v2812
    %3368 = vmatpush1.bf16.msra.mxu0 %v2811
    %3369 = vmatprep.subr.bf16.mxu0 %v2816
    %3370 = vmatpush1.bf16.msra.mxu0 %v2815
    %3371 = vmatprep.subr.bf16.mxu0 %v2820
    %3372 = vmatpush1.bf16.msra.mxu0 %v2819
    %3373 = vmatprep.subr.bf16.mxu0 %v2824
    %3374 = vmatpush1.bf16.msra.mxu0 %v2823
    %3375 = vmatprep.subr.bf16.mxu0 %v2828
    %3376 = vmatpush1.bf16.msra.mxu0 %v2827
    %3377 = vmatprep.subr.bf16.mxu0 %v2832
    %3378 = vmatpush1.bf16.msra.mxu0 %v2831
    %3379 = vmatprep.subr.bf16.mxu0 %v2836
    %3380 = vmatpush1.bf16.msra.mxu0 %v2835
    %3381 = vmatprep.subr.bf16.mxu0 0
    %3382 = vmatpush1.bf16.msra.mxu0 0
    %3383 = vmatprep.subr.bf16.mxu0 0
    %3384 = vmatpush1.bf16.msra.mxu0 0
    %3385 = vmatprep.subr.bf16.mxu0 0
    %3386 = vmatpush1.bf16.msra.mxu0 0
    %3387 = vmatprep.subr.bf16.mxu0 0
    %3388 = vmatpush1.bf16.msra.mxu0 0
    %3389 = vmatprep.subr.bf16.mxu0 0
    %3390 = vmatpush1.bf16.msra.mxu0 0
    %3391 = vmatprep.subr.bf16.mxu0 0
    %3392 = vmatpush1.bf16.msra.mxu0 0
    %3393 = vmatprep.subr.bf16.mxu0 0
    %3394 = vmatpush1.bf16.msra.mxu0 0
    %3395 = vmatprep.subr.bf16.mxu0 0
    %3396 = vmatpush1.bf16.msra.mxu0 0
    %3397 = vmatprep.mubr.bf16.mxu0 0
    %3398 = vmatmul.mubr.bf16.gmra.mrb[0].mxu0 %v3313
    %v3399 = vpop.f32.mrb[0].mxu0
    %v3400 = vadd.f32 0.0, %v3399
    %v3401 = vpop.f32.mrb[0].mxu0
    %v3402 = vadd.f32 0.0, %v3401
    %v3403 = vpop.f32.mrb[0].mxu0
    %v3404 = vadd.f32 0.0, %v3403
    %v3405 = vpop.f32.mrb[0].mxu0
    %v3406 = vadd.f32 0.0, %v3405
    %3407 = vdwg.mxu0
    %v3408 = vadd.f32 %v3314, %v3357
    %v3409 = vadd.f32 %v3315, %v3359
    %v3410 = vadd.f32 %v3316, %v3400
    %v3411 = vadd.f32 %v3317, %v3402
    %v3412 = vadd.f32 %v3318, %v3361
    %v3413 = vadd.f32 %v3319, %v3363
    %v3414 = vadd.f32 %v3320, %v3404
    %v3415 = vadd.f32 %v3321, %v3406
    %v3416 = vxor.u32 %v3408, 2147483648
    %v3417 = vxor.u32 %v3409, 2147483648
    %v3418 = vxor.u32 %v3410, 2147483648
    %v3419 = vxor.u32 %v3412, 2147483648
    %v3420 = vxor.u32 %v3413, 2147483648
    %v3421 = vxor.u32 %v3414, 2147483648
    %v3422 = vmul.f32 %v3416, 1.442695
    %v3423 = vpow.pop %v3422
    %v3424 = vmul.f32 %v3417, 1.442695
    %v3425 = vpow.pop %v3424
    %v3426 = vmul.f32 %v3418, 1.442695
    %v3427 = vpow.pop %v3426
    %v3428 = vmul.f32 %v3419, 1.442695
    %v3429 = vpow.pop %v3428
    %v3430 = vmul.f32 %v3420, 1.442695
    %v3431 = vpow.pop %v3430
    %v3432 = vmul.f32 %v3421, 1.442695
    %v3433 = vpow.pop %v3432
    %v3434 = vadd.f32 %v3423, 1.0
    %v3435 = vadd.f32 %v3425, 1.0
    %v3436 = vadd.f32 %v3427, 1.0
    %v3437 = vadd.f32 %v3429, 1.0
    %v3438 = vadd.f32 %v3431, 1.0
    %v3439 = vadd.f32 %v3433, 1.0
    %v3440 = vrcp.pop %v3434
    %v3441 = vmul.f32 1.0, %v3440
    %v3442 = vrcp.pop %v3435
    %v3443 = vmul.f32 1.0, %v3442
    %v3444 = vrcp.pop %v3436
    %v3445 = vmul.f32 1.0, %v3444
    %v3446 = vrcp.pop %v3437
    %v3447 = vmul.f32 1.0, %v3446
    %v3448 = vrcp.pop %v3438
    %v3449 = vmul.f32 1.0, %v3448
    %v3450 = vrcp.pop %v3439
    %v3451 = vmul.f32 1.0, %v3450
    %v3452 = vtanh.pop %v3411
    %v3453 = vtanh.pop %v3415
    %v3454 = vmul.f32 %v3443, %v3307
    %v3455 = vmul.f32 %v3449, %v3308
    %v3456 = vmul.f32 %v3441, %v3452
    %v3457 = vmul.f32 %v3447, %v3453
    %v3458 = vadd.f32 %v3454, %v3456
    %v3459 = vadd.f32 %v3455, %v3457
    %v3460 = vtanh.pop %v3458
    %v3461 = vtanh.pop %v3459
    %v3462 = vmul.f32 %v3445, %v3460
    %v3463 = vmul.f32 %v3451, %v3461
    %v3464 = vpack.c.bf16 %v3463, %v3462
    %v3465 = vld [vmem:[%s1535] sm:$0xff]
    %v3466 = vld [vmem:[%s1535 + $0x8] sm:$0xff]
    %v3467 = vld [vmem:[%s1535 + $0x10] sm:$0xff]
    %v3468 = vld [vmem:[%s1535 + $0x18] sm:$0xff]
    %v3469 = vld [vmem:[%s1535 + $0x20] sm:$0xff]
    %v3470 = vld [vmem:[%s1535 + $0x28] sm:$0xff]
    %v3471 = vld [vmem:[%s1535 + $0x30] sm:$0xff]
    %v3472 = vld [vmem:[%s1535 + $0x38] sm:$0xff]
    %3473 = vmatprep.subr.bf16.mxu0 %v2806
    %3474 = vmatpush1.bf16.msra.mxu0 %v2805
    %3475 = vmatprep.subr.bf16.mxu0 %v2810
    %3476 = vmatpush1.bf16.msra.mxu0 %v2809
    %3477 = vmatprep.subr.bf16.mxu0 %v2814
    %3478 = vmatpush1.bf16.msra.mxu0 %v2813
    %3479 = vmatprep.subr.bf16.mxu0 %v2818
    %3480 = vmatpush1.bf16.msra.mxu0 %v2817
    %3481 = vmatprep.subr.bf16.mxu0 %v2822
    %3482 = vmatpush1.bf16.msra.mxu0 %v2821
    %3483 = vmatprep.subr.bf16.mxu0 %v2826
    %3484 = vmatpush1.bf16.msra.mxu0 %v2825
    %3485 = vmatprep.subr.bf16.mxu0 %v2830
    %3486 = vmatpush1.bf16.msra.mxu0 %v2829
    %3487 = vmatprep.subr.bf16.mxu0 %v2834
    %3488 = vmatpush1.bf16.msra.mxu0 %v2833
    %3489 = vmatprep.subr.bf16.mxu0 0
    %3490 = vmatpush1.bf16.msra.mxu0 0
    %3491 = vmatprep.subr.bf16.mxu0 0
    %3492 = vmatpush1.bf16.msra.mxu0 0
    %3493 = vmatprep.subr.bf16.mxu0 0
    %3494 = vmatpush1.bf16.msra.mxu0 0
    %3495 = vmatprep.subr.bf16.mxu0 0
    %3496 = vmatpush1.bf16.msra.mxu0 0
    %3497 = vmatprep.subr.bf16.mxu0 0
    %3498 = vmatpush1.bf16.msra.mxu0 0
    %3499 = vmatprep.subr.bf16.mxu0 0
    %3500 = vmatpush1.bf16.msra.mxu0 0
    %3501 = vmatprep.subr.bf16.mxu0 0
    %3502 = vmatpush1.bf16.msra.mxu0 0
    %3503 = vmatprep.subr.bf16.mxu0 0
    %3504 = vmatpush1.bf16.msra.mxu0 0
    %3505 = vmatprep.mubr.bf16.mxu0 0
    %3506 = vmatmul.mubr.bf16.gmra.mrb[0].mxu0 %v3464
    %v3507 = vpop.f32.mrb[0].mxu0
    %v3508 = vadd.f32 0.0, %v3507
    %v3509 = vpop.f32.mrb[0].mxu0
    %v3510 = vadd.f32 0.0, %v3509
    %v3511 = vpop.f32.mrb[0].mxu0
    %v3512 = vadd.f32 0.0, %v3511
    %v3513 = vpop.f32.mrb[0].mxu0
    %v3514 = vadd.f32 0.0, %v3513
    %3515 = vdwg.mxu0
    %3516 = vmatprep.subr.bf16.mxu0 %v2808
    %3517 = vmatpush1.bf16.msra.mxu0 %v2807
    %3518 = vmatprep.subr.bf16.mxu0 %v2812
    %3519 = vmatpush1.bf16.msra.mxu0 %v2811
    %3520 = vmatprep.subr.bf16.mxu0 %v2816
    %3521 = vmatpush1.bf16.msra.mxu0 %v2815
    %3522 = vmatprep.subr.bf16.mxu0 %v2820
    %3523 = vmatpush1.bf16.msra.mxu0 %v2819
    %3524 = vmatprep.subr.bf16.mxu0 %v2824
    %3525 = vmatpush1.bf16.msra.mxu0 %v2823
    %3526 = vmatprep.subr.bf16.mxu0 %v2828
    %3527 = vmatpush1.bf16.msra.mxu0 %v2827
    %3528 = vmatprep.subr.bf16.mxu0 %v2832
    %3529 = vmatpush1.bf16.msra.mxu0 %v2831
    %3530 = vmatprep.subr.bf16.mxu0 %v2836
    %3531 = vmatpush1.bf16.msra.mxu0 %v2835
    %3532 = vmatprep.subr.bf16.mxu0 0
    %3533 = vmatpush1.bf16.msra.mxu0 0
    %3534 = vmatprep.subr.bf16.mxu0 0
    %3535 = vmatpush1.bf16.msra.mxu0 0
    %3536 = vmatprep.subr.bf16.mxu0 0
    %3537 = vmatpush1.bf16.msra.mxu0 0
    %3538 = vmatprep.subr.bf16.mxu0 0
    %3539 = vmatpush1.bf16.msra.mxu0 0
    %3540 = vmatprep.subr.bf16.mxu0 0
    %3541 = vmatpush1.bf16.msra.mxu0 0
    %3542 = vmatprep.subr.bf16.mxu0 0
    %3543 = vmatpush1.bf16.msra.mxu0 0
    %3544 = vmatprep.subr.bf16.mxu0 0
    %3545 = vmatpush1.bf16.msra.mxu0 0
    %3546 = vmatprep.subr.bf16.mxu0 0
    %3547 = vmatpush1.bf16.msra.mxu0 0
    %3548 = vmatprep.mubr.bf16.mxu0 0
    %3549 = vmatmul.mubr.bf16.gmra.mrb[0].mxu0 %v3464
    %v3550 = vpop.f32.mrb[0].mxu0
    %v3551 = vadd.f32 0.0, %v3550
    %v3552 = vpop.f32.mrb[0].mxu0
    %v3553 = vadd.f32 0.0, %v3552
    %v3554 = vpop.f32.mrb[0].mxu0
    %v3555 = vadd.f32 0.0, %v3554
    %v3556 = vpop.f32.mrb[0].mxu0
    %v3557 = vadd.f32 0.0, %v3556
    %3558 = vdwg.mxu0
    %v3559 = vadd.f32 %v3465, %v3508
    %v3560 = vadd.f32 %v3466, %v3510
    %v3561 = vadd.f32 %v3467, %v3551
    %v3562 = vadd.f32 %v3468, %v3553
    %v3563 = vadd.f32 %v3469, %v3512
    %v3564 = vadd.f32 %v3470, %v3514
    %v3565 = vadd.f32 %v3471, %v3555
    %v3566 = vadd.f32 %v3472, %v3557
    %v3567 = vxor.u32 %v3559, 2147483648
    %v3568 = vxor.u32 %v3560, 2147483648
    %v3569 = vxor.u32 %v3561, 2147483648
    %v3570 = vxor.u32 %v3563, 2147483648
    %v3571 = vxor.u32 %v3564, 2147483648
    %v3572 = vxor.u32 %v3565, 2147483648
    %v3573 = vmul.f32 %v3567, 1.442695
    %v3574 = vpow.pop %v3573
    %v3575 = vmul.f32 %v3568, 1.442695
    %v3576 = vpow.pop %v3575
    %v3577 = vmul.f32 %v3569, 1.442695
    %v3578 = vpow.pop %v3577
    %v3579 = vmul.f32 %v3570, 1.442695
    %v3580 = vpow.pop %v3579
    %v3581 = vmul.f32 %v3571, 1.442695
    %v3582 = vpow.pop %v3581
    %v3583 = vmul.f32 %v3572, 1.442695
    %v3584 = vpow.pop %v3583
    %v3585 = vadd.f32 %v3574, 1.0
    %v3586 = vadd.f32 %v3576, 1.0
    %v3587 = vadd.f32 %v3578, 1.0
    %v3588 = vadd.f32 %v3580, 1.0
    %v3589 = vadd.f32 %v3582, 1.0
    %v3590 = vadd.f32 %v3584, 1.0
    %v3591 = vrcp.pop %v3585
    %v3592 = vmul.f32 1.0, %v3591
    %v3593 = vrcp.pop %v3586
    %v3594 = vmul.f32 1.0, %v3593
    %v3595 = vrcp.pop %v3587
    %v3596 = vmul.f32 1.0, %v3595
    %v3597 = vrcp.pop %v3588
    %v3598 = vmul.f32 1.0, %v3597
    %v3599 = vrcp.pop %v3589
    %v3600 = vmul.f32 1.0, %v3599
    %v3601 = vrcp.pop %v3590
    %v3602 = vmul.f32 1.0, %v3601
    %v3603 = vtanh.pop %v3562
    %v3604 = vtanh.pop %v3566
    %v3605 = vmul.f32 %v3594, %v3458
    %v3606 = vmul.f32 %v3600, %v3459
    %v3607 = vmul.f32 %v3592, %v3603
    %v3608 = vmul.f32 %v3598, %v3604
    %v3609 = vadd.f32 %v3605, %v3607
    %v3610 = vadd.f32 %v3606, %v3608
    %v3611 = vtanh.pop %v3609
    %v3612 = vtanh.pop %v3610
    %v3613 = vmul.f32 %v3596, %v3611
    %v3614 = vmul.f32 %v3602, %v3612
    %v3615 = vpack.c.bf16 %v3614, %v3613
    %v3616 = vld [vmem:[%s1691] sm:$0xff]
    %v3617 = vld [vmem:[%s1691 + $0x8] sm:$0xff]
    %v3618 = vld [vmem:[%s1691 + $0x10] sm:$0xff]
    %v3619 = vld [vmem:[%s1691 + $0x18] sm:$0xff]
    %v3620 = vld [vmem:[%s1691 + $0x20] sm:$0xff]
    %v3621 = vld [vmem:[%s1691 + $0x28] sm:$0xff]
    %v3622 = vld [vmem:[%s1691 + $0x30] sm:$0xff]
    %v3623 = vld [vmem:[%s1691 + $0x38] sm:$0xff]
    %3624 = vmatprep.subr.bf16.mxu0 %v2806
    %3625 = vmatpush1.bf16.msra.mxu0 %v2805
    %3626 = vmatprep.subr.bf16.mxu0 %v2810
    %3627 = vmatpush1.bf16.msra.mxu0 %v2809
    %3628 = vmatprep.subr.bf16.mxu0 %v2814
    %3629 = vmatpush1.bf16.msra.mxu0 %v2813
    %3630 = vmatprep.subr.bf16.mxu0 %v2818
    %3631 = vmatpush1.bf16.msra.mxu0 %v2817
    %3632 = vmatprep.subr.bf16.mxu0 %v2822
    %3633 = vmatpush1.bf16.msra.mxu0 %v2821
    %3634 = vmatprep.subr.bf16.mxu0 %v2826
    %3635 = vmatpush1.bf16.msra.mxu0 %v2825
    %3636 = vmatprep.subr.bf16.mxu0 %v2830
    %3637 = vmatpush1.bf16.msra.mxu0 %v2829
    %3638 = vmatprep.subr.bf16.mxu0 %v2834
    %3639 = vmatpush1.bf16.msra.mxu0 %v2833
    %3640 = vmatprep.subr.bf16.mxu0 0
    %3641 = vmatpush1.bf16.msra.mxu0 0
    %3642 = vmatprep.subr.bf16.mxu0 0
    %3643 = vmatpush1.bf16.msra.mxu0 0
    %3644 = vmatprep.subr.bf16.mxu0 0
    %3645 = vmatpush1.bf16.msra.mxu0 0
    %3646 = vmatprep.subr.bf16.mxu0 0
    %3647 = vmatpush1.bf16.msra.mxu0 0
    %3648 = vmatprep.subr.bf16.mxu0 0
    %3649 = vmatpush1.bf16.msra.mxu0 0
    %3650 = vmatprep.subr.bf16.mxu0 0
    %3651 = vmatpush1.bf16.msra.mxu0 0
    %3652 = vmatprep.subr.bf16.mxu0 0
    %3653 = vmatpush1.bf16.msra.mxu0 0
    %3654 = vmatprep.subr.bf16.mxu0 0
    %3655 = vmatpush1.bf16.msra.mxu0 0
    %3656 = vmatprep.mubr.bf16.mxu0 0
    %3657 = vmatmul.mubr.bf16.gmra.mrb[0].mxu0 %v3615
    %v3658 = vpop.f32.mrb[0].mxu0
    %v3659 = vadd.f32 0.0, %v3658
    %v3660 = vpop.f32.mrb[0].mxu0
    %v3661 = vadd.f32 0.0, %v3660
    %v3662 = vpop.f32.mrb[0].mxu0
    %v3663 = vadd.f32 0.0, %v3662
    %v3664 = vpop.f32.mrb[0].mxu0
    %v3665 = vadd.f32 0.0, %v3664
    %3666 = vdwg.mxu0
    %3667 = vmatprep.subr.bf16.mxu0 %v2808
    %3668 = vmatpush1.bf16.msra.mxu0 %v2807
    %3669 = vmatprep.subr.bf16.mxu0 %v2812
    %3670 = vmatpush1.bf16.msra.mxu0 %v2811
    %3671 = vmatprep.subr.bf16.mxu0 %v2816
    %3672 = vmatpush1.bf16.msra.mxu0 %v2815
    %3673 = vmatprep.subr.bf16.mxu0 %v2820
    %3674 = vmatpush1.bf16.msra.mxu0 %v2819
    %3675 = vmatprep.subr.bf16.mxu0 %v2824
    %3676 = vmatpush1.bf16.msra.mxu0 %v2823
    %3677 = vmatprep.subr.bf16.mxu0 %v2828
    %3678 = vmatpush1.bf16.msra.mxu0 %v2827
    %3679 = vmatprep.subr.bf16.mxu0 %v2832
    %3680 = vmatpush1.bf16.msra.mxu0 %v2831
    %3681 = vmatprep.subr.bf16.mxu0 %v2836
    %3682 = vmatpush1.bf16.msra.mxu0 %v2835
    %3683 = vmatprep.subr.bf16.mxu0 0
    %3684 = vmatpush1.bf16.msra.mxu0 0
    %3685 = vmatprep.subr.bf16.mxu0 0
    %3686 = vmatpush1.bf16.msra.mxu0 0
    %3687 = vmatprep.subr.bf16.mxu0 0
    %3688 = vmatpush1.bf16.msra.mxu0 0
    %3689 = vmatprep.subr.bf16.mxu0 0
    %3690 = vmatpush1.bf16.msra.mxu0 0
    %3691 = vmatprep.subr.bf16.mxu0 0
    %3692 = vmatpush1.bf16.msra.mxu0 0
    %3693 = vmatprep.subr.bf16.mxu0 0
    %3694 = vmatpush1.bf16.msra.mxu0 0
    %3695 = vmatprep.subr.bf16.mxu0 0
    %3696 = vmatpush1.bf16.msra.mxu0 0
    %3697 = vmatprep.subr.bf16.mxu0 0
    %3698 = vmatpush1.bf16.msra.mxu0 0
    %3699 = vmatprep.mubr.bf16.mxu0 0
    %3700 = vmatmul.mubr.bf16.gmra.mrb[0].mxu0 %v3615
    %v3701 = vpop.f32.mrb[0].mxu0
    %v3702 = vadd.f32 0.0, %v3701
    %v3703 = vpop.f32.mrb[0].mxu0
    %v3704 = vadd.f32 0.0, %v3703
    %v3705 = vpop.f32.mrb[0].mxu0
    %v3706 = vadd.f32 0.0, %v3705
    %v3707 = vpop.f32.mrb[0].mxu0
    %v3708 = vadd.f32 0.0, %v3707
    %3709 = vdwg.mxu0
    %v3710 = vadd.f32 %v3616, %v3659
    %v3711 = vadd.f32 %v3617, %v3661
    %v3712 = vadd.f32 %v3618, %v3702
    %v3713 = vadd.f32 %v3619, %v3704
    %v3714 = vadd.f32 %v3620, %v3663
    %v3715 = vadd.f32 %v3621, %v3665
    %v3716 = vadd.f32 %v3622, %v3706
    %v3717 = vadd.f32 %v3623, %v3708
    %v3718 = vxor.u32 %v3710, 2147483648
    %v3719 = vxor.u32 %v3711, 2147483648
    %v3720 = vxor.u32 %v3712, 2147483648
    %v3721 = vxor.u32 %v3714, 2147483648
    %v3722 = vxor.u32 %v3715, 2147483648
    %v3723 = vxor.u32 %v3716, 2147483648
    %v3724 = vmul.f32 %v3718, 1.442695
    %v3725 = vpow.pop %v3724
    %v3726 = vmul.f32 %v3719, 1.442695
    %v3727 = vpow.pop %v3726
    %v3728 = vmul.f32 %v3720, 1.442695
    %v3729 = vpow.pop %v3728
    %v3730 = vmul.f32 %v3721, 1.442695
    %v3731 = vpow.pop %v3730
    %v3732 = vmul.f32 %v3722, 1.442695
    %v3733 = vpow.pop %v3732
    %v3734 = vmul.f32 %v3723, 1.442695
    %v3735 = vpow.pop %v3734
    %v3736 = vadd.f32 %v3725, 1.0
    %v3737 = vadd.f32 %v3727, 1.0
    %v3738 = vadd.f32 %v3729, 1.0
    %v3739 = vadd.f32 %v3731, 1.0
    %v3740 = vadd.f32 %v3733, 1.0
    %v3741 = vadd.f32 %v3735, 1.0
    %v3742 = vrcp.pop %v3736
    %v3743 = vmul.f32 1.0, %v3742
    %v3744 = vrcp.pop %v3737
    %v3745 = vmul.f32 1.0, %v3744
    %v3746 = vrcp.pop %v3738
    %v3747 = vmul.f32 1.0, %v3746
    %v3748 = vrcp.pop %v3739
    %v3749 = vmul.f32 1.0, %v3748
    %v3750 = vrcp.pop %v3740
    %v3751 = vmul.f32 1.0, %v3750
    %v3752 = vrcp.pop %v3741
    %v3753 = vmul.f32 1.0, %v3752
    %v3754 = vtanh.pop %v3713
    %v3755 = vtanh.pop %v3717
    %v3756 = vmul.f32 %v3745, %v3609
    %v3757 = vmul.f32 %v3751, %v3610
    %v3758 = vmul.f32 %v3743, %v3754
    %v3759 = vmul.f32 %v3749, %v3755
    %v3760 = vadd.f32 %v3756, %v3758
    %v3761 = vadd.f32 %v3757, %v3759
    %v3762 = vtanh.pop %v3760
    %v3763 = vtanh.pop %v3761
    %v3764 = vmul.f32 %v3747, %v3762
    %v3765 = vmul.f32 %v3753, %v3763
    %v3766 = vpack.c.bf16 %v3765, %v3764
    %v3767 = vld [vmem:[%s1847] sm:$0xff]
    %v3768 = vld [vmem:[%s1847 + $0x8] sm:$0xff]
    %v3769 = vld [vmem:[%s1847 + $0x10] sm:$0xff]
    %v3770 = vld [vmem:[%s1847 + $0x18] sm:$0xff]
    %v3771 = vld [vmem:[%s1847 + $0x20] sm:$0xff]
    %v3772 = vld [vmem:[%s1847 + $0x28] sm:$0xff]
    %v3773 = vld [vmem:[%s1847 + $0x30] sm:$0xff]
    %v3774 = vld [vmem:[%s1847 + $0x38] sm:$0xff]
    %3775 = vmatprep.subr.bf16.mxu0 %v2806
    %3776 = vmatpush1.bf16.msra.mxu0 %v2805
    %3777 = vmatprep.subr.bf16.mxu0 %v2810
    %3778 = vmatpush1.bf16.msra.mxu0 %v2809
    %3779 = vmatprep.subr.bf16.mxu0 %v2814
    %3780 = vmatpush1.bf16.msra.mxu0 %v2813
    %3781 = vmatprep.subr.bf16.mxu0 %v2818
    %3782 = vmatpush1.bf16.msra.mxu0 %v2817
    %3783 = vmatprep.subr.bf16.mxu0 %v2822
    %3784 = vmatpush1.bf16.msra.mxu0 %v2821
    %3785 = vmatprep.subr.bf16.mxu0 %v2826
    %3786 = vmatpush1.bf16.msra.mxu0 %v2825
    %3787 = vmatprep.subr.bf16.mxu0 %v2830
    %3788 = vmatpush1.bf16.msra.mxu0 %v2829
    %3789 = vmatprep.subr.bf16.mxu0 %v2834
    %3790 = vmatpush1.bf16.msra.mxu0 %v2833
    %3791 = vmatprep.subr.bf16.mxu0 0
    %3792 = vmatpush1.bf16.msra.mxu0 0
    %3793 = vmatprep.subr.bf16.mxu0 0
    %3794 = vmatpush1.bf16.msra.mxu0 0
    %3795 = vmatprep.subr.bf16.mxu0 0
    %3796 = vmatpush1.bf16.msra.mxu0 0
    %3797 = vmatprep.subr.bf16.mxu0 0
    %3798 = vmatpush1.bf16.msra.mxu0 0
    %3799 = vmatprep.subr.bf16.mxu0 0
    %3800 = vmatpush1.bf16.msra.mxu0 0
    %3801 = vmatprep.subr.bf16.mxu0 0
    %3802 = vmatpush1.bf16.msra.mxu0 0
    %3803 = vmatprep.subr.bf16.mxu0 0
    %3804 = vmatpush1.bf16.msra.mxu0 0
    %3805 = vmatprep.subr.bf16.mxu0 0
    %3806 = vmatpush1.bf16.msra.mxu0 0
    %3807 = vmatprep.mubr.bf16.mxu0 0
    %3808 = vmatmul.mubr.bf16.gmra.mrb[0].mxu0 %v3766
    %v3809 = vpop.f32.mrb[0].mxu0
    %v3810 = vadd.f32 0.0, %v3809
    %v3811 = vpop.f32.mrb[0].mxu0
    %v3812 = vadd.f32 0.0, %v3811
    %v3813 = vpop.f32.mrb[0].mxu0
    %v3814 = vadd.f32 0.0, %v3813
    %v3815 = vpop.f32.mrb[0].mxu0
    %v3816 = vadd.f32 0.0, %v3815
    %3817 = vdwg.mxu0
    %3818 = vmatprep.subr.bf16.mxu0 %v2808
    %3819 = vmatpush1.bf16.msra.mxu0 %v2807
    %3820 = vmatprep.subr.bf16.mxu0 %v2812
    %3821 = vmatpush1.bf16.msra.mxu0 %v2811
    %3822 = vmatprep.subr.bf16.mxu0 %v2816
    %3823 = vmatpush1.bf16.msra.mxu0 %v2815
    %3824 = vmatprep.subr.bf16.mxu0 %v2820
    %3825 = vmatpush1.bf16.msra.mxu0 %v2819
    %3826 = vmatprep.subr.bf16.mxu0 %v2824
    %3827 = vmatpush1.bf16.msra.mxu0 %v2823
    %3828 = vmatprep.subr.bf16.mxu0 %v2828
    %3829 = vmatpush1.bf16.msra.mxu0 %v2827
    %3830 = vmatprep.subr.bf16.mxu0 %v2832
    %3831 = vmatpush1.bf16.msra.mxu0 %v2831
    %3832 = vmatprep.subr.bf16.mxu0 %v2836
    %3833 = vmatpush1.bf16.msra.mxu0 %v2835
    %3834 = vmatprep.subr.bf16.mxu0 0
    %3835 = vmatpush1.bf16.msra.mxu0 0
    %3836 = vmatprep.subr.bf16.mxu0 0
    %3837 = vmatpush1.bf16.msra.mxu0 0
    %3838 = vmatprep.subr.bf16.mxu0 0
    %3839 = vmatpush1.bf16.msra.mxu0 0
    %3840 = vmatprep.subr.bf16.mxu0 0
    %3841 = vmatpush1.bf16.msra.mxu0 0
    %3842 = vmatprep.subr.bf16.mxu0 0
    %3843 = vmatpush1.bf16.msra.mxu0 0
    %3844 = vmatprep.subr.bf16.mxu0 0
    %3845 = vmatpush1.bf16.msra.mxu0 0
    %3846 = vmatprep.subr.bf16.mxu0 0
    %3847 = vmatpush1.bf16.msra.mxu0 0
    %3848 = vmatprep.subr.bf16.mxu0 0
    %3849 = vmatpush1.bf16.msra.mxu0 0
    %3850 = vmatprep.mubr.bf16.mxu0 0
    %3851 = vmatmul.mubr.bf16.gmra.mrb[0].mxu0 %v3766
    %v3852 = vpop.f32.mrb[0].mxu0
    %v3853 = vadd.f32 0.0, %v3852
    %v3854 = vpop.f32.mrb[0].mxu0
    %v3855 = vadd.f32 0.0, %v3854
    %v3856 = vpop.f32.mrb[0].mxu0
    %v3857 = vadd.f32 0.0, %v3856
    %v3858 = vpop.f32.mrb[0].mxu0
    %v3859 = vadd.f32 0.0, %v3858
    %3860 = vdwg.mxu0
    %v3861 = vadd.f32 %v3767, %v3810
    %v3862 = vadd.f32 %v3768, %v3812
    %v3863 = vadd.f32 %v3769, %v3853
    %v3864 = vadd.f32 %v3770, %v3855
    %v3865 = vadd.f32 %v3771, %v3814
    %v3866 = vadd.f32 %v3772, %v3816
    %v3867 = vadd.f32 %v3773, %v3857
    %v3868 = vadd.f32 %v3774, %v3859
    %v3869 = vxor.u32 %v3861, 2147483648
    %v3870 = vxor.u32 %v3862, 2147483648
    %v3871 = vxor.u32 %v3863, 2147483648
    %v3872 = vxor.u32 %v3865, 2147483648
    %v3873 = vxor.u32 %v3866, 2147483648
    %v3874 = vxor.u32 %v3867, 2147483648
    %v3875 = vmul.f32 %v3869, 1.442695
    %v3876 = vpow.pop %v3875
    %v3877 = vmul.f32 %v3870, 1.442695
    %v3878 = vpow.pop %v3877
    %v3879 = vmul.f32 %v3871, 1.442695
    %v3880 = vpow.pop %v3879
    %v3881 = vmul.f32 %v3872, 1.442695
    %v3882 = vpow.pop %v3881
    %v3883 = vmul.f32 %v3873, 1.442695
    %v3884 = vpow.pop %v3883
    %v3885 = vmul.f32 %v3874, 1.442695
    %v3886 = vpow.pop %v3885
    %v3887 = vadd.f32 %v3876, 1.0
    %v3888 = vadd.f32 %v3878, 1.0
    %v3889 = vadd.f32 %v3880, 1.0
    %v3890 = vadd.f32 %v3882, 1.0
    %v3891 = vadd.f32 %v3884, 1.0
    %v3892 = vadd.f32 %v3886, 1.0
    %v3893 = vrcp.pop %v3887
    %v3894 = vmul.f32 1.0, %v3893
    %v3895 = vrcp.pop %v3888
    %v3896 = vmul.f32 1.0, %v3895
    %v3897 = vrcp.pop %v3889
    %v3898 = vmul.f32 1.0, %v3897
    %v3899 = vrcp.pop %v3890
    %v3900 = vmul.f32 1.0, %v3899
    %v3901 = vrcp.pop %v3891
    %v3902 = vmul.f32 1.0, %v3901
    %v3903 = vrcp.pop %v3892
    %v3904 = vmul.f32 1.0, %v3903
    %v3905 = vtanh.pop %v3864
    %v3906 = vtanh.pop %v3868
    %v3907 = vmul.f32 %v3896, %v3760
    %v3908 = vmul.f32 %v3902, %v3761
    %v3909 = vmul.f32 %v3894, %v3905
    %v3910 = vmul.f32 %v3900, %v3906
    %v3911 = vadd.f32 %v3907, %v3909
    %v3912 = vadd.f32 %v3908, %v3910
    %v3913 = vtanh.pop %v3911
    %v3914 = vtanh.pop %v3912
    %v3915 = vmul.f32 %v3898, %v3913
    %v3916 = vmul.f32 %v3904, %v3914
    %v3917 = vpack.c.bf16 %v3916, %v3915
    %v3918 = vld [vmem:[%s2003] sm:$0xff]
    %v3919 = vld [vmem:[%s2003 + $0x8] sm:$0xff]
    %v3920 = vld [vmem:[%s2003 + $0x10] sm:$0xff]
    %v3921 = vld [vmem:[%s2003 + $0x18] sm:$0xff]
    %v3922 = vld [vmem:[%s2003 + $0x20] sm:$0xff]
    %v3923 = vld [vmem:[%s2003 + $0x28] sm:$0xff]
    %v3924 = vld [vmem:[%s2003 + $0x30] sm:$0xff]
    %v3925 = vld [vmem:[%s2003 + $0x38] sm:$0xff]
    %3926 = vmatprep.subr.bf16.mxu0 %v2806
    %3927 = vmatpush1.bf16.msra.mxu0 %v2805
    %3928 = vmatprep.subr.bf16.mxu0 %v2810
    %3929 = vmatpush1.bf16.msra.mxu0 %v2809
    %3930 = vmatprep.subr.bf16.mxu0 %v2814
    %3931 = vmatpush1.bf16.msra.mxu0 %v2813
    %3932 = vmatprep.subr.bf16.mxu0 %v2818
    %3933 = vmatpush1.bf16.msra.mxu0 %v2817
    %3934 = vmatprep.subr.bf16.mxu0 %v2822
    %3935 = vmatpush1.bf16.msra.mxu0 %v2821
    %3936 = vmatprep.subr.bf16.mxu0 %v2826
    %3937 = vmatpush1.bf16.msra.mxu0 %v2825
    %3938 = vmatprep.subr.bf16.mxu0 %v2830
    %3939 = vmatpush1.bf16.msra.mxu0 %v2829
    %3940 = vmatprep.subr.bf16.mxu0 %v2834
    %3941 = vmatpush1.bf16.msra.mxu0 %v2833
    %3942 = vmatprep.subr.bf16.mxu0 0
    %3943 = vmatpush1.bf16.msra.mxu0 0
    %3944 = vmatprep.subr.bf16.mxu0 0
    %3945 = vmatpush1.bf16.msra.mxu0 0
    %3946 = vmatprep.subr.bf16.mxu0 0
    %3947 = vmatpush1.bf16.msra.mxu0 0
    %3948 = vmatprep.subr.bf16.mxu0 0
    %3949 = vmatpush1.bf16.msra.mxu0 0
    %3950 = vmatprep.subr.bf16.mxu0 0
    %3951 = vmatpush1.bf16.msra.mxu0 0
    %3952 = vmatprep.subr.bf16.mxu0 0
    %3953 = vmatpush1.bf16.msra.mxu0 0
    %3954 = vmatprep.subr.bf16.mxu0 0
    %3955 = vmatpush1.bf16.msra.mxu0 0
    %3956 = vmatprep.subr.bf16.mxu0 0
    %3957 = vmatpush1.bf16.msra.mxu0 0
    %3958 = vmatprep.mubr.bf16.mxu0 0
    %3959 = vmatmul.mubr.bf16.gmra.mrb[0].mxu0 %v3917
    %v3960 = vpop.f32.mrb[0].mxu0
    %v3961 = vadd.f32 0.0, %v3960
    %v3962 = vpop.f32.mrb[0].mxu0
    %v3963 = vadd.f32 0.0, %v3962
    %v3964 = vpop.f32.mrb[0].mxu0
    %v3965 = vadd.f32 0.0, %v3964
    %v3966 = vpop.f32.mrb[0].mxu0
    %v3967 = vadd.f32 0.0, %v3966
    %3968 = vdwg.mxu0
    %3969 = vmatprep.subr.bf16.mxu0 %v2808
    %3970 = vmatpush1.bf16.msra.mxu0 %v2807
    %3971 = vmatprep.subr.bf16.mxu0 %v2812
    %3972 = vmatpush1.bf16.msra.mxu0 %v2811
    %3973 = vmatprep.subr.bf16.mxu0 %v2816
    %3974 = vmatpush1.bf16.msra.mxu0 %v2815
    %3975 = vmatprep.subr.bf16.mxu0 %v2820
    %3976 = vmatpush1.bf16.msra.mxu0 %v2819
    %3977 = vmatprep.subr.bf16.mxu0 %v2824
    %3978 = vmatpush1.bf16.msra.mxu0 %v2823
    %3979 = vmatprep.subr.bf16.mxu0 %v2828
    %3980 = vmatpush1.bf16.msra.mxu0 %v2827
    %3981 = vmatprep.subr.bf16.mxu0 %v2832
    %3982 = vmatpush1.bf16.msra.mxu0 %v2831
    %3983 = vmatprep.subr.bf16.mxu0 %v2836
    %3984 = vmatpush1.bf16.msra.mxu0 %v2835
    %3985 = vmatprep.subr.bf16.mxu0 0
    %3986 = vmatpush1.bf16.msra.mxu0 0
    %3987 = vmatprep.subr.bf16.mxu0 0
    %3988 = vmatpush1.bf16.msra.mxu0 0
    %3989 = vmatprep.subr.bf16.mxu0 0
    %3990 = vmatpush1.bf16.msra.mxu0 0
    %3991 = vmatprep.subr.bf16.mxu0 0
    %3992 = vmatpush1.bf16.msra.mxu0 0
    %3993 = vmatprep.subr.bf16.mxu0 0
    %3994 = vmatpush1.bf16.msra.mxu0 0
    %3995 = vmatprep.subr.bf16.mxu0 0
    %3996 = vmatpush1.bf16.msra.mxu0 0
    %3997 = vmatprep.subr.bf16.mxu0 0
    %3998 = vmatpush1.bf16.msra.mxu0 0
    %3999 = vmatprep.subr.bf16.mxu0 0
    %4000 = vmatpush1.bf16.msra.mxu0 0
    %4001 = vmatprep.mubr.bf16.mxu0 0
    %4002 = vmatmul.mubr.bf16.gmra.mrb[0].mxu0 %v3917
    %v4003 = vpop.f32.mrb[0].mxu0
    %v4004 = vadd.f32 0.0, %v4003
    %v4005 = vpop.f32.mrb[0].mxu0
    %v4006 = vadd.f32 0.0, %v4005
    %v4007 = vpop.f32.mrb[0].mxu0
    %v4008 = vadd.f32 0.0, %v4007
    %v4009 = vpop.f32.mrb[0].mxu0
    %v4010 = vadd.f32 0.0, %v4009
    %4011 = vdwg.mxu0
    %v4012 = vadd.f32 %v3918, %v3961
    %v4013 = vadd.f32 %v3919, %v3963
    %v4014 = vadd.f32 %v3920, %v4004
    %v4015 = vadd.f32 %v3921, %v4006
    %v4016 = vadd.f32 %v3922, %v3965
    %v4017 = vadd.f32 %v3923, %v3967
    %v4018 = vadd.f32 %v3924, %v4008
    %v4019 = vadd.f32 %v3925, %v4010
    %v4020 = vxor.u32 %v4012, 2147483648
    %v4021 = vxor.u32 %v4013, 2147483648
    %v4022 = vxor.u32 %v4014, 2147483648
    %v4023 = vxor.u32 %v4016, 2147483648
    %v4024 = vxor.u32 %v4017, 2147483648
    %v4025 = vxor.u32 %v4018, 2147483648
    %v4026 = vmul.f32 %v4020, 1.442695
    %v4027 = vpow.pop %v4026
    %v4028 = vmul.f32 %v4021, 1.442695
    %v4029 = vpow.pop %v4028
    %v4030 = vmul.f32 %v4022, 1.442695
    %v4031 = vpow.pop %v4030
    %v4032 = vmul.f32 %v4023, 1.442695
    %v4033 = vpow.pop %v4032
    %v4034 = vmul.f32 %v4024, 1.442695
    %v4035 = vpow.pop %v4034
    %v4036 = vmul.f32 %v4025, 1.442695
    %v4037 = vpow.pop %v4036
    %v4038 = vadd.f32 %v4027, 1.0
    %v4039 = vadd.f32 %v4029, 1.0
    %v4040 = vadd.f32 %v4031, 1.0
    %v4041 = vadd.f32 %v4033, 1.0
    %v4042 = vadd.f32 %v4035, 1.0
    %v4043 = vadd.f32 %v4037, 1.0
    %v4044 = vrcp.pop %v4038
    %v4045 = vmul.f32 1.0, %v4044
    %v4046 = vrcp.pop %v4039
    %v4047 = vmul.f32 1.0, %v4046
    %v4048 = vrcp.pop %v4040
    %v4049 = vmul.f32 1.0, %v4048
    %v4050 = vrcp.pop %v4041
    %v4051 = vmul.f32 1.0, %v4050
    %v4052 = vrcp.pop %v4042
    %v4053 = vmul.f32 1.0, %v4052
    %v4054 = vrcp.pop %v4043
    %v4055 = vmul.f32 1.0, %v4054
    %v4056 = vtanh.pop %v4015
    %v4057 = vtanh.pop %v4019
    %v4058 = vmul.f32 %v4047, %v3911
    %v4059 = vmul.f32 %v4053, %v3912
    %v4060 = vmul.f32 %v4045, %v4056
    %v4061 = vmul.f32 %v4051, %v4057
    %v4062 = vadd.f32 %v4058, %v4060
    %v4063 = vadd.f32 %v4059, %v4061
    %v4064 = vtanh.pop %v4062
    %v4065 = vtanh.pop %v4063
    %v4066 = vmul.f32 %v4049, %v4064
    %v4067 = vmul.f32 %v4055, %v4065
    %v4068 = vpack.c.bf16 %v4067, %v4066
    %v4069 = vld [vmem:[#allocation16] sm:$0xf]
    %v4070 = vld [vmem:[#allocation16 + $0x4] sm:$0xf]
    %v4071 = vld [vmem:[#allocation16 + $0x8] sm:$0xf]
    %v4072 = vld [vmem:[#allocation16 + $0xc] sm:$0xf]
    %v4073 = vld [vmem:[#allocation16 + $0x10] sm:$0xf]
    %v4074 = vld [vmem:[#allocation16 + $0x14] sm:$0xf]
    %v4075 = vld [vmem:[#allocation16 + $0x18] sm:$0xf]
    %v4076 = vld [vmem:[#allocation16 + $0x1c] sm:$0xf]
    %v4077 = vld [vmem:[#allocation16 + $0x20] sm:$0xf]
    %v4078 = vld [vmem:[#allocation16 + $0x24] sm:$0xf]
    %v4079 = vld [vmem:[#allocation16 + $0x28] sm:$0xf]
    %v4080 = vld [vmem:[#allocation16 + $0x2c] sm:$0xf]
    %v4081 = vld [vmem:[#allocation16 + $0x30] sm:$0xf]
    %v4082 = vld [vmem:[#allocation16 + $0x34] sm:$0xf]
    %v4083 = vld [vmem:[#allocation16 + $0x38] sm:$0xf]
    %v4084 = vld [vmem:[#allocation16 + $0x3c] sm:$0xf]
    %v4085 = vld [vmem:[#allocation18] sm:$0x1]
    %v4087 = vlaneseq
    %v4088 = vshrl.u32 %v4087, 7
    %v4089 = vsub.s32 0, %v4088
    %v4090 = vrot.slane %v4085, %v4089
    %v4108 = vunpack.c.l.b16 %v4069
    %v4109 = vunpack.c.l.b16 %v4070
    %v4110 = vunpack.c.l.b16 %v4071
    %v4111 = vunpack.c.l.b16 %v4072
    %v4112 = vunpack.c.l.b16 %v4073
    %v4113 = vunpack.c.l.b16 %v4074
    %v4114 = vunpack.c.l.b16 %v4075
    %v4115 = vunpack.c.l.b16 %v4076
    %v4116 = vunpack.c.l.b16 %v4077
    %v4117 = vunpack.c.l.b16 %v4078
    %v4118 = vunpack.c.l.b16 %v4079
    %v4119 = vunpack.c.l.b16 %v4080
    %v4120 = vunpack.c.l.b16 %v4081
    %v4121 = vunpack.c.l.b16 %v4082
    %v4122 = vunpack.c.l.b16 %v4083
    %v4123 = vunpack.c.l.b16 %v4084
    %v4124 = vpack.c.b16 %v4109, %v4108
    %v4125 = vpack.c.b16 %v4111, %v4110
    %v4126 = vpack.c.b16 %v4113, %v4112
    %v4127 = vpack.c.b16 %v4115, %v4114
    %v4128 = vpack.c.b16 %v4117, %v4116
    %v4129 = vpack.c.b16 %v4119, %v4118
    %v4130 = vpack.c.b16 %v4121, %v4120
    %v4131 = vpack.c.b16 %v4123, %v4122
    %4140 = vmatprep.subr.bf16.mxu0 0
    %4141 = vmatpush1.bf16.msra.mxu0 %v4124
    %4142 = vmatprep.subr.bf16.mxu0 0
    %4143 = vmatpush1.bf16.msra.mxu0 %v4125
    %4144 = vmatprep.subr.bf16.mxu0 0
    %4145 = vmatpush1.bf16.msra.mxu0 %v4126
    %4146 = vmatprep.subr.bf16.mxu0 0
    %4147 = vmatpush1.bf16.msra.mxu0 %v4127
    %4148 = vmatprep.subr.bf16.mxu0 0
    %4149 = vmatpush1.bf16.msra.mxu0 %v4128
    %4150 = vmatprep.subr.bf16.mxu0 0
    %4151 = vmatpush1.bf16.msra.mxu0 %v4129
    %4152 = vmatprep.subr.bf16.mxu0 0
    %4153 = vmatpush1.bf16.msra.mxu0 %v4130
    %4154 = vmatprep.subr.bf16.mxu0 0
    %4155 = vmatpush1.bf16.msra.mxu0 %v4131
    %4156 = vmatprep.subr.bf16.mxu0 0
    %4157 = vmatpush1.bf16.msra.mxu0 0
    %4158 = vmatprep.subr.bf16.mxu0 0
    %4159 = vmatpush1.bf16.msra.mxu0 0
    %4160 = vmatprep.subr.bf16.mxu0 0
    %4161 = vmatpush1.bf16.msra.mxu0 0
    %4162 = vmatprep.subr.bf16.mxu0 0
    %4163 = vmatpush1.bf16.msra.mxu0 0
    %4164 = vmatprep.subr.bf16.mxu0 0
    %4165 = vmatpush1.bf16.msra.mxu0 0
    %4166 = vmatprep.subr.bf16.mxu0 0
    %4167 = vmatpush1.bf16.msra.mxu0 0
    %4168 = vmatprep.subr.bf16.mxu0 0
    %4169 = vmatpush1.bf16.msra.mxu0 0
    %4170 = vmatprep.subr.bf16.mxu0 0
    %4171 = vmatpush1.bf16.msra.mxu0 0
    %4172 = vmatprep.mubr.bf16.mxu0 0
    %4173 = vmatmul.mubr.bf16.gmra.mrb[0].mxu0 %v4068
    %v4174 = vpop.f32.mrb[0].mxu0
    %v4175 = vadd.f32 %v4090, %v4174
    %v4176 = vpop.f32.mrb[0].mxu0
    %v4177 = vpop.f32.mrb[0].mxu0
    %v4178 = vadd.f32 %v4090, %v4177
    %v4179 = vpop.f32.mrb[0].mxu0
    %4180 = vdwg.mxu0
    %4181 = vst [vmem:[#allocation19] sm:$0xff] %v4175
    %4182 = vst [vmem:[#allocation19 + $0x8] sm:$0xff] %v4178
    // Predicated region
    $region74: #{base_lstm_forward.1} parent=1 // pred_check
      _
    $region75: #{base_lstm_forward.1} parent=1 // pred_check_branch
      %4184 = sbr.rel (0) target = $region77
    $region76: #{base_lstm_forward.1} parent=1 // pred_region
      %s4186 = ssub.s32 256, 256
      %4187 = vsyncadd [#allocation6], %s4186
      %s4188 = sshll.u32 [#allocation19], 4
      %s4189 = int_to_ptr.vmem [resolvable:$true] %s4188
      %4194 = dma.vmem_to_hbm [thread:$0]  %s4189, 256, %s9, [#allocation6], 128, 128, 8
    $region77: #{base_lstm_forward.1} parent=1 // pred_fallthru
      _
    // Predicated region
    $region78: #{base_lstm_forward.1} parent=1 // pred_check
      _
    $region79: #{base_lstm_forward.1} parent=1 // pred_check_branch
      %4196 = sbr.rel (0) target = $region81
    $region80: #{base_lstm_forward.1} parent=1 // pred_region
      %4197 = dma.done [#allocation6], 256
    $region81: #{base_lstm_forward.1} parent=1 // pred_fallthru
      _
    %4198 = vsyncpa [#allocation5], 1
    %4199 = vsyncpa [#allocation8], 1
    %4200 = vsyncpa [#allocation11], 1
    %4201 = vsyncpa [#allocation14], 1
    %4202 = vsyncpa [#allocation17], 1
    %4203 = vsyncpa [#allocation6], 1

</llo_original>
